<compile_context>
chip_gen: v5e
topology: v5e:2x2
jax: 0.10.0
libtpu: 0.0.40
codegen_flags: <defaults>
</compile_context>

<pallas_src>
import functools
import math

import numpy as np
import jax
import jax.numpy as jnp
from jax.experimental import pallas as pl
from jax.experimental.pallas import tpu as pltpu

DP = 128     # lane-padded model width (real d_model <= DP)
DFFP = 128   # lane-padded feed-forward width (real d_ff <= DFFP)


# ---------------------------- small helpers ----------------------------

def _rep_spec(a):
    """Full-array block replicated (constant index) across the batch grid axis."""
    nd = a.ndim
    return pl.BlockSpec(a.shape, lambda b, _n=nd: (0,) * _n)


def _pad2d(w, rows, cols):
    out = jnp.zeros((rows, cols), jnp.float32)
    return out.at[: w.shape[0], : w.shape[1]].set(w)


def _pad_mat(w, rows, cols):          # zero-padded bf16 matmul weight
    return _pad2d(w, rows, cols).astype(jnp.bfloat16)


def _pad_rows(vecs, cols=DP):         # stack 1-D vectors into a zero-padded (R, cols) f32
    out = jnp.zeros((len(vecs), cols), jnp.float32)
    for r, v in enumerate(vecs):
        out = out.at[r, : v.shape[0]].set(v)
    return out


@functools.lru_cache(maxsize=None)
def _positional_embedding(L, d_model):
    """Sin/cos positional embedding, precomputed on host, zero-padded to DP lanes."""
    pos = np.arange(L, dtype=np.float32)[:, None]
    div = np.exp(np.arange(0, d_model, 2, dtype=np.float32)
                 * (-math.log(10000.0) / d_model))
    ang = pos * div
    pe = np.zeros((L, DP), np.float32)
    pe[:, 0:d_model:2] = np.sin(ang)
    pe[:, 1:d_model:2] = np.cos(ang)
    return jnp.asarray(pe)


# ---------------------------- in-kernel building blocks ----------------------------

def _layernorm(x, g, b, d_valid, eps=1e-5):
    """LayerNorm over the first d_valid lanes of lane-padded x.

    Pad lanes of x are exactly zero and the pad lanes of g/b are zero, so the
    unmasked E[x^2]-mu^2 form is exact and keeps pad lanes at zero (no
    iota/compare/select on the critical path)."""
    inv_d = 1.0 / d_valid
    mu = jnp.sum(x, axis=-1, keepdims=True) * inv_d
    ex2 = jnp.sum(x * x, axis=-1, keepdims=True) * inv_d
    var = ex2 - mu * mu
    return (x - mu) * jax.lax.rsqrt(var + eps) * g + b


def _activation(x, act):
    if act == "relu":
        return jnp.maximum(x, 0.0)
    # TODO(synk): PyTorch nn.GELU default is the exact erf form; the tanh
    # approximation used here differs by < ~1e-3.
    return jax.nn.gelu(x, approximate=True)


def _split_heads(x2d, n_heads, d_head):
    """(L, H*E) bf16 -> (H, L, E) via per-head lane slices stacked on a new
    leading axis (avoids a 3-D transpose inside the kernel)."""
    return jnp.stack([x2d[:, h * d_head:(h + 1) * d_head] for h in range(n_heads)],
                     axis=0)


def _mha(q2d, k2d, v2d, wo, bo, n_heads, d_head, scale):
    """All heads batched: one score einsum, ONE softmax (one exp + one approx
    reciprocal), one PV einsum, then a single (L, d_model) x (d_model, DP)
    output projection with a pre-cast bf16 weight."""
    q = _split_heads(q2d.astype(jnp.bfloat16), n_heads, d_head)     # (H, Lq, E)
    k = _split_heads(k2d.astype(jnp.bfloat16), n_heads, d_head)     # (H, Lk, E)
    v = _split_heads(v2d.astype(jnp.bfloat16), n_heads, d_head)     # (H, Lk, E)
    s = jnp.einsum("hqe,hke->hqk", q, k,
                   preferred_element_type=jnp.float32) * scale       # (H, Lq, Lk)
    m = jnp.max(s, axis=-1, keepdims=True)
    p = jnp.exp(s - m)
    p = p * pl.reciprocal(jnp.sum(p, axis=-1, keepdims=True), approx=True)
    o = jnp.einsum("hqk,hke->hqe", p.astype(jnp.bfloat16), v,
                   preferred_element_type=jnp.float32)                # (H, Lq, E)
    o2d = jnp.concatenate([o[h] for h in range(n_heads)], axis=-1)    # (Lq, H*E)
    return jnp.dot(o2d.astype(jnp.bfloat16), wo,
                   preferred_element_type=jnp.float32) + bo           # (Lq, DP)


def _encoder_layer(x, wqkv, wo, w1, w2, vec, H, E, dm, scale, act):
    # vec rows: 0 bqkv | 1 bo | 2 n1_g | 3 n1_b | 4 c1 | 5 c2 | 6 n2_g | 7 n2_b
    qkv = jnp.dot(x.astype(jnp.bfloat16), wqkv,
                  preferred_element_type=jnp.float32) + vec[0:1, :3 * dm]
    attn = _mha(qkv[:, :dm], qkv[:, dm:2 * dm], qkv[:, 2 * dm:],
                wo, vec[1:2, :], H, E, scale)
    x1 = _layernorm(x + attn, vec[2:3, :], vec[3:4, :], dm)
    h = _activation(jnp.dot(x1.astype(jnp.bfloat16), w1,
                            preferred_element_type=jnp.float32) + vec[4:5, :], act)
    y = jnp.dot(h.astype(jnp.bfloat16), w2,
                preferred_element_type=jnp.float32) + vec[5:6, :]
    return _layernorm(x1 + y, vec[6:7, :], vec[7:8, :], dm)


def _decoder_layer(x, cross, swqkv, swo, cwq, cwkv, cwo, w1, w2, vec,
                   H, E, dm, scale, act):
    # vec rows: 0 s_bqkv | 1 s_bo | 2 n1_g | 3 n1_b | 4 c_bq | 5 c_bkv | 6 c_bo
    #           7 n2_g | 8 n2_b | 9 c1 | 10 c2 | 11 n3_g | 12 n3_b
    qkv = jnp.dot(x.astype(jnp.bfloat16), swqkv,
                  preferred_element_type=jnp.float32) + vec[0:1, :3 * dm]
    sa = _mha(qkv[:, :dm], qkv[:, dm:2 * dm], qkv[:, 2 * dm:],
              swo, vec[1:2, :], H, E, scale)
    x1 = _layernorm(x + sa, vec[2:3, :], vec[3:4, :], dm)
    qc = jnp.dot(x1.astype(jnp.bfloat16), cwq,
                 preferred_element_type=jnp.float32) + vec[4:5, :dm]
    kvc = jnp.dot(cross.astype(jnp.bfloat16), cwkv,
                  preferred_element_type=jnp.float32) + vec[5:6, :2 * dm]
    ca = _mha(qc, kvc[:, :dm], kvc[:, dm:], cwo, vec[6:7, :], H, E, scale)
    x2 = _layernorm(x1 + ca, vec[7:8, :], vec[8:9, :], dm)
    h = _activation(jnp.dot(x2.astype(jnp.bfloat16), w1,
                            preferred_element_type=jnp.float32) + vec[9:10, :], act)
    y = jnp.dot(h.astype(jnp.bfloat16), w2,
                preferred_element_type=jnp.float32) + vec[10:11, :]
    return _layernorm(x2 + y, vec[11:12, :], vec[12:13, :], dm)


# ---------------------------- fused full-forward kernel ----------------------------

def _fused_forward_kernel(enc_feats_ref, dec_feats_ref,
                          pe_enc_ref, pe_dec_ref, enc_emb_w_ref, dec_emb_w_ref,
                          e_wqkv_ref, e_wo_ref, e_w1_ref, e_w2_ref, e_vec_ref,
                          d_swqkv_ref, d_swo_ref, d_cwq_ref, d_cwkv_ref, d_cwo_ref,
                          d_w1_ref, d_w2_ref, d_vec_ref,
                          misc_ref, proj_w_ref, out_ref,
                          *, e_layers, d_layers, n_heads, d_head, d_model, scale, act):
    H, E, dm = n_heads, d_head, d_model

    # -------- encoder embedding (conv-as-matmul + marks + static + positional) -----
    enc = jnp.dot(enc_feats_ref[0].astype(jnp.bfloat16), enc_emb_w_ref[...],
                  preferred_element_type=jnp.float32) + pe_enc_ref[...]

    # -------- encoder layers (static unroll over stacked per-layer weights) --------
    for i in range(e_layers):
        enc = _encoder_layer(enc, e_wqkv_ref[i], e_wo_ref[i], e_w1_ref[i],
                             e_w2_ref[i], e_vec_ref[i], H, E, dm, scale, act)
    misc = misc_ref[...]
    enc = _layernorm(enc, misc[0:1, :], misc[1:2, :], dm)     # encoder-stack norm

    # -------- decoder embedding -----------------------------------------------------
    dec = jnp.dot(dec_feats_ref[0].astype(jnp.bfloat16), dec_emb_w_ref[...],
                  preferred_element_type=jnp.float32) + pe_dec_ref[...]

    # -------- decoder layers ---------------------------------------------------------
    for i in range(d_layers):
        dec = _decoder_layer(dec, enc, d_swqkv_ref[i], d_swo_ref[i], d_cwq_ref[i],
                             d_cwkv_ref[i], d_cwo_ref[i], d_w1_ref[i], d_w2_ref[i],
                             d_vec_ref[i], H, E, dm, scale, act)
    dec = _layernorm(dec, misc[2:3, :], misc[3:4, :], dm)     # decoder-stack norm
    out = jnp.dot(dec.astype(jnp.bfloat16), proj_w_ref[...],
                  preferred_element_type=jnp.float32) + misc[4:5, :]
    out_ref[0] = out.astype(out_ref.dtype)


# ---------------------------- host-side glue ----------------------------

def _embed_features(x, x_mark, x_static, dim_static, kin_pad):
    """Circular-pad im2col (conv1d k=3) + time marks + broadcast static features,
    zero-padded to the fused embedding matmul's contraction width."""
    B, L, _ = x.shape
    xp = jnp.concatenate([x[:, -1:, :], x, x[:, :1, :]], axis=1)      # circular pad 1
    cols = jnp.concatenate([xp[:, 0:L, :], xp[:, 1:L + 1, :], xp[:, 2:L + 2, :]],
                           axis=-1)                                   # (B, L, 3*C)
    if x_static is None:
        stat = jnp.zeros((B, L, dim_static), x.dtype)
    else:
        stat = jnp.broadcast_to(x_static[:, None, :], (B, L, dim_static))
    feats = jnp.concatenate([cols, x_mark, stat], axis=-1)
    pad = kin_pad - feats.shape[-1]
    if pad:
        feats = jnp.concatenate([feats, jnp.zeros((B, L, pad), feats.dtype)], axis=-1)
    return feats


def _cost_estimate(cfg, B, Le, Ld, kin_e, kin_d, operands, out_bytes):
    dm, H = cfg["d_model"], cfg["n_heads"]
    E = dm // H
    enc_layer = (2 * Le * DP * 3 * dm + 4 * H * Le * Le * E + 2 * Le * dm * DP
                 + 2 * Le * DP * DFFP + 2 * Le * DFFP * DP)
    dec_layer = (2 * Ld * DP * 3 * dm + 4 * H * Ld * Ld * E + 2 * Ld * dm * DP
                 + 2 * Ld * DP * dm + 2 * Le * DP * 2 * dm + 4 * H * Ld * Le * E
                 + 2 * Ld * dm * DP + 2 * Ld * DP * DFFP + 2 * Ld * DFFP * DP)
    flops = B * (2 * Le * kin_e * DP + 2 * Ld * kin_d * DP
                 + cfg["e_layers"] * enc_layer + cfg["d_layers"] * dec_layer
                 + 2 * Ld * DP * DP)
    trans = B * (cfg["e_layers"] * (H * Le * Le + Le * DFFP)
                 + cfg["d_layers"] * (H * Ld * Ld + H * Ld * Le + Ld * DFFP))
    bytes_accessed = int(sum(int(a.size) * a.dtype.itemsize for a in operands)
                         + out_bytes)
    return pl.CostEstimate(flops=int(flops), transcendentals=int(trans),
                           bytes_accessed=bytes_accessed)


def gpformer_forward(params, cfg, x_enc, x_mark_enc, x_dec, x_mark_dec, x_static,
                     gp_update_flag=False):
    dm, H = cfg["d_model"], cfg["n_heads"]
    E = dm // H
    B, Le, _ = x_enc.shape
    Ld = x_dec.shape[1]

    # TODO(synk): exact StaticContextEmbedding internals unavailable; approximated as a
    # linear static->d_model projection broadcast-added over time (fused into the
    # embedding matmul).
    enc_feats = _embed_features(x_enc, x_mark_enc, x_static, cfg["dim_static"],
                                params["enc_emb_w"].shape[0])
    dec_feats = _embed_features(x_dec, x_mark_dec, x_static, cfg["dim_static"],
                                params["dec_emb_w"].shape[0])
    pe_enc = _positional_embedding(Le, dm) + params["emb_bias"]
    pe_dec = _positional_embedding(Ld, dm) + params["emb_bias"]

    # TODO(synk): GpLayer global-pool mixing and the IGMM online EM update are stateful
    # data-dependent clustering with no clean Pallas equivalent; skipped here.
    # TODO(synk): the reference forward's `x_gp` global-padding branch references an
    # undefined name; the in-place write into x_dec (and the GpBuilder key) is skipped.

    enc_p, dec_p = params["enc"], params["dec"]
    ops = [pe_enc, pe_dec, params["enc_emb_w"], params["dec_emb_w"],
           enc_p["wqkv"], enc_p["wo"], enc_p["w1"], enc_p["w2"], enc_p["vec"],
           dec_p["swqkv"], dec_p["swo"], dec_p["cwq"], dec_p["cwkv"], dec_p["cwo"],
           dec_p["w1"], dec_p["w2"], dec_p["vec"],
           params["misc"], params["proj_w"]]

    kernel = functools.partial(
        _fused_forward_kernel,
        e_layers=cfg["e_layers"], d_layers=cfg["d_layers"],
        n_heads=H, d_head=E, d_model=dm,
        scale=1.0 / math.sqrt(E), act=cfg.get("activation", "gelu"))

    out = pl.pallas_call(
        kernel,
        out_shape=jax.ShapeDtypeStruct((B, Ld, DP), jnp.float32),
        grid=(B,),
        in_specs=[pl.BlockSpec((1, Le, enc_feats.shape[-1]), lambda b: (b, 0, 0)),
                  pl.BlockSpec((1, Ld, dec_feats.shape[-1]), lambda b: (b, 0, 0))]
                 + [_rep_spec(a) for a in ops],
        out_specs=pl.BlockSpec((1, Ld, DP), lambda b: (b, 0, 0)),
        # Batch stays a parallel grid axis so v7x's two TensorCores split it;
        # on single-TC v5e/v6e the extra grid step is ~0.35 us of overhead.
        compiler_params=pltpu.CompilerParams(dimension_semantics=("parallel",)),
        cost_estimate=_cost_estimate(cfg, B, Le, Ld, enc_feats.shape[-1],
                                     dec_feats.shape[-1],
                                     [enc_feats, dec_feats] + ops, B * Ld * DP * 4),
    )(enc_feats, dec_feats, *ops)

    return out[:, -cfg["pred_len"]:, :cfg["c_out"]]      # output_attention=False path


# ---------------------------- deterministic parameter init (padded, stacked) --------

def init_params(key, cfg):
    dm, d_ff, c_out = cfg["d_model"], cfg["d_ff"], cfg["c_out"]
    keys = iter(jax.random.split(key, 512))

    def rnd(*shape, scale=0.02):
        return scale * jax.random.normal(next(keys), shape, jnp.float32)

    ones_dm = jnp.ones((dm,), jnp.float32)
    zeros_dm = jnp.zeros((dm,), jnp.float32)

    def enc_layer():
        wqkv = _pad_mat(jnp.concatenate([rnd(dm, dm) for _ in range(3)], 1), DP, 3 * dm)
        wo = _pad_mat(rnd(dm, dm), dm, DP)            # pre-cast bf16, consumed whole
        w1 = _pad_mat(rnd(dm, d_ff), DP, DFFP)
        w2 = _pad_mat(rnd(d_ff, dm), DFFP, DP)
        vec = _pad_rows([jnp.zeros((3 * dm,), jnp.float32), zeros_dm,   # bqkv, bo
                         ones_dm, zeros_dm,                             # n1 g/b
                         jnp.zeros((d_ff,), jnp.float32), zeros_dm,     # c1, c2
                         ones_dm, zeros_dm])                            # n2 g/b
        return wqkv, wo, w1, w2, vec

    enc_parts = [enc_layer() for _ in range(cfg["e_layers"])]
    enc = {n: jnp.stack([p[i] for p in enc_parts], 0)
           for i, n in enumerate(("wqkv", "wo", "w1", "w2", "vec"))}

    def dec_layer():
        swqkv = _pad_mat(jnp.concatenate([rnd(dm, dm) for _ in range(3)], 1), DP, 3 * dm)
        swo = _pad_mat(rnd(dm, dm), dm, DP)
        cwq = _pad_mat(rnd(dm, dm), DP, dm)
        cwkv = _pad_mat(jnp.concatenate([rnd(dm, dm) for _ in range(2)], 1), DP, 2 * dm)
        cwo = _pad_mat(rnd(dm, dm), dm, DP)
        w1 = _pad_mat(rnd(dm, d_ff), DP, DFFP)
        w2 = _pad_mat(rnd(d_ff, dm), DFFP, DP)
        vec = _pad_rows([jnp.zeros((3 * dm,), jnp.float32), zeros_dm,   # s_bqkv, s_bo
                         ones_dm, zeros_dm,                             # n1 g/b
                         zeros_dm, jnp.zeros((2 * dm,), jnp.float32),   # c_bq, c_bkv
                         zeros_dm,                                      # c_bo
                         ones_dm, zeros_dm,                             # n2 g/b
                         jnp.zeros((d_ff,), jnp.float32), zeros_dm,     # c1, c2
                         ones_dm, zeros_dm])                            # n3 g/b
        return swqkv, swo, cwq, cwkv, cwo, w1, w2, vec

    dec_parts = [dec_layer() for _ in range(cfg["d_layers"])]
    dec = {n: jnp.stack([p[i] for p in dec_parts], 0)
           for i, n in enumerate(("swqkv", "swo", "cwq", "cwkv", "cwo",
                                  "w1", "w2", "vec"))}

    static_w = rnd(cfg["dim_static"], dm)             # shared by enc & dec embeddings

    def embed_weight(c_in):
        conv_w = rnd(3 * c_in, dm)                    # conv1d k=3, circular, no bias
        mark_w = rnd(cfg["mark_dim"], dm)             # timeF linear, no bias
        w = jnp.concatenate([conv_w, mark_w, static_w], 0)
        kin_pad = ((w.shape[0] + 15) // 16) * 16
        return _pad_mat(w, kin_pad, DP)

    misc = _pad_rows([ones_dm, zeros_dm,              # encoder-stack norm g/b
                      ones_dm, zeros_dm,              # decoder-stack norm g/b
                      jnp.zeros((c_out,), jnp.float32)])   # projection bias

    return {"enc_emb_w": embed_weight(cfg["enc_in"]),
            "dec_emb_w": embed_weight(cfg["dec_in"]),
            "emb_bias": jnp.zeros((1, DP), jnp.float32),
            "enc": enc, "dec": dec, "misc": misc,
            "proj_w": _pad_mat(rnd(dm, c_out), DP, DP)}


# ---------------------------- main ----------------------------

if __name__ == "__main__":
    cfg = dict(enc_in=4, dec_in=4, c_out=4, d_model=32, n_heads=4, d_ff=64,
               e_layers=2, d_layers=1, pred_len=4, mark_dim=4, dim_static=5,
               d_low=8, activation="gelu")

    key = jax.random.PRNGKey(0)
    k_params, k1, k2, k3, k4, k5 = jax.random.split(key, 6)

    B, L_enc, L_dec = 2, 8, 8
    x_enc = jax.random.normal(k1, (B, L_enc, cfg["enc_in"]), jnp.float32)
    x_mark_enc = jax.random.normal(k2, (B, L_enc, cfg["mark_dim"]), jnp.float32)
    x_dec = jax.random.normal(k3, (B, L_dec, cfg["dec_in"]), jnp.float32)
    x_mark_dec = jax.random.normal(k4, (B, L_dec, cfg["mark_dim"]), jnp.float32)
    x_static = jax.random.normal(k5, (B, cfg["dim_static"]), jnp.float32)

    params = init_params(k_params, cfg)

    fwd = jax.jit(lambda p, xe, me, xd, md, xs:
                  gpformer_forward(p, cfg, xe, me, xd, md, xs))
    out = fwd(params, x_enc, x_mark_enc, x_dec, x_mark_dec, x_static)
    out = jax.block_until_ready(out)
    assert out.shape == (B, cfg["pred_len"], cfg["c_out"]), out.shape
    assert bool(jnp.all(jnp.isfinite(out))), "non-finite output"
    print("KERNEL_OK")
</pallas_src>

<mosaic_0001>
module attributes {stable_mosaic.version = 11 : i64} {
  func.func @_fused_forward_kernel(%arg0: i32, %arg1: memref<1x8x32xf32, #tpu.memory_space<vmem>>, %arg2: memref<1x8x32xf32, #tpu.memory_space<vmem>>, %arg3: memref<8x128xf32, #tpu.memory_space<vmem>>, %arg4: memref<8x128xf32, #tpu.memory_space<vmem>>, %arg5: memref<32x128xbf16, #tpu.memory_space<vmem>>, %arg6: memref<32x128xbf16, #tpu.memory_space<vmem>>, %arg7: memref<2x128x96xbf16, #tpu.memory_space<vmem>>, %arg8: memref<2x32x128xbf16, #tpu.memory_space<vmem>>, %arg9: memref<2x128x128xbf16, #tpu.memory_space<vmem>>, %arg10: memref<2x128x128xbf16, #tpu.memory_space<vmem>>, %arg11: memref<2x8x128xf32, #tpu.memory_space<vmem>>, %arg12: memref<1x128x96xbf16, #tpu.memory_space<vmem>>, %arg13: memref<1x32x128xbf16, #tpu.memory_space<vmem>>, %arg14: memref<1x128x32xbf16, #tpu.memory_space<vmem>>, %arg15: memref<1x128x64xbf16, #tpu.memory_space<vmem>>, %arg16: memref<1x32x128xbf16, #tpu.memory_space<vmem>>, %arg17: memref<1x128x128xbf16, #tpu.memory_space<vmem>>, %arg18: memref<1x128x128xbf16, #tpu.memory_space<vmem>>, %arg19: memref<1x13x128xf32, #tpu.memory_space<vmem>>, %arg20: memref<5x128xf32, #tpu.memory_space<vmem>>, %arg21: memref<128x128xbf16, #tpu.memory_space<vmem>>, %arg22: memref<1x8x128xf32, #tpu.memory_space<vmem>>) attributes {dimension_semantics = [#tpu.dimension_semantics<parallel>], iteration_bounds = array<i64: 2>, scalar_prefetch = 0 : i64, scratch_operands = 0 : i64, tpu.core_type = #tpu.core_type<tc>, window_params = [{transform_indices = @transform_0, window_bounds = array<i64: 1, 8, 32>}, {transform_indices = @transform_1, window_bounds = array<i64: 1, 8, 32>}, {pipeline_mode = #tpu.pipeline_mode<synchronous>, transform_indices = @transform_2, window_bounds = array<i64: 8, 128>}, {pipeline_mode = #tpu.pipeline_mode<synchronous>, transform_indices = @transform_3, window_bounds = array<i64: 8, 128>}, {pipeline_mode = #tpu.pipeline_mode<synchronous>, transform_indices = @transform_4, window_bounds = array<i64: 32, 128>}, {pipeline_mode = #tpu.pipeline_mode<synchronous>, transform_indices = @transform_5, window_bounds = array<i64: 32, 128>}, {pipeline_mode = #tpu.pipeline_mode<synchronous>, transform_indices = @transform_6, window_bounds = array<i64: 2, 128, 96>}, {pipeline_mode = #tpu.pipeline_mode<synchronous>, transform_indices = @transform_7, window_bounds = array<i64: 2, 32, 128>}, {pipeline_mode = #tpu.pipeline_mode<synchronous>, transform_indices = @transform_8, window_bounds = array<i64: 2, 128, 128>}, {pipeline_mode = #tpu.pipeline_mode<synchronous>, transform_indices = @transform_9, window_bounds = array<i64: 2, 128, 128>}, {pipeline_mode = #tpu.pipeline_mode<synchronous>, transform_indices = @transform_10, window_bounds = array<i64: 2, 8, 128>}, {pipeline_mode = #tpu.pipeline_mode<synchronous>, transform_indices = @transform_11, window_bounds = array<i64: 1, 128, 96>}, {pipeline_mode = #tpu.pipeline_mode<synchronous>, transform_indices = @transform_12, window_bounds = array<i64: 1, 32, 128>}, {pipeline_mode = #tpu.pipeline_mode<synchronous>, transform_indices = @transform_13, window_bounds = array<i64: 1, 128, 32>}, {pipeline_mode = #tpu.pipeline_mode<synchronous>, transform_indices = @transform_14, window_bounds = array<i64: 1, 128, 64>}, {pipeline_mode = #tpu.pipeline_mode<synchronous>, transform_indices = @transform_15, window_bounds = array<i64: 1, 32, 128>}, {pipeline_mode = #tpu.pipeline_mode<synchronous>, transform_indices = @transform_16, window_bounds = array<i64: 1, 128, 128>}, {pipeline_mode = #tpu.pipeline_mode<synchronous>, transform_indices = @transform_17, window_bounds = array<i64: 1, 128, 128>}, {pipeline_mode = #tpu.pipeline_mode<synchronous>, transform_indices = @transform_18, window_bounds = array<i64: 1, 13, 128>}, {pipeline_mode = #tpu.pipeline_mode<synchronous>, transform_indices = @transform_19, window_bounds = array<i64: 5, 128>}, {pipeline_mode = #tpu.pipeline_mode<synchronous>, transform_indices = @transform_20, window_bounds = array<i64: 128, 128>}, {transform_indices = @transform_21, window_bounds = array<i64: 1, 8, 128>}]} {
    %c0 = arith.constant 0 : index
    %c0_0 = arith.constant 0 : index
    %c0_1 = arith.constant 0 : index
    %0 = vector.load %arg1[%c0, %c0_0, %c0_1] : memref<1x8x32xf32, #tpu.memory_space<vmem>>, vector<1x8x32xf32>
    %1 = vector.shape_cast %0 : vector<1x8x32xf32> to vector<8x32xf32>
    %2 = arith.truncf %1 : vector<8x32xf32> to vector<8x32xbf16>
    %c0_2 = arith.constant 0 : index
    %c0_3 = arith.constant 0 : index
    %3 = vector.load %arg5[%c0_2, %c0_3] : memref<32x128xbf16, #tpu.memory_space<vmem>>, vector<32x128xbf16>
    %cst = arith.constant dense<0.000000e+00> : vector<8x128xf32>
    %4 = tpu.matmul %2, %3, %cst {dimension_numbers = #tpu.dot_dimension_numbers<[1], [0], [0], [1], [0, 0, 1, 1], [], []>} : vector<8x32xbf16>, vector<32x128xbf16>, vector<8x128xf32> -> vector<8x128xf32>
    %c0_4 = arith.constant 0 : index
    %c0_5 = arith.constant 0 : index
    %5 = vector.load %arg3[%c0_4, %c0_5] : memref<8x128xf32, #tpu.memory_space<vmem>>, vector<8x128xf32>
    %6 = arith.addf %4, %5 : vector<8x128xf32>
    %c0_6 = arith.constant 0 : index
    %c0_7 = arith.constant 0 : index
    %c0_8 = arith.constant 0 : index
    %7 = vector.load %arg7[%c0_6, %c0_7, %c0_8] : memref<2x128x96xbf16, #tpu.memory_space<vmem>>, vector<1x128x96xbf16>
    %8 = vector.shape_cast %7 : vector<1x128x96xbf16> to vector<128x96xbf16>
    %c0_9 = arith.constant 0 : index
    %c0_10 = arith.constant 0 : index
    %c0_11 = arith.constant 0 : index
    %9 = vector.load %arg8[%c0_9, %c0_10, %c0_11] : memref<2x32x128xbf16, #tpu.memory_space<vmem>>, vector<1x32x128xbf16>
    %10 = vector.shape_cast %9 : vector<1x32x128xbf16> to vector<32x128xbf16>
    %c0_12 = arith.constant 0 : index
    %c0_13 = arith.constant 0 : index
    %c0_14 = arith.constant 0 : index
    %11 = vector.load %arg9[%c0_12, %c0_13, %c0_14] : memref<2x128x128xbf16, #tpu.memory_space<vmem>>, vector<1x128x128xbf16>
    %12 = vector.shape_cast %11 : vector<1x128x128xbf16> to vector<128x128xbf16>
    %c0_15 = arith.constant 0 : index
    %c0_16 = arith.constant 0 : index
    %c0_17 = arith.constant 0 : index
    %13 = vector.load %arg10[%c0_15, %c0_16, %c0_17] : memref<2x128x128xbf16, #tpu.memory_space<vmem>>, vector<1x128x128xbf16>
    %14 = vector.shape_cast %13 : vector<1x128x128xbf16> to vector<128x128xbf16>
    %c0_18 = arith.constant 0 : index
    %c0_19 = arith.constant 0 : index
    %c0_20 = arith.constant 0 : index
    %15 = vector.load %arg11[%c0_18, %c0_19, %c0_20] : memref<2x8x128xf32, #tpu.memory_space<vmem>>, vector<1x8x128xf32>
    %16 = vector.shape_cast %15 : vector<1x8x128xf32> to vector<8x128xf32>
    %17 = arith.truncf %6 : vector<8x128xf32> to vector<8x128xbf16>
    %cst_21 = arith.constant dense<0.000000e+00> : vector<8x96xf32>
    %18 = tpu.matmul %17, %8, %cst_21 {dimension_numbers = #tpu.dot_dimension_numbers<[1], [0], [0], [1], [0, 0, 1, 1], [], []>} : vector<8x128xbf16>, vector<128x96xbf16>, vector<8x96xf32> -> vector<8x96xf32>
    %19 = vector.extract_strided_slice %16 {offsets = [0, 0], sizes = [1, 96], strides = [1, 1]} : vector<8x128xf32> to vector<1x96xf32>
    %20 = vector.broadcast %19 : vector<1x96xf32> to vector<8x96xf32>
    %21 = arith.addf %18, %20 : vector<8x96xf32>
    %22 = vector.extract_strided_slice %21 {offsets = [0, 0], sizes = [8, 32], strides = [1, 1]} : vector<8x96xf32> to vector<8x32xf32>
    %23 = vector.extract_strided_slice %21 {offsets = [0, 32], sizes = [8, 32], strides = [1, 1]} : vector<8x96xf32> to vector<8x32xf32>
    %24 = vector.extract_strided_slice %21 {offsets = [0, 64], sizes = [8, 32], strides = [1, 1]} : vector<8x96xf32> to vector<8x32xf32>
    %25 = vector.extract_strided_slice %16 {offsets = [1, 0], sizes = [1, 128], strides = [1, 1]} : vector<8x128xf32> to vector<1x128xf32>
    %26 = arith.truncf %22 : vector<8x32xf32> to vector<8x32xbf16>
    %27 = vector.extract_strided_slice %26 {offsets = [0, 0], sizes = [8, 8], strides = [1, 1]} : vector<8x32xbf16> to vector<8x8xbf16>
    %28 = vector.extract_strided_slice %26 {offsets = [0, 8], sizes = [8, 8], strides = [1, 1]} : vector<8x32xbf16> to vector<8x8xbf16>
    %29 = vector.extract_strided_slice %26 {offsets = [0, 16], sizes = [8, 8], strides = [1, 1]} : vector<8x32xbf16> to vector<8x8xbf16>
    %30 = vector.extract_strided_slice %26 {offsets = [0, 24], sizes = [8, 8], strides = [1, 1]} : vector<8x32xbf16> to vector<8x8xbf16>
    %31 = vector.shape_cast %27 : vector<8x8xbf16> to vector<1x8x8xbf16>
    %32 = vector.shape_cast %28 : vector<8x8xbf16> to vector<1x8x8xbf16>
    %33 = vector.shape_cast %29 : vector<8x8xbf16> to vector<1x8x8xbf16>
    %34 = vector.shape_cast %30 : vector<8x8xbf16> to vector<1x8x8xbf16>
    %35 = tpu.concatenate %31, %32, %33, %34 in 0 : vector<1x8x8xbf16>, vector<1x8x8xbf16>, vector<1x8x8xbf16>, vector<1x8x8xbf16> -> vector<4x8x8xbf16>
    %36 = arith.truncf %23 : vector<8x32xf32> to vector<8x32xbf16>
    %37 = vector.extract_strided_slice %36 {offsets = [0, 0], sizes = [8, 8], strides = [1, 1]} : vector<8x32xbf16> to vector<8x8xbf16>
    %38 = vector.extract_strided_slice %36 {offsets = [0, 8], sizes = [8, 8], strides = [1, 1]} : vector<8x32xbf16> to vector<8x8xbf16>
    %39 = vector.extract_strided_slice %36 {offsets = [0, 16], sizes = [8, 8], strides = [1, 1]} : vector<8x32xbf16> to vector<8x8xbf16>
    %40 = vector.extract_strided_slice %36 {offsets = [0, 24], sizes = [8, 8], strides = [1, 1]} : vector<8x32xbf16> to vector<8x8xbf16>
    %41 = vector.shape_cast %37 : vector<8x8xbf16> to vector<1x8x8xbf16>
    %42 = vector.shape_cast %38 : vector<8x8xbf16> to vector<1x8x8xbf16>
    %43 = vector.shape_cast %39 : vector<8x8xbf16> to vector<1x8x8xbf16>
    %44 = vector.shape_cast %40 : vector<8x8xbf16> to vector<1x8x8xbf16>
    %45 = tpu.concatenate %41, %42, %43, %44 in 0 : vector<1x8x8xbf16>, vector<1x8x8xbf16>, vector<1x8x8xbf16>, vector<1x8x8xbf16> -> vector<4x8x8xbf16>
    %46 = arith.truncf %24 : vector<8x32xf32> to vector<8x32xbf16>
    %47 = vector.extract_strided_slice %46 {offsets = [0, 0], sizes = [8, 8], strides = [1, 1]} : vector<8x32xbf16> to vector<8x8xbf16>
    %48 = vector.extract_strided_slice %46 {offsets = [0, 8], sizes = [8, 8], strides = [1, 1]} : vector<8x32xbf16> to vector<8x8xbf16>
    %49 = vector.extract_strided_slice %46 {offsets = [0, 16], sizes = [8, 8], strides = [1, 1]} : vector<8x32xbf16> to vector<8x8xbf16>
    %50 = vector.extract_strided_slice %46 {offsets = [0, 24], sizes = [8, 8], strides = [1, 1]} : vector<8x32xbf16> to vector<8x8xbf16>
    %51 = vector.shape_cast %47 : vector<8x8xbf16> to vector<1x8x8xbf16>
    %52 = vector.shape_cast %48 : vector<8x8xbf16> to vector<1x8x8xbf16>
    %53 = vector.shape_cast %49 : vector<8x8xbf16> to vector<1x8x8xbf16>
    %54 = vector.shape_cast %50 : vector<8x8xbf16> to vector<1x8x8xbf16>
    %55 = tpu.concatenate %51, %52, %53, %54 in 0 : vector<1x8x8xbf16>, vector<1x8x8xbf16>, vector<1x8x8xbf16>, vector<1x8x8xbf16> -> vector<4x8x8xbf16>
    "tpu.trace_start"() <{level = 10 : i32, message = "hqe,hke->hqk"}> : () -> ()
    %cst_22 = arith.constant dense<0.000000e+00> : vector<4x8x8xf32>
    %56 = tpu.matmul %35, %45, %cst_22 {dimension_numbers = #tpu.dot_dimension_numbers<[2], [2], [1], [1], [0, 0, 0, 1, 1, 1], [0], [0]>} : vector<4x8x8xbf16>, vector<4x8x8xbf16>, vector<4x8x8xf32> -> vector<4x8x8xf32>
    "tpu.trace_stop"() : () -> ()
    %cst_23 = arith.constant 0.353553385 : f32
    %57 = vector.broadcast %cst_23 : f32 to vector<4x8x8xf32>
    %58 = arith.mulf %56, %57 : vector<4x8x8xf32>
    %cst_24 = arith.constant dense<0xFF800000> : vector<4x8xf32>
    %59 = vector.multi_reduction <maximumf>, %58, %cst_24 [2] : vector<4x8x8xf32> to vector<4x8xf32>
    %60 = vector.shape_cast %59 : vector<4x8xf32> to vector<4x8x1xf32>
    %61 = vector.broadcast %60 : vector<4x8x1xf32> to vector<4x8x8xf32>
    %62 = arith.subf %58, %61 : vector<4x8x8xf32>
    %63 = math.exp %62 : vector<4x8x8xf32>
    %cst_25 = arith.constant dense<0.000000e+00> : vector<4x8xf32>
    %64 = vector.multi_reduction <add>, %63, %cst_25 [2] : vector<4x8x8xf32> to vector<4x8xf32>
    %65 = vector.shape_cast %64 : vector<4x8xf32> to vector<4x8x1xf32>
    %66 = tpu.reciprocal %65 {approx = true} : vector<4x8x1xf32> -> vector<4x8x1xf32>
    %67 = vector.broadcast %66 : vector<4x8x1xf32> to vector<4x8x8xf32>
    %68 = arith.mulf %63, %67 : vector<4x8x8xf32>
    %69 = arith.truncf %68 : vector<4x8x8xf32> to vector<4x8x8xbf16>
    "tpu.trace_start"() <{level = 10 : i32, message = "hqk,hke->hqe"}> : () -> ()
    %cst_26 = arith.constant dense<0.000000e+00> : vector<4x8x8xf32>
    %70 = tpu.matmul %69, %55, %cst_26 {dimension_numbers = #tpu.dot_dimension_numbers<[2], [1], [1], [2], [0, 0, 0, 1, 1, 2], [0], [0]>} : vector<4x8x8xbf16>, vector<4x8x8xbf16>, vector<4x8x8xf32> -> vector<4x8x8xf32>
    "tpu.trace_stop"() : () -> ()
    %71 = vector.extract_strided_slice %70 {offsets = [0, 0, 0], sizes = [1, 8, 8], strides = [1, 1, 1]} : vector<4x8x8xf32> to vector<1x8x8xf32>
    %72 = vector.shape_cast %71 : vector<1x8x8xf32> to vector<8x8xf32>
    %73 = vector.extract_strided_slice %70 {offsets = [1, 0, 0], sizes = [1, 8, 8], strides = [1, 1, 1]} : vector<4x8x8xf32> to vector<1x8x8xf32>
    %74 = vector.shape_cast %73 : vector<1x8x8xf32> to vector<8x8xf32>
    %75 = vector.extract_strided_slice %70 {offsets = [2, 0, 0], sizes = [1, 8, 8], strides = [1, 1, 1]} : vector<4x8x8xf32> to vector<1x8x8xf32>
    %76 = vector.shape_cast %75 : vector<1x8x8xf32> to vector<8x8xf32>
    %77 = vector.extract_strided_slice %70 {offsets = [3, 0, 0], sizes = [1, 8, 8], strides = [1, 1, 1]} : vector<4x8x8xf32> to vector<1x8x8xf32>
    %78 = vector.shape_cast %77 : vector<1x8x8xf32> to vector<8x8xf32>
    %79 = tpu.concatenate %72, %74, %76, %78 in 1 : vector<8x8xf32>, vector<8x8xf32>, vector<8x8xf32>, vector<8x8xf32> -> vector<8x32xf32>
    %80 = arith.truncf %79 : vector<8x32xf32> to vector<8x32xbf16>
    %cst_27 = arith.constant dense<0.000000e+00> : vector<8x128xf32>
    %81 = tpu.matmul %80, %10, %cst_27 {dimension_numbers = #tpu.dot_dimension_numbers<[1], [0], [0], [1], [0, 0, 1, 1], [], []>} : vector<8x32xbf16>, vector<32x128xbf16>, vector<8x128xf32> -> vector<8x128xf32>
    %82 = vector.broadcast %25 : vector<1x128xf32> to vector<8x128xf32>
    %83 = arith.addf %81, %82 : vector<8x128xf32>
    %84 = arith.addf %6, %83 : vector<8x128xf32>
    %85 = vector.extract_strided_slice %16 {offsets = [2, 0], sizes = [1, 128], strides = [1, 1]} : vector<8x128xf32> to vector<1x128xf32>
    %86 = vector.extract_strided_slice %16 {offsets = [3, 0], sizes = [1, 128], strides = [1, 1]} : vector<8x128xf32> to vector<1x128xf32>
    %cst_28 = arith.constant dense<0.000000e+00> : vector<8xf32>
    %87 = vector.multi_reduction <add>, %84, %cst_28 [1] : vector<8x128xf32> to vector<8xf32>
    %88 = vector.shape_cast %87 : vector<8xf32> to vector<8x1xf32>
    %cst_29 = arith.constant 3.125000e-02 : f32
    %89 = vector.broadcast %cst_29 : f32 to vector<8x1xf32>
    %90 = arith.mulf %88, %89 : vector<8x1xf32>
    %91 = arith.mulf %84, %84 : vector<8x128xf32>
    %cst_30 = arith.constant dense<0.000000e+00> : vector<8xf32>
    %92 = vector.multi_reduction <add>, %91, %cst_30 [1] : vector<8x128xf32> to vector<8xf32>
    %93 = vector.shape_cast %92 : vector<8xf32> to vector<8x1xf32>
    %cst_31 = arith.constant 3.125000e-02 : f32
    %94 = vector.broadcast %cst_31 : f32 to vector<8x1xf32>
    %95 = arith.mulf %93, %94 : vector<8x1xf32>
    %96 = arith.mulf %90, %90 : vector<8x1xf32>
    %97 = arith.subf %95, %96 : vector<8x1xf32>
    %98 = vector.broadcast %90 : vector<8x1xf32> to vector<8x128xf32>
    %99 = arith.subf %84, %98 : vector<8x128xf32>
    %cst_32 = arith.constant 9.99999974E-6 : f32
    %100 = vector.broadcast %cst_32 : f32 to vector<8x1xf32>
    %101 = arith.addf %97, %100 : vector<8x1xf32>
    %102 = math.rsqrt %101 : vector<8x1xf32>
    %103 = vector.broadcast %102 : vector<8x1xf32> to vector<8x128xf32>
    %104 = arith.mulf %99, %103 : vector<8x128xf32>
    %105 = vector.broadcast %85 : vector<1x128xf32> to vector<8x128xf32>
    %106 = arith.mulf %104, %105 : vector<8x128xf32>
    %107 = vector.broadcast %86 : vector<1x128xf32> to vector<8x128xf32>
    %108 = arith.addf %106, %107 : vector<8x128xf32>
    %109 = arith.truncf %108 : vector<8x128xf32> to vector<8x128xbf16>
    %cst_33 = arith.constant dense<0.000000e+00> : vector<8x128xf32>
    %110 = tpu.matmul %109, %12, %cst_33 {dimension_numbers = #tpu.dot_dimension_numbers<[1], [0], [0], [1], [0, 0, 1, 1], [], []>} : vector<8x128xbf16>, vector<128x128xbf16>, vector<8x128xf32> -> vector<8x128xf32>
    %111 = vector.extract_strided_slice %16 {offsets = [4, 0], sizes = [1, 128], strides = [1, 1]} : vector<8x128xf32> to vector<1x128xf32>
    %112 = vector.broadcast %111 : vector<1x128xf32> to vector<8x128xf32>
    %113 = arith.addf %110, %112 : vector<8x128xf32>
    %114 = arith.mulf %113, %113 : vector<8x128xf32>
    %115 = arith.mulf %113, %114 : vector<8x128xf32>
    %cst_34 = arith.constant 4.471500e-02 : f32
    %116 = vector.broadcast %cst_34 : f32 to vector<8x128xf32>
    %117 = arith.mulf %116, %115 : vector<8x128xf32>
    %118 = arith.addf %113, %117 : vector<8x128xf32>
    %cst_35 = arith.constant 0.797884583 : f32
    %119 = vector.broadcast %cst_35 : f32 to vector<8x128xf32>
    %120 = arith.mulf %119, %118 : vector<8x128xf32>
    %121 = math.tanh %120 : vector<8x128xf32>
    %cst_36 = arith.constant 1.000000e+00 : f32
    %122 = vector.broadcast %cst_36 : f32 to vector<8x128xf32>
    %123 = arith.addf %122, %121 : vector<8x128xf32>
    %cst_37 = arith.constant 5.000000e-01 : f32
    %124 = vector.broadcast %cst_37 : f32 to vector<8x128xf32>
    %125 = arith.mulf %124, %123 : vector<8x128xf32>
    %126 = arith.mulf %113, %125 : vector<8x128xf32>
    %127 = arith.truncf %126 : vector<8x128xf32> to vector<8x128xbf16>
    %cst_38 = arith.constant dense<0.000000e+00> : vector<8x128xf32>
    %128 = tpu.matmul %127, %14, %cst_38 {dimension_numbers = #tpu.dot_dimension_numbers<[1], [0], [0], [1], [0, 0, 1, 1], [], []>} : vector<8x128xbf16>, vector<128x128xbf16>, vector<8x128xf32> -> vector<8x128xf32>
    %129 = vector.extract_strided_slice %16 {offsets = [5, 0], sizes = [1, 128], strides = [1, 1]} : vector<8x128xf32> to vector<1x128xf32>
    %130 = vector.broadcast %129 : vector<1x128xf32> to vector<8x128xf32>
    %131 = arith.addf %128, %130 : vector<8x128xf32>
    %132 = arith.addf %108, %131 : vector<8x128xf32>
    %133 = vector.extract_strided_slice %16 {offsets = [6, 0], sizes = [1, 128], strides = [1, 1]} : vector<8x128xf32> to vector<1x128xf32>
    %134 = vector.extract_strided_slice %16 {offsets = [7, 0], sizes = [1, 128], strides = [1, 1]} : vector<8x128xf32> to vector<1x128xf32>
    %cst_39 = arith.constant dense<0.000000e+00> : vector<8xf32>
    %135 = vector.multi_reduction <add>, %132, %cst_39 [1] : vector<8x128xf32> to vector<8xf32>
    %136 = vector.shape_cast %135 : vector<8xf32> to vector<8x1xf32>
    %cst_40 = arith.constant 3.125000e-02 : f32
    %137 = vector.broadcast %cst_40 : f32 to vector<8x1xf32>
    %138 = arith.mulf %136, %137 : vector<8x1xf32>
    %139 = arith.mulf %132, %132 : vector<8x128xf32>
    %cst_41 = arith.constant dense<0.000000e+00> : vector<8xf32>
    %140 = vector.multi_reduction <add>, %139, %cst_41 [1] : vector<8x128xf32> to vector<8xf32>
    %141 = vector.shape_cast %140 : vector<8xf32> to vector<8x1xf32>
    %cst_42 = arith.constant 3.125000e-02 : f32
    %142 = vector.broadcast %cst_42 : f32 to vector<8x1xf32>
    %143 = arith.mulf %141, %142 : vector<8x1xf32>
    %144 = arith.mulf %138, %138 : vector<8x1xf32>
    %145 = arith.subf %143, %144 : vector<8x1xf32>
    %146 = vector.broadcast %138 : vector<8x1xf32> to vector<8x128xf32>
    %147 = arith.subf %132, %146 : vector<8x128xf32>
    %cst_43 = arith.constant 9.99999974E-6 : f32
    %148 = vector.broadcast %cst_43 : f32 to vector<8x1xf32>
    %149 = arith.addf %145, %148 : vector<8x1xf32>
    %150 = math.rsqrt %149 : vector<8x1xf32>
    %151 = vector.broadcast %150 : vector<8x1xf32> to vector<8x128xf32>
    %152 = arith.mulf %147, %151 : vector<8x128xf32>
    %153 = vector.broadcast %133 : vector<1x128xf32> to vector<8x128xf32>
    %154 = arith.mulf %152, %153 : vector<8x128xf32>
    %155 = vector.broadcast %134 : vector<1x128xf32> to vector<8x128xf32>
    %156 = arith.addf %154, %155 : vector<8x128xf32>
    %c1 = arith.constant 1 : index
    %c0_44 = arith.constant 0 : index
    %c0_45 = arith.constant 0 : index
    %157 = vector.load %arg7[%c1, %c0_44, %c0_45] : memref<2x128x96xbf16, #tpu.memory_space<vmem>>, vector<1x128x96xbf16>
    %158 = vector.shape_cast %157 : vector<1x128x96xbf16> to vector<128x96xbf16>
    %c1_46 = arith.constant 1 : index
    %c0_47 = arith.constant 0 : index
    %c0_48 = arith.constant 0 : index
    %159 = vector.load %arg8[%c1_46, %c0_47, %c0_48] : memref<2x32x128xbf16, #tpu.memory_space<vmem>>, vector<1x32x128xbf16>
    %160 = vector.shape_cast %159 : vector<1x32x128xbf16> to vector<32x128xbf16>
    %c1_49 = arith.constant 1 : index
    %c0_50 = arith.constant 0 : index
    %c0_51 = arith.constant 0 : index
    %161 = vector.load %arg9[%c1_49, %c0_50, %c0_51] : memref<2x128x128xbf16, #tpu.memory_space<vmem>>, vector<1x128x128xbf16>
    %162 = vector.shape_cast %161 : vector<1x128x128xbf16> to vector<128x128xbf16>
    %c1_52 = arith.constant 1 : index
    %c0_53 = arith.constant 0 : index
    %c0_54 = arith.constant 0 : index
    %163 = vector.load %arg10[%c1_52, %c0_53, %c0_54] : memref<2x128x128xbf16, #tpu.memory_space<vmem>>, vector<1x128x128xbf16>
    %164 = vector.shape_cast %163 : vector<1x128x128xbf16> to vector<128x128xbf16>
    %c1_55 = arith.constant 1 : index
    %c0_56 = arith.constant 0 : index
    %c0_57 = arith.constant 0 : index
    %165 = vector.load %arg11[%c1_55, %c0_56, %c0_57] : memref<2x8x128xf32, #tpu.memory_space<vmem>>, vector<1x8x128xf32>
    %166 = vector.shape_cast %165 : vector<1x8x128xf32> to vector<8x128xf32>
    %167 = arith.truncf %156 : vector<8x128xf32> to vector<8x128xbf16>
    %cst_58 = arith.constant dense<0.000000e+00> : vector<8x96xf32>
    %168 = tpu.matmul %167, %158, %cst_58 {dimension_numbers = #tpu.dot_dimension_numbers<[1], [0], [0], [1], [0, 0, 1, 1], [], []>} : vector<8x128xbf16>, vector<128x96xbf16>, vector<8x96xf32> -> vector<8x96xf32>
    %169 = vector.extract_strided_slice %166 {offsets = [0, 0], sizes = [1, 96], strides = [1, 1]} : vector<8x128xf32> to vector<1x96xf32>
    %170 = vector.broadcast %169 : vector<1x96xf32> to vector<8x96xf32>
    %171 = arith.addf %168, %170 : vector<8x96xf32>
    %172 = vector.extract_strided_slice %171 {offsets = [0, 0], sizes = [8, 32], strides = [1, 1]} : vector<8x96xf32> to vector<8x32xf32>
    %173 = vector.extract_strided_slice %171 {offsets = [0, 32], sizes = [8, 32], strides = [1, 1]} : vector<8x96xf32> to vector<8x32xf32>
    %174 = vector.extract_strided_slice %171 {offsets = [0, 64], sizes = [8, 32], strides = [1, 1]} : vector<8x96xf32> to vector<8x32xf32>
    %175 = vector.extract_strided_slice %166 {offsets = [1, 0], sizes = [1, 128], strides = [1, 1]} : vector<8x128xf32> to vector<1x128xf32>
    %176 = arith.truncf %172 : vector<8x32xf32> to vector<8x32xbf16>
    %177 = vector.extract_strided_slice %176 {offsets = [0, 0], sizes = [8, 8], strides = [1, 1]} : vector<8x32xbf16> to vector<8x8xbf16>
    %178 = vector.extract_strided_slice %176 {offsets = [0, 8], sizes = [8, 8], strides = [1, 1]} : vector<8x32xbf16> to vector<8x8xbf16>
    %179 = vector.extract_strided_slice %176 {offsets = [0, 16], sizes = [8, 8], strides = [1, 1]} : vector<8x32xbf16> to vector<8x8xbf16>
    %180 = vector.extract_strided_slice %176 {offsets = [0, 24], sizes = [8, 8], strides = [1, 1]} : vector<8x32xbf16> to vector<8x8xbf16>
    %181 = vector.shape_cast %177 : vector<8x8xbf16> to vector<1x8x8xbf16>
    %182 = vector.shape_cast %178 : vector<8x8xbf16> to vector<1x8x8xbf16>
    %183 = vector.shape_cast %179 : vector<8x8xbf16> to vector<1x8x8xbf16>
    %184 = vector.shape_cast %180 : vector<8x8xbf16> to vector<1x8x8xbf16>
    %185 = tpu.concatenate %181, %182, %183, %184 in 0 : vector<1x8x8xbf16>, vector<1x8x8xbf16>, vector<1x8x8xbf16>, vector<1x8x8xbf16> -> vector<4x8x8xbf16>
    %186 = arith.truncf %173 : vector<8x32xf32> to vector<8x32xbf16>
    %187 = vector.extract_strided_slice %186 {offsets = [0, 0], sizes = [8, 8], strides = [1, 1]} : vector<8x32xbf16> to vector<8x8xbf16>
    %188 = vector.extract_strided_slice %186 {offsets = [0, 8], sizes = [8, 8], strides = [1, 1]} : vector<8x32xbf16> to vector<8x8xbf16>
    %189 = vector.extract_strided_slice %186 {offsets = [0, 16], sizes = [8, 8], strides = [1, 1]} : vector<8x32xbf16> to vector<8x8xbf16>
    %190 = vector.extract_strided_slice %186 {offsets = [0, 24], sizes = [8, 8], strides = [1, 1]} : vector<8x32xbf16> to vector<8x8xbf16>
    %191 = vector.shape_cast %187 : vector<8x8xbf16> to vector<1x8x8xbf16>
    %192 = vector.shape_cast %188 : vector<8x8xbf16> to vector<1x8x8xbf16>
    %193 = vector.shape_cast %189 : vector<8x8xbf16> to vector<1x8x8xbf16>
    %194 = vector.shape_cast %190 : vector<8x8xbf16> to vector<1x8x8xbf16>
    %195 = tpu.concatenate %191, %192, %193, %194 in 0 : vector<1x8x8xbf16>, vector<1x8x8xbf16>, vector<1x8x8xbf16>, vector<1x8x8xbf16> -> vector<4x8x8xbf16>
    %196 = arith.truncf %174 : vector<8x32xf32> to vector<8x32xbf16>
    %197 = vector.extract_strided_slice %196 {offsets = [0, 0], sizes = [8, 8], strides = [1, 1]} : vector<8x32xbf16> to vector<8x8xbf16>
    %198 = vector.extract_strided_slice %196 {offsets = [0, 8], sizes = [8, 8], strides = [1, 1]} : vector<8x32xbf16> to vector<8x8xbf16>
    %199 = vector.extract_strided_slice %196 {offsets = [0, 16], sizes = [8, 8], strides = [1, 1]} : vector<8x32xbf16> to vector<8x8xbf16>
    %200 = vector.extract_strided_slice %196 {offsets = [0, 24], sizes = [8, 8], strides = [1, 1]} : vector<8x32xbf16> to vector<8x8xbf16>
    %201 = vector.shape_cast %197 : vector<8x8xbf16> to vector<1x8x8xbf16>
    %202 = vector.shape_cast %198 : vector<8x8xbf16> to vector<1x8x8xbf16>
    %203 = vector.shape_cast %199 : vector<8x8xbf16> to vector<1x8x8xbf16>
    %204 = vector.shape_cast %200 : vector<8x8xbf16> to vector<1x8x8xbf16>
    %205 = tpu.concatenate %201, %202, %203, %204 in 0 : vector<1x8x8xbf16>, vector<1x8x8xbf16>, vector<1x8x8xbf16>, vector<1x8x8xbf16> -> vector<4x8x8xbf16>
    "tpu.trace_start"() <{level = 10 : i32, message = "hqe,hke->hqk"}> : () -> ()
    %cst_59 = arith.constant dense<0.000000e+00> : vector<4x8x8xf32>
    %206 = tpu.matmul %185, %195, %cst_59 {dimension_numbers = #tpu.dot_dimension_numbers<[2], [2], [1], [1], [0, 0, 0, 1, 1, 1], [0], [0]>} : vector<4x8x8xbf16>, vector<4x8x8xbf16>, vector<4x8x8xf32> -> vector<4x8x8xf32>
    "tpu.trace_stop"() : () -> ()
    %cst_60 = arith.constant 0.353553385 : f32
    %207 = vector.broadcast %cst_60 : f32 to vector<4x8x8xf32>
    %208 = arith.mulf %206, %207 : vector<4x8x8xf32>
    %cst_61 = arith.constant dense<0xFF800000> : vector<4x8xf32>
    %209 = vector.multi_reduction <maximumf>, %208, %cst_61 [2] : vector<4x8x8xf32> to vector<4x8xf32>
    %210 = vector.shape_cast %209 : vector<4x8xf32> to vector<4x8x1xf32>
    %211 = vector.broadcast %210 : vector<4x8x1xf32> to vector<4x8x8xf32>
    %212 = arith.subf %208, %211 : vector<4x8x8xf32>
    %213 = math.exp %212 : vector<4x8x8xf32>
    %cst_62 = arith.constant dense<0.000000e+00> : vector<4x8xf32>
    %214 = vector.multi_reduction <add>, %213, %cst_62 [2] : vector<4x8x8xf32> to vector<4x8xf32>
    %215 = vector.shape_cast %214 : vector<4x8xf32> to vector<4x8x1xf32>
    %216 = tpu.reciprocal %215 {approx = true} : vector<4x8x1xf32> -> vector<4x8x1xf32>
    %217 = vector.broadcast %216 : vector<4x8x1xf32> to vector<4x8x8xf32>
    %218 = arith.mulf %213, %217 : vector<4x8x8xf32>
    %219 = arith.truncf %218 : vector<4x8x8xf32> to vector<4x8x8xbf16>
    "tpu.trace_start"() <{level = 10 : i32, message = "hqk,hke->hqe"}> : () -> ()
    %cst_63 = arith.constant dense<0.000000e+00> : vector<4x8x8xf32>
    %220 = tpu.matmul %219, %205, %cst_63 {dimension_numbers = #tpu.dot_dimension_numbers<[2], [1], [1], [2], [0, 0, 0, 1, 1, 2], [0], [0]>} : vector<4x8x8xbf16>, vector<4x8x8xbf16>, vector<4x8x8xf32> -> vector<4x8x8xf32>
    "tpu.trace_stop"() : () -> ()
    %221 = vector.extract_strided_slice %220 {offsets = [0, 0, 0], sizes = [1, 8, 8], strides = [1, 1, 1]} : vector<4x8x8xf32> to vector<1x8x8xf32>
    %222 = vector.shape_cast %221 : vector<1x8x8xf32> to vector<8x8xf32>
    %223 = vector.extract_strided_slice %220 {offsets = [1, 0, 0], sizes = [1, 8, 8], strides = [1, 1, 1]} : vector<4x8x8xf32> to vector<1x8x8xf32>
    %224 = vector.shape_cast %223 : vector<1x8x8xf32> to vector<8x8xf32>
    %225 = vector.extract_strided_slice %220 {offsets = [2, 0, 0], sizes = [1, 8, 8], strides = [1, 1, 1]} : vector<4x8x8xf32> to vector<1x8x8xf32>
    %226 = vector.shape_cast %225 : vector<1x8x8xf32> to vector<8x8xf32>
    %227 = vector.extract_strided_slice %220 {offsets = [3, 0, 0], sizes = [1, 8, 8], strides = [1, 1, 1]} : vector<4x8x8xf32> to vector<1x8x8xf32>
    %228 = vector.shape_cast %227 : vector<1x8x8xf32> to vector<8x8xf32>
    %229 = tpu.concatenate %222, %224, %226, %228 in 1 : vector<8x8xf32>, vector<8x8xf32>, vector<8x8xf32>, vector<8x8xf32> -> vector<8x32xf32>
    %230 = arith.truncf %229 : vector<8x32xf32> to vector<8x32xbf16>
    %cst_64 = arith.constant dense<0.000000e+00> : vector<8x128xf32>
    %231 = tpu.matmul %230, %160, %cst_64 {dimension_numbers = #tpu.dot_dimension_numbers<[1], [0], [0], [1], [0, 0, 1, 1], [], []>} : vector<8x32xbf16>, vector<32x128xbf16>, vector<8x128xf32> -> vector<8x128xf32>
    %232 = vector.broadcast %175 : vector<1x128xf32> to vector<8x128xf32>
    %233 = arith.addf %231, %232 : vector<8x128xf32>
    %234 = arith.addf %156, %233 : vector<8x128xf32>
    %235 = vector.extract_strided_slice %166 {offsets = [2, 0], sizes = [1, 128], strides = [1, 1]} : vector<8x128xf32> to vector<1x128xf32>
    %236 = vector.extract_strided_slice %166 {offsets = [3, 0], sizes = [1, 128], strides = [1, 1]} : vector<8x128xf32> to vector<1x128xf32>
    %cst_65 = arith.constant dense<0.000000e+00> : vector<8xf32>
    %237 = vector.multi_reduction <add>, %234, %cst_65 [1] : vector<8x128xf32> to vector<8xf32>
    %238 = vector.shape_cast %237 : vector<8xf32> to vector<8x1xf32>
    %cst_66 = arith.constant 3.125000e-02 : f32
    %239 = vector.broadcast %cst_66 : f32 to vector<8x1xf32>
    %240 = arith.mulf %238, %239 : vector<8x1xf32>
    %241 = arith.mulf %234, %234 : vector<8x128xf32>
    %cst_67 = arith.constant dense<0.000000e+00> : vector<8xf32>
    %242 = vector.multi_reduction <add>, %241, %cst_67 [1] : vector<8x128xf32> to vector<8xf32>
    %243 = vector.shape_cast %242 : vector<8xf32> to vector<8x1xf32>
    %cst_68 = arith.constant 3.125000e-02 : f32
    %244 = vector.broadcast %cst_68 : f32 to vector<8x1xf32>
    %245 = arith.mulf %243, %244 : vector<8x1xf32>
    %246 = arith.mulf %240, %240 : vector<8x1xf32>
    %247 = arith.subf %245, %246 : vector<8x1xf32>
    %248 = vector.broadcast %240 : vector<8x1xf32> to vector<8x128xf32>
    %249 = arith.subf %234, %248 : vector<8x128xf32>
    %cst_69 = arith.constant 9.99999974E-6 : f32
    %250 = vector.broadcast %cst_69 : f32 to vector<8x1xf32>
    %251 = arith.addf %247, %250 : vector<8x1xf32>
    %252 = math.rsqrt %251 : vector<8x1xf32>
    %253 = vector.broadcast %252 : vector<8x1xf32> to vector<8x128xf32>
    %254 = arith.mulf %249, %253 : vector<8x128xf32>
    %255 = vector.broadcast %235 : vector<1x128xf32> to vector<8x128xf32>
    %256 = arith.mulf %254, %255 : vector<8x128xf32>
    %257 = vector.broadcast %236 : vector<1x128xf32> to vector<8x128xf32>
    %258 = arith.addf %256, %257 : vector<8x128xf32>
    %259 = arith.truncf %258 : vector<8x128xf32> to vector<8x128xbf16>
    %cst_70 = arith.constant dense<0.000000e+00> : vector<8x128xf32>
    %260 = tpu.matmul %259, %162, %cst_70 {dimension_numbers = #tpu.dot_dimension_numbers<[1], [0], [0], [1], [0, 0, 1, 1], [], []>} : vector<8x128xbf16>, vector<128x128xbf16>, vector<8x128xf32> -> vector<8x128xf32>
    %261 = vector.extract_strided_slice %166 {offsets = [4, 0], sizes = [1, 128], strides = [1, 1]} : vector<8x128xf32> to vector<1x128xf32>
    %262 = vector.broadcast %261 : vector<1x128xf32> to vector<8x128xf32>
    %263 = arith.addf %260, %262 : vector<8x128xf32>
    %264 = arith.mulf %263, %263 : vector<8x128xf32>
    %265 = arith.mulf %263, %264 : vector<8x128xf32>
    %cst_71 = arith.constant 4.471500e-02 : f32
    %266 = vector.broadcast %cst_71 : f32 to vector<8x128xf32>
    %267 = arith.mulf %266, %265 : vector<8x128xf32>
    %268 = arith.addf %263, %267 : vector<8x128xf32>
    %cst_72 = arith.constant 0.797884583 : f32
    %269 = vector.broadcast %cst_72 : f32 to vector<8x128xf32>
    %270 = arith.mulf %269, %268 : vector<8x128xf32>
    %271 = math.tanh %270 : vector<8x128xf32>
    %cst_73 = arith.constant 1.000000e+00 : f32
    %272 = vector.broadcast %cst_73 : f32 to vector<8x128xf32>
    %273 = arith.addf %272, %271 : vector<8x128xf32>
    %cst_74 = arith.constant 5.000000e-01 : f32
    %274 = vector.broadcast %cst_74 : f32 to vector<8x128xf32>
    %275 = arith.mulf %274, %273 : vector<8x128xf32>
    %276 = arith.mulf %263, %275 : vector<8x128xf32>
    %277 = arith.truncf %276 : vector<8x128xf32> to vector<8x128xbf16>
    %cst_75 = arith.constant dense<0.000000e+00> : vector<8x128xf32>
    %278 = tpu.matmul %277, %164, %cst_75 {dimension_numbers = #tpu.dot_dimension_numbers<[1], [0], [0], [1], [0, 0, 1, 1], [], []>} : vector<8x128xbf16>, vector<128x128xbf16>, vector<8x128xf32> -> vector<8x128xf32>
    %279 = vector.extract_strided_slice %166 {offsets = [5, 0], sizes = [1, 128], strides = [1, 1]} : vector<8x128xf32> to vector<1x128xf32>
    %280 = vector.broadcast %279 : vector<1x128xf32> to vector<8x128xf32>
    %281 = arith.addf %278, %280 : vector<8x128xf32>
    %282 = arith.addf %258, %281 : vector<8x128xf32>
    %283 = vector.extract_strided_slice %166 {offsets = [6, 0], sizes = [1, 128], strides = [1, 1]} : vector<8x128xf32> to vector<1x128xf32>
    %284 = vector.extract_strided_slice %166 {offsets = [7, 0], sizes = [1, 128], strides = [1, 1]} : vector<8x128xf32> to vector<1x128xf32>
    %cst_76 = arith.constant dense<0.000000e+00> : vector<8xf32>
    %285 = vector.multi_reduction <add>, %282, %cst_76 [1] : vector<8x128xf32> to vector<8xf32>
    %286 = vector.shape_cast %285 : vector<8xf32> to vector<8x1xf32>
    %cst_77 = arith.constant 3.125000e-02 : f32
    %287 = vector.broadcast %cst_77 : f32 to vector<8x1xf32>
    %288 = arith.mulf %286, %287 : vector<8x1xf32>
    %289 = arith.mulf %282, %282 : vector<8x128xf32>
    %cst_78 = arith.constant dense<0.000000e+00> : vector<8xf32>
    %290 = vector.multi_reduction <add>, %289, %cst_78 [1] : vector<8x128xf32> to vector<8xf32>
    %291 = vector.shape_cast %290 : vector<8xf32> to vector<8x1xf32>
    %cst_79 = arith.constant 3.125000e-02 : f32
    %292 = vector.broadcast %cst_79 : f32 to vector<8x1xf32>
    %293 = arith.mulf %291, %292 : vector<8x1xf32>
    %294 = arith.mulf %288, %288 : vector<8x1xf32>
    %295 = arith.subf %293, %294 : vector<8x1xf32>
    %296 = vector.broadcast %288 : vector<8x1xf32> to vector<8x128xf32>
    %297 = arith.subf %282, %296 : vector<8x128xf32>
    %cst_80 = arith.constant 9.99999974E-6 : f32
    %298 = vector.broadcast %cst_80 : f32 to vector<8x1xf32>
    %299 = arith.addf %295, %298 : vector<8x1xf32>
    %300 = math.rsqrt %299 : vector<8x1xf32>
    %301 = vector.broadcast %300 : vector<8x1xf32> to vector<8x128xf32>
    %302 = arith.mulf %297, %301 : vector<8x128xf32>
    %303 = vector.broadcast %283 : vector<1x128xf32> to vector<8x128xf32>
    %304 = arith.mulf %302, %303 : vector<8x128xf32>
    %305 = vector.broadcast %284 : vector<1x128xf32> to vector<8x128xf32>
    %306 = arith.addf %304, %305 : vector<8x128xf32>
    %c0_81 = arith.constant 0 : index
    %c0_82 = arith.constant 0 : index
    %307 = vector.load %arg20[%c0_81, %c0_82] : memref<5x128xf32, #tpu.memory_space<vmem>>, vector<5x128xf32>
    %308 = vector.extract_strided_slice %307 {offsets = [0, 0], sizes = [1, 128], strides = [1, 1]} : vector<5x128xf32> to vector<1x128xf32>
    %309 = vector.extract_strided_slice %307 {offsets = [1, 0], sizes = [1, 128], strides = [1, 1]} : vector<5x128xf32> to vector<1x128xf32>
    %cst_83 = arith.constant dense<0.000000e+00> : vector<8xf32>
    %310 = vector.multi_reduction <add>, %306, %cst_83 [1] : vector<8x128xf32> to vector<8xf32>
    %311 = vector.shape_cast %310 : vector<8xf32> to vector<8x1xf32>
    %cst_84 = arith.constant 3.125000e-02 : f32
    %312 = vector.broadcast %cst_84 : f32 to vector<8x1xf32>
    %313 = arith.mulf %311, %312 : vector<8x1xf32>
    %314 = arith.mulf %306, %306 : vector<8x128xf32>
    %cst_85 = arith.constant dense<0.000000e+00> : vector<8xf32>
    %315 = vector.multi_reduction <add>, %314, %cst_85 [1] : vector<8x128xf32> to vector<8xf32>
    %316 = vector.shape_cast %315 : vector<8xf32> to vector<8x1xf32>
    %cst_86 = arith.constant 3.125000e-02 : f32
    %317 = vector.broadcast %cst_86 : f32 to vector<8x1xf32>
    %318 = arith.mulf %316, %317 : vector<8x1xf32>
    %319 = arith.mulf %313, %313 : vector<8x1xf32>
    %320 = arith.subf %318, %319 : vector<8x1xf32>
    %321 = vector.broadcast %313 : vector<8x1xf32> to vector<8x128xf32>
    %322 = arith.subf %306, %321 : vector<8x128xf32>
    %cst_87 = arith.constant 9.99999974E-6 : f32
    %323 = vector.broadcast %cst_87 : f32 to vector<8x1xf32>
    %324 = arith.addf %320, %323 : vector<8x1xf32>
    %325 = math.rsqrt %324 : vector<8x1xf32>
    %326 = vector.broadcast %325 : vector<8x1xf32> to vector<8x128xf32>
    %327 = arith.mulf %322, %326 : vector<8x128xf32>
    %328 = vector.broadcast %308 : vector<1x128xf32> to vector<8x128xf32>
    %329 = arith.mulf %327, %328 : vector<8x128xf32>
    %330 = vector.broadcast %309 : vector<1x128xf32> to vector<8x128xf32>
    %331 = arith.addf %329, %330 : vector<8x128xf32>
    %c0_88 = arith.constant 0 : index
    %c0_89 = arith.constant 0 : index
    %c0_90 = arith.constant 0 : index
    %332 = vector.load %arg2[%c0_88, %c0_89, %c0_90] : memref<1x8x32xf32, #tpu.memory_space<vmem>>, vector<1x8x32xf32>
    %333 = vector.shape_cast %332 : vector<1x8x32xf32> to vector<8x32xf32>
    %334 = arith.truncf %333 : vector<8x32xf32> to vector<8x32xbf16>
    %c0_91 = arith.constant 0 : index
    %c0_92 = arith.constant 0 : index
    %335 = vector.load %arg6[%c0_91, %c0_92] : memref<32x128xbf16, #tpu.memory_space<vmem>>, vector<32x128xbf16>
    %cst_93 = arith.constant dense<0.000000e+00> : vector<8x128xf32>
    %336 = tpu.matmul %334, %335, %cst_93 {dimension_numbers = #tpu.dot_dimension_numbers<[1], [0], [0], [1], [0, 0, 1, 1], [], []>} : vector<8x32xbf16>, vector<32x128xbf16>, vector<8x128xf32> -> vector<8x128xf32>
    %c0_94 = arith.constant 0 : index
    %c0_95 = arith.constant 0 : index
    %337 = vector.load %arg4[%c0_94, %c0_95] : memref<8x128xf32, #tpu.memory_space<vmem>>, vector<8x128xf32>
    %338 = arith.addf %336, %337 : vector<8x128xf32>
    %c0_96 = arith.constant 0 : index
    %c0_97 = arith.constant 0 : index
    %c0_98 = arith.constant 0 : index
    %339 = vector.load %arg12[%c0_96, %c0_97, %c0_98] : memref<1x128x96xbf16, #tpu.memory_space<vmem>>, vector<1x128x96xbf16>
    %340 = vector.shape_cast %339 : vector<1x128x96xbf16> to vector<128x96xbf16>
    %c0_99 = arith.constant 0 : index
    %c0_100 = arith.constant 0 : index
    %c0_101 = arith.constant 0 : index
    %341 = vector.load %arg13[%c0_99, %c0_100, %c0_101] : memref<1x32x128xbf16, #tpu.memory_space<vmem>>, vector<1x32x128xbf16>
    %342 = vector.shape_cast %341 : vector<1x32x128xbf16> to vector<32x128xbf16>
    %c0_102 = arith.constant 0 : index
    %c0_103 = arith.constant 0 : index
    %c0_104 = arith.constant 0 : index
    %343 = vector.load %arg14[%c0_102, %c0_103, %c0_104] : memref<1x128x32xbf16, #tpu.memory_space<vmem>>, vector<1x128x32xbf16>
    %344 = vector.shape_cast %343 : vector<1x128x32xbf16> to vector<128x32xbf16>
    %c0_105 = arith.constant 0 : index
    %c0_106 = arith.constant 0 : index
    %c0_107 = arith.constant 0 : index
    %345 = vector.load %arg15[%c0_105, %c0_106, %c0_107] : memref<1x128x64xbf16, #tpu.memory_space<vmem>>, vector<1x128x64xbf16>
    %346 = vector.shape_cast %345 : vector<1x128x64xbf16> to vector<128x64xbf16>
    %c0_108 = arith.constant 0 : index
    %c0_109 = arith.constant 0 : index
    %c0_110 = arith.constant 0 : index
    %347 = vector.load %arg16[%c0_108, %c0_109, %c0_110] : memref<1x32x128xbf16, #tpu.memory_space<vmem>>, vector<1x32x128xbf16>
    %348 = vector.shape_cast %347 : vector<1x32x128xbf16> to vector<32x128xbf16>
    %c0_111 = arith.constant 0 : index
    %c0_112 = arith.constant 0 : index
    %c0_113 = arith.constant 0 : index
    %349 = vector.load %arg17[%c0_111, %c0_112, %c0_113] : memref<1x128x128xbf16, #tpu.memory_space<vmem>>, vector<1x128x128xbf16>
    %350 = vector.shape_cast %349 : vector<1x128x128xbf16> to vector<128x128xbf16>
    %c0_114 = arith.constant 0 : index
    %c0_115 = arith.constant 0 : index
    %c0_116 = arith.constant 0 : index
    %351 = vector.load %arg18[%c0_114, %c0_115, %c0_116] : memref<1x128x128xbf16, #tpu.memory_space<vmem>>, vector<1x128x128xbf16>
    %352 = vector.shape_cast %351 : vector<1x128x128xbf16> to vector<128x128xbf16>
    %c0_117 = arith.constant 0 : index
    %c0_118 = arith.constant 0 : index
    %c0_119 = arith.constant 0 : index
    %353 = vector.load %arg19[%c0_117, %c0_118, %c0_119] : memref<1x13x128xf32, #tpu.memory_space<vmem>>, vector<1x13x128xf32>
    %354 = vector.shape_cast %353 : vector<1x13x128xf32> to vector<13x128xf32>
    %355 = arith.truncf %338 : vector<8x128xf32> to vector<8x128xbf16>
    %cst_120 = arith.constant dense<0.000000e+00> : vector<8x96xf32>
    %356 = tpu.matmul %355, %340, %cst_120 {dimension_numbers = #tpu.dot_dimension_numbers<[1], [0], [0], [1], [0, 0, 1, 1], [], []>} : vector<8x128xbf16>, vector<128x96xbf16>, vector<8x96xf32> -> vector<8x96xf32>
    %357 = vector.extract_strided_slice %354 {offsets = [0, 0], sizes = [1, 96], strides = [1, 1]} : vector<13x128xf32> to vector<1x96xf32>
    %358 = vector.broadcast %357 : vector<1x96xf32> to vector<8x96xf32>
    %359 = arith.addf %356, %358 : vector<8x96xf32>
    %360 = vector.extract_strided_slice %359 {offsets = [0, 0], sizes = [8, 32], strides = [1, 1]} : vector<8x96xf32> to vector<8x32xf32>
    %361 = vector.extract_strided_slice %359 {offsets = [0, 32], sizes = [8, 32], strides = [1, 1]} : vector<8x96xf32> to vector<8x32xf32>
    %362 = vector.extract_strided_slice %359 {offsets = [0, 64], sizes = [8, 32], strides = [1, 1]} : vector<8x96xf32> to vector<8x32xf32>
    %363 = vector.extract_strided_slice %354 {offsets = [1, 0], sizes = [1, 128], strides = [1, 1]} : vector<13x128xf32> to vector<1x128xf32>
    %364 = arith.truncf %360 : vector<8x32xf32> to vector<8x32xbf16>
    %365 = vector.extract_strided_slice %364 {offsets = [0, 0], sizes = [8, 8], strides = [1, 1]} : vector<8x32xbf16> to vector<8x8xbf16>
    %366 = vector.extract_strided_slice %364 {offsets = [0, 8], sizes = [8, 8], strides = [1, 1]} : vector<8x32xbf16> to vector<8x8xbf16>
    %367 = vector.extract_strided_slice %364 {offsets = [0, 16], sizes = [8, 8], strides = [1, 1]} : vector<8x32xbf16> to vector<8x8xbf16>
    %368 = vector.extract_strided_slice %364 {offsets = [0, 24], sizes = [8, 8], strides = [1, 1]} : vector<8x32xbf16> to vector<8x8xbf16>
    %369 = vector.shape_cast %365 : vector<8x8xbf16> to vector<1x8x8xbf16>
    %370 = vector.shape_cast %366 : vector<8x8xbf16> to vector<1x8x8xbf16>
    %371 = vector.shape_cast %367 : vector<8x8xbf16> to vector<1x8x8xbf16>
    %372 = vector.shape_cast %368 : vector<8x8xbf16> to vector<1x8x8xbf16>
    %373 = tpu.concatenate %369, %370, %371, %372 in 0 : vector<1x8x8xbf16>, vector<1x8x8xbf16>, vector<1x8x8xbf16>, vector<1x8x8xbf16> -> vector<4x8x8xbf16>
    %374 = arith.truncf %361 : vector<8x32xf32> to vector<8x32xbf16>
    %375 = vector.extract_strided_slice %374 {offsets = [0, 0], sizes = [8, 8], strides = [1, 1]} : vector<8x32xbf16> to vector<8x8xbf16>
    %376 = vector.extract_strided_slice %374 {offsets = [0, 8], sizes = [8, 8], strides = [1, 1]} : vector<8x32xbf16> to vector<8x8xbf16>
    %377 = vector.extract_strided_slice %374 {offsets = [0, 16], sizes = [8, 8], strides = [1, 1]} : vector<8x32xbf16> to vector<8x8xbf16>
    %378 = vector.extract_strided_slice %374 {offsets = [0, 24], sizes = [8, 8], strides = [1, 1]} : vector<8x32xbf16> to vector<8x8xbf16>
    %379 = vector.shape_cast %375 : vector<8x8xbf16> to vector<1x8x8xbf16>
    %380 = vector.shape_cast %376 : vector<8x8xbf16> to vector<1x8x8xbf16>
    %381 = vector.shape_cast %377 : vector<8x8xbf16> to vector<1x8x8xbf16>
    %382 = vector.shape_cast %378 : vector<8x8xbf16> to vector<1x8x8xbf16>
    %383 = tpu.concatenate %379, %380, %381, %382 in 0 : vector<1x8x8xbf16>, vector<1x8x8xbf16>, vector<1x8x8xbf16>, vector<1x8x8xbf16> -> vector<4x8x8xbf16>
    %384 = arith.truncf %362 : vector<8x32xf32> to vector<8x32xbf16>
    %385 = vector.extract_strided_slice %384 {offsets = [0, 0], sizes = [8, 8], strides = [1, 1]} : vector<8x32xbf16> to vector<8x8xbf16>
    %386 = vector.extract_strided_slice %384 {offsets = [0, 8], sizes = [8, 8], strides = [1, 1]} : vector<8x32xbf16> to vector<8x8xbf16>
    %387 = vector.extract_strided_slice %384 {offsets = [0, 16], sizes = [8, 8], strides = [1, 1]} : vector<8x32xbf16> to vector<8x8xbf16>
    %388 = vector.extract_strided_slice %384 {offsets = [0, 24], sizes = [8, 8], strides = [1, 1]} : vector<8x32xbf16> to vector<8x8xbf16>
    %389 = vector.shape_cast %385 : vector<8x8xbf16> to vector<1x8x8xbf16>
    %390 = vector.shape_cast %386 : vector<8x8xbf16> to vector<1x8x8xbf16>
    %391 = vector.shape_cast %387 : vector<8x8xbf16> to vector<1x8x8xbf16>
    %392 = vector.shape_cast %388 : vector<8x8xbf16> to vector<1x8x8xbf16>
    %393 = tpu.concatenate %389, %390, %391, %392 in 0 : vector<1x8x8xbf16>, vector<1x8x8xbf16>, vector<1x8x8xbf16>, vector<1x8x8xbf16> -> vector<4x8x8xbf16>
    "tpu.trace_start"() <{level = 10 : i32, message = "hqe,hke->hqk"}> : () -> ()
    %cst_121 = arith.constant dense<0.000000e+00> : vector<4x8x8xf32>
    %394 = tpu.matmul %373, %383, %cst_121 {dimension_numbers = #tpu.dot_dimension_numbers<[2], [2], [1], [1], [0, 0, 0, 1, 1, 1], [0], [0]>} : vector<4x8x8xbf16>, vector<4x8x8xbf16>, vector<4x8x8xf32> -> vector<4x8x8xf32>
    "tpu.trace_stop"() : () -> ()
    %cst_122 = arith.constant 0.353553385 : f32
    %395 = vector.broadcast %cst_122 : f32 to vector<4x8x8xf32>
    %396 = arith.mulf %394, %395 : vector<4x8x8xf32>
    %cst_123 = arith.constant dense<0xFF800000> : vector<4x8xf32>
    %397 = vector.multi_reduction <maximumf>, %396, %cst_123 [2] : vector<4x8x8xf32> to vector<4x8xf32>
    %398 = vector.shape_cast %397 : vector<4x8xf32> to vector<4x8x1xf32>
    %399 = vector.broadcast %398 : vector<4x8x1xf32> to vector<4x8x8xf32>
    %400 = arith.subf %396, %399 : vector<4x8x8xf32>
    %401 = math.exp %400 : vector<4x8x8xf32>
    %cst_124 = arith.constant dense<0.000000e+00> : vector<4x8xf32>
    %402 = vector.multi_reduction <add>, %401, %cst_124 [2] : vector<4x8x8xf32> to vector<4x8xf32>
    %403 = vector.shape_cast %402 : vector<4x8xf32> to vector<4x8x1xf32>
    %404 = tpu.reciprocal %403 {approx = true} : vector<4x8x1xf32> -> vector<4x8x1xf32>
    %405 = vector.broadcast %404 : vector<4x8x1xf32> to vector<4x8x8xf32>
    %406 = arith.mulf %401, %405 : vector<4x8x8xf32>
    %407 = arith.truncf %406 : vector<4x8x8xf32> to vector<4x8x8xbf16>
    "tpu.trace_start"() <{level = 10 : i32, message = "hqk,hke->hqe"}> : () -> ()
    %cst_125 = arith.constant dense<0.000000e+00> : vector<4x8x8xf32>
    %408 = tpu.matmul %407, %393, %cst_125 {dimension_numbers = #tpu.dot_dimension_numbers<[2], [1], [1], [2], [0, 0, 0, 1, 1, 2], [0], [0]>} : vector<4x8x8xbf16>, vector<4x8x8xbf16>, vector<4x8x8xf32> -> vector<4x8x8xf32>
    "tpu.trace_stop"() : () -> ()
    %409 = vector.extract_strided_slice %408 {offsets = [0, 0, 0], sizes = [1, 8, 8], strides = [1, 1, 1]} : vector<4x8x8xf32> to vector<1x8x8xf32>
    %410 = vector.shape_cast %409 : vector<1x8x8xf32> to vector<8x8xf32>
    %411 = vector.extract_strided_slice %408 {offsets = [1, 0, 0], sizes = [1, 8, 8], strides = [1, 1, 1]} : vector<4x8x8xf32> to vector<1x8x8xf32>
    %412 = vector.shape_cast %411 : vector<1x8x8xf32> to vector<8x8xf32>
    %413 = vector.extract_strided_slice %408 {offsets = [2, 0, 0], sizes = [1, 8, 8], strides = [1, 1, 1]} : vector<4x8x8xf32> to vector<1x8x8xf32>
    %414 = vector.shape_cast %413 : vector<1x8x8xf32> to vector<8x8xf32>
    %415 = vector.extract_strided_slice %408 {offsets = [3, 0, 0], sizes = [1, 8, 8], strides = [1, 1, 1]} : vector<4x8x8xf32> to vector<1x8x8xf32>
    %416 = vector.shape_cast %415 : vector<1x8x8xf32> to vector<8x8xf32>
    %417 = tpu.concatenate %410, %412, %414, %416 in 1 : vector<8x8xf32>, vector<8x8xf32>, vector<8x8xf32>, vector<8x8xf32> -> vector<8x32xf32>
    %418 = arith.truncf %417 : vector<8x32xf32> to vector<8x32xbf16>
    %cst_126 = arith.constant dense<0.000000e+00> : vector<8x128xf32>
    %419 = tpu.matmul %418, %342, %cst_126 {dimension_numbers = #tpu.dot_dimension_numbers<[1], [0], [0], [1], [0, 0, 1, 1], [], []>} : vector<8x32xbf16>, vector<32x128xbf16>, vector<8x128xf32> -> vector<8x128xf32>
    %420 = vector.broadcast %363 : vector<1x128xf32> to vector<8x128xf32>
    %421 = arith.addf %419, %420 : vector<8x128xf32>
    %422 = arith.addf %338, %421 : vector<8x128xf32>
    %423 = vector.extract_strided_slice %354 {offsets = [2, 0], sizes = [1, 128], strides = [1, 1]} : vector<13x128xf32> to vector<1x128xf32>
    %424 = vector.extract_strided_slice %354 {offsets = [3, 0], sizes = [1, 128], strides = [1, 1]} : vector<13x128xf32> to vector<1x128xf32>
    %cst_127 = arith.constant dense<0.000000e+00> : vector<8xf32>
    %425 = vector.multi_reduction <add>, %422, %cst_127 [1] : vector<8x128xf32> to vector<8xf32>
    %426 = vector.shape_cast %425 : vector<8xf32> to vector<8x1xf32>
    %cst_128 = arith.constant 3.125000e-02 : f32
    %427 = vector.broadcast %cst_128 : f32 to vector<8x1xf32>
    %428 = arith.mulf %426, %427 : vector<8x1xf32>
    %429 = arith.mulf %422, %422 : vector<8x128xf32>
    %cst_129 = arith.constant dense<0.000000e+00> : vector<8xf32>
    %430 = vector.multi_reduction <add>, %429, %cst_129 [1] : vector<8x128xf32> to vector<8xf32>
    %431 = vector.shape_cast %430 : vector<8xf32> to vector<8x1xf32>
    %cst_130 = arith.constant 3.125000e-02 : f32
    %432 = vector.broadcast %cst_130 : f32 to vector<8x1xf32>
    %433 = arith.mulf %431, %432 : vector<8x1xf32>
    %434 = arith.mulf %428, %428 : vector<8x1xf32>
    %435 = arith.subf %433, %434 : vector<8x1xf32>
    %436 = vector.broadcast %428 : vector<8x1xf32> to vector<8x128xf32>
    %437 = arith.subf %422, %436 : vector<8x128xf32>
    %cst_131 = arith.constant 9.99999974E-6 : f32
    %438 = vector.broadcast %cst_131 : f32 to vector<8x1xf32>
    %439 = arith.addf %435, %438 : vector<8x1xf32>
    %440 = math.rsqrt %439 : vector<8x1xf32>
    %441 = vector.broadcast %440 : vector<8x1xf32> to vector<8x128xf32>
    %442 = arith.mulf %437, %441 : vector<8x128xf32>
    %443 = vector.broadcast %423 : vector<1x128xf32> to vector<8x128xf32>
    %444 = arith.mulf %442, %443 : vector<8x128xf32>
    %445 = vector.broadcast %424 : vector<1x128xf32> to vector<8x128xf32>
    %446 = arith.addf %444, %445 : vector<8x128xf32>
    %447 = arith.truncf %446 : vector<8x128xf32> to vector<8x128xbf16>
    %cst_132 = arith.constant dense<0.000000e+00> : vector<8x32xf32>
    %448 = tpu.matmul %447, %344, %cst_132 {dimension_numbers = #tpu.dot_dimension_numbers<[1], [0], [0], [1], [0, 0, 1, 1], [], []>} : vector<8x128xbf16>, vector<128x32xbf16>, vector<8x32xf32> -> vector<8x32xf32>
    %449 = vector.extract_strided_slice %354 {offsets = [4, 0], sizes = [1, 32], strides = [1, 1]} : vector<13x128xf32> to vector<1x32xf32>
    %450 = vector.broadcast %449 : vector<1x32xf32> to vector<8x32xf32>
    %451 = arith.addf %448, %450 : vector<8x32xf32>
    %452 = arith.truncf %331 : vector<8x128xf32> to vector<8x128xbf16>
    %cst_133 = arith.constant dense<0.000000e+00> : vector<8x64xf32>
    %453 = tpu.matmul %452, %346, %cst_133 {dimension_numbers = #tpu.dot_dimension_numbers<[1], [0], [0], [1], [0, 0, 1, 1], [], []>} : vector<8x128xbf16>, vector<128x64xbf16>, vector<8x64xf32> -> vector<8x64xf32>
    %454 = vector.extract_strided_slice %354 {offsets = [5, 0], sizes = [1, 64], strides = [1, 1]} : vector<13x128xf32> to vector<1x64xf32>
    %455 = vector.broadcast %454 : vector<1x64xf32> to vector<8x64xf32>
    %456 = arith.addf %453, %455 : vector<8x64xf32>
    %457 = vector.extract_strided_slice %456 {offsets = [0, 0], sizes = [8, 32], strides = [1, 1]} : vector<8x64xf32> to vector<8x32xf32>
    %458 = vector.extract_strided_slice %456 {offsets = [0, 32], sizes = [8, 32], strides = [1, 1]} : vector<8x64xf32> to vector<8x32xf32>
    %459 = vector.extract_strided_slice %354 {offsets = [6, 0], sizes = [1, 128], strides = [1, 1]} : vector<13x128xf32> to vector<1x128xf32>
    %460 = arith.truncf %451 : vector<8x32xf32> to vector<8x32xbf16>
    %461 = vector.extract_strided_slice %460 {offsets = [0, 0], sizes = [8, 8], strides = [1, 1]} : vector<8x32xbf16> to vector<8x8xbf16>
    %462 = vector.extract_strided_slice %460 {offsets = [0, 8], sizes = [8, 8], strides = [1, 1]} : vector<8x32xbf16> to vector<8x8xbf16>
    %463 = vector.extract_strided_slice %460 {offsets = [0, 16], sizes = [8, 8], strides = [1, 1]} : vector<8x32xbf16> to vector<8x8xbf16>
    %464 = vector.extract_strided_slice %460 {offsets = [0, 24], sizes = [8, 8], strides = [1, 1]} : vector<8x32xbf16> to vector<8x8xbf16>
    %465 = vector.shape_cast %461 : vector<8x8xbf16> to vector<1x8x8xbf16>
    %466 = vector.shape_cast %462 : vector<8x8xbf16> to vector<1x8x8xbf16>
    %467 = vector.shape_cast %463 : vector<8x8xbf16> to vector<1x8x8xbf16>
    %468 = vector.shape_cast %464 : vector<8x8xbf16> to vector<1x8x8xbf16>
    %469 = tpu.concatenate %465, %466, %467, %468 in 0 : vector<1x8x8xbf16>, vector<1x8x8xbf16>, vector<1x8x8xbf16>, vector<1x8x8xbf16> -> vector<4x8x8xbf16>
    %470 = arith.truncf %457 : vector<8x32xf32> to vector<8x32xbf16>
    %471 = vector.extract_strided_slice %470 {offsets = [0, 0], sizes = [8, 8], strides = [1, 1]} : vector<8x32xbf16> to vector<8x8xbf16>
    %472 = vector.extract_strided_slice %470 {offsets = [0, 8], sizes = [8, 8], strides = [1, 1]} : vector<8x32xbf16> to vector<8x8xbf16>
    %473 = vector.extract_strided_slice %470 {offsets = [0, 16], sizes = [8, 8], strides = [1, 1]} : vector<8x32xbf16> to vector<8x8xbf16>
    %474 = vector.extract_strided_slice %470 {offsets = [0, 24], sizes = [8, 8], strides = [1, 1]} : vector<8x32xbf16> to vector<8x8xbf16>
    %475 = vector.shape_cast %471 : vector<8x8xbf16> to vector<1x8x8xbf16>
    %476 = vector.shape_cast %472 : vector<8x8xbf16> to vector<1x8x8xbf16>
    %477 = vector.shape_cast %473 : vector<8x8xbf16> to vector<1x8x8xbf16>
    %478 = vector.shape_cast %474 : vector<8x8xbf16> to vector<1x8x8xbf16>
    %479 = tpu.concatenate %475, %476, %477, %478 in 0 : vector<1x8x8xbf16>, vector<1x8x8xbf16>, vector<1x8x8xbf16>, vector<1x8x8xbf16> -> vector<4x8x8xbf16>
    %480 = arith.truncf %458 : vector<8x32xf32> to vector<8x32xbf16>
    %481 = vector.extract_strided_slice %480 {offsets = [0, 0], sizes = [8, 8], strides = [1, 1]} : vector<8x32xbf16> to vector<8x8xbf16>
    %482 = vector.extract_strided_slice %480 {offsets = [0, 8], sizes = [8, 8], strides = [1, 1]} : vector<8x32xbf16> to vector<8x8xbf16>
    %483 = vector.extract_strided_slice %480 {offsets = [0, 16], sizes = [8, 8], strides = [1, 1]} : vector<8x32xbf16> to vector<8x8xbf16>
    %484 = vector.extract_strided_slice %480 {offsets = [0, 24], sizes = [8, 8], strides = [1, 1]} : vector<8x32xbf16> to vector<8x8xbf16>
    %485 = vector.shape_cast %481 : vector<8x8xbf16> to vector<1x8x8xbf16>
    %486 = vector.shape_cast %482 : vector<8x8xbf16> to vector<1x8x8xbf16>
    %487 = vector.shape_cast %483 : vector<8x8xbf16> to vector<1x8x8xbf16>
    %488 = vector.shape_cast %484 : vector<8x8xbf16> to vector<1x8x8xbf16>
    %489 = tpu.concatenate %485, %486, %487, %488 in 0 : vector<1x8x8xbf16>, vector<1x8x8xbf16>, vector<1x8x8xbf16>, vector<1x8x8xbf16> -> vector<4x8x8xbf16>
    "tpu.trace_start"() <{level = 10 : i32, message = "hqe,hke->hqk"}> : () -> ()
    %cst_134 = arith.constant dense<0.000000e+00> : vector<4x8x8xf32>
    %490 = tpu.matmul %469, %479, %cst_134 {dimension_numbers = #tpu.dot_dimension_numbers<[2], [2], [1], [1], [0, 0, 0, 1, 1, 1], [0], [0]>} : vector<4x8x8xbf16>, vector<4x8x8xbf16>, vector<4x8x8xf32> -> vector<4x8x8xf32>
    "tpu.trace_stop"() : () -> ()
    %cst_135 = arith.constant 0.353553385 : f32
    %491 = vector.broadcast %cst_135 : f32 to vector<4x8x8xf32>
    %492 = arith.mulf %490, %491 : vector<4x8x8xf32>
    %cst_136 = arith.constant dense<0xFF800000> : vector<4x8xf32>
    %493 = vector.multi_reduction <maximumf>, %492, %cst_136 [2] : vector<4x8x8xf32> to vector<4x8xf32>
    %494 = vector.shape_cast %493 : vector<4x8xf32> to vector<4x8x1xf32>
    %495 = vector.broadcast %494 : vector<4x8x1xf32> to vector<4x8x8xf32>
    %496 = arith.subf %492, %495 : vector<4x8x8xf32>
    %497 = math.exp %496 : vector<4x8x8xf32>
    %cst_137 = arith.constant dense<0.000000e+00> : vector<4x8xf32>
    %498 = vector.multi_reduction <add>, %497, %cst_137 [2] : vector<4x8x8xf32> to vector<4x8xf32>
    %499 = vector.shape_cast %498 : vector<4x8xf32> to vector<4x8x1xf32>
    %500 = tpu.reciprocal %499 {approx = true} : vector<4x8x1xf32> -> vector<4x8x1xf32>
    %501 = vector.broadcast %500 : vector<4x8x1xf32> to vector<4x8x8xf32>
    %502 = arith.mulf %497, %501 : vector<4x8x8xf32>
    %503 = arith.truncf %502 : vector<4x8x8xf32> to vector<4x8x8xbf16>
    "tpu.trace_start"() <{level = 10 : i32, message = "hqk,hke->hqe"}> : () -> ()
    %cst_138 = arith.constant dense<0.000000e+00> : vector<4x8x8xf32>
    %504 = tpu.matmul %503, %489, %cst_138 {dimension_numbers = #tpu.dot_dimension_numbers<[2], [1], [1], [2], [0, 0, 0, 1, 1, 2], [0], [0]>} : vector<4x8x8xbf16>, vector<4x8x8xbf16>, vector<4x8x8xf32> -> vector<4x8x8xf32>
    "tpu.trace_stop"() : () -> ()
    %505 = vector.extract_strided_slice %504 {offsets = [0, 0, 0], sizes = [1, 8, 8], strides = [1, 1, 1]} : vector<4x8x8xf32> to vector<1x8x8xf32>
    %506 = vector.shape_cast %505 : vector<1x8x8xf32> to vector<8x8xf32>
    %507 = vector.extract_strided_slice %504 {offsets = [1, 0, 0], sizes = [1, 8, 8], strides = [1, 1, 1]} : vector<4x8x8xf32> to vector<1x8x8xf32>
    %508 = vector.shape_cast %507 : vector<1x8x8xf32> to vector<8x8xf32>
    %509 = vector.extract_strided_slice %504 {offsets = [2, 0, 0], sizes = [1, 8, 8], strides = [1, 1, 1]} : vector<4x8x8xf32> to vector<1x8x8xf32>
    %510 = vector.shape_cast %509 : vector<1x8x8xf32> to vector<8x8xf32>
    %511 = vector.extract_strided_slice %504 {offsets = [3, 0, 0], sizes = [1, 8, 8], strides = [1, 1, 1]} : vector<4x8x8xf32> to vector<1x8x8xf32>
    %512 = vector.shape_cast %511 : vector<1x8x8xf32> to vector<8x8xf32>
    %513 = tpu.concatenate %506, %508, %510, %512 in 1 : vector<8x8xf32>, vector<8x8xf32>, vector<8x8xf32>, vector<8x8xf32> -> vector<8x32xf32>
    %514 = arith.truncf %513 : vector<8x32xf32> to vector<8x32xbf16>
    %cst_139 = arith.constant dense<0.000000e+00> : vector<8x128xf32>
    %515 = tpu.matmul %514, %348, %cst_139 {dimension_numbers = #tpu.dot_dimension_numbers<[1], [0], [0], [1], [0, 0, 1, 1], [], []>} : vector<8x32xbf16>, vector<32x128xbf16>, vector<8x128xf32> -> vector<8x128xf32>
    %516 = vector.broadcast %459 : vector<1x128xf32> to vector<8x128xf32>
    %517 = arith.addf %515, %516 : vector<8x128xf32>
    %518 = arith.addf %446, %517 : vector<8x128xf32>
    %519 = vector.extract_strided_slice %354 {offsets = [7, 0], sizes = [1, 128], strides = [1, 1]} : vector<13x128xf32> to vector<1x128xf32>
    %520 = vector.extract_strided_slice %354 {offsets = [8, 0], sizes = [1, 128], strides = [1, 1]} : vector<13x128xf32> to vector<1x128xf32>
    %cst_140 = arith.constant dense<0.000000e+00> : vector<8xf32>
    %521 = vector.multi_reduction <add>, %518, %cst_140 [1] : vector<8x128xf32> to vector<8xf32>
    %522 = vector.shape_cast %521 : vector<8xf32> to vector<8x1xf32>
    %cst_141 = arith.constant 3.125000e-02 : f32
    %523 = vector.broadcast %cst_141 : f32 to vector<8x1xf32>
    %524 = arith.mulf %522, %523 : vector<8x1xf32>
    %525 = arith.mulf %518, %518 : vector<8x128xf32>
    %cst_142 = arith.constant dense<0.000000e+00> : vector<8xf32>
    %526 = vector.multi_reduction <add>, %525, %cst_142 [1] : vector<8x128xf32> to vector<8xf32>
    %527 = vector.shape_cast %526 : vector<8xf32> to vector<8x1xf32>
    %cst_143 = arith.constant 3.125000e-02 : f32
    %528 = vector.broadcast %cst_143 : f32 to vector<8x1xf32>
    %529 = arith.mulf %527, %528 : vector<8x1xf32>
    %530 = arith.mulf %524, %524 : vector<8x1xf32>
    %531 = arith.subf %529, %530 : vector<8x1xf32>
    %532 = vector.broadcast %524 : vector<8x1xf32> to vector<8x128xf32>
    %533 = arith.subf %518, %532 : vector<8x128xf32>
    %cst_144 = arith.constant 9.99999974E-6 : f32
    %534 = vector.broadcast %cst_144 : f32 to vector<8x1xf32>
    %535 = arith.addf %531, %534 : vector<8x1xf32>
    %536 = math.rsqrt %535 : vector<8x1xf32>
    %537 = vector.broadcast %536 : vector<8x1xf32> to vector<8x128xf32>
    %538 = arith.mulf %533, %537 : vector<8x128xf32>
    %539 = vector.broadcast %519 : vector<1x128xf32> to vector<8x128xf32>
    %540 = arith.mulf %538, %539 : vector<8x128xf32>
    %541 = vector.broadcast %520 : vector<1x128xf32> to vector<8x128xf32>
    %542 = arith.addf %540, %541 : vector<8x128xf32>
    %543 = arith.truncf %542 : vector<8x128xf32> to vector<8x128xbf16>
    %cst_145 = arith.constant dense<0.000000e+00> : vector<8x128xf32>
    %544 = tpu.matmul %543, %350, %cst_145 {dimension_numbers = #tpu.dot_dimension_numbers<[1], [0], [0], [1], [0, 0, 1, 1], [], []>} : vector<8x128xbf16>, vector<128x128xbf16>, vector<8x128xf32> -> vector<8x128xf32>
    %545 = vector.extract_strided_slice %354 {offsets = [9, 0], sizes = [1, 128], strides = [1, 1]} : vector<13x128xf32> to vector<1x128xf32>
    %546 = vector.broadcast %545 : vector<1x128xf32> to vector<8x128xf32>
    %547 = arith.addf %544, %546 : vector<8x128xf32>
    %548 = arith.mulf %547, %547 : vector<8x128xf32>
    %549 = arith.mulf %547, %548 : vector<8x128xf32>
    %cst_146 = arith.constant 4.471500e-02 : f32
    %550 = vector.broadcast %cst_146 : f32 to vector<8x128xf32>
    %551 = arith.mulf %550, %549 : vector<8x128xf32>
    %552 = arith.addf %547, %551 : vector<8x128xf32>
    %cst_147 = arith.constant 0.797884583 : f32
    %553 = vector.broadcast %cst_147 : f32 to vector<8x128xf32>
    %554 = arith.mulf %553, %552 : vector<8x128xf32>
    %555 = math.tanh %554 : vector<8x128xf32>
    %cst_148 = arith.constant 1.000000e+00 : f32
    %556 = vector.broadcast %cst_148 : f32 to vector<8x128xf32>
    %557 = arith.addf %556, %555 : vector<8x128xf32>
    %cst_149 = arith.constant 5.000000e-01 : f32
    %558 = vector.broadcast %cst_149 : f32 to vector<8x128xf32>
    %559 = arith.mulf %558, %557 : vector<8x128xf32>
    %560 = arith.mulf %547, %559 : vector<8x128xf32>
    %561 = arith.truncf %560 : vector<8x128xf32> to vector<8x128xbf16>
    %cst_150 = arith.constant dense<0.000000e+00> : vector<8x128xf32>
    %562 = tpu.matmul %561, %352, %cst_150 {dimension_numbers = #tpu.dot_dimension_numbers<[1], [0], [0], [1], [0, 0, 1, 1], [], []>} : vector<8x128xbf16>, vector<128x128xbf16>, vector<8x128xf32> -> vector<8x128xf32>
    %563 = vector.extract_strided_slice %354 {offsets = [10, 0], sizes = [1, 128], strides = [1, 1]} : vector<13x128xf32> to vector<1x128xf32>
    %564 = vector.broadcast %563 : vector<1x128xf32> to vector<8x128xf32>
    %565 = arith.addf %562, %564 : vector<8x128xf32>
    %566 = arith.addf %542, %565 : vector<8x128xf32>
    %567 = vector.extract_strided_slice %354 {offsets = [11, 0], sizes = [1, 128], strides = [1, 1]} : vector<13x128xf32> to vector<1x128xf32>
    %568 = vector.extract_strided_slice %354 {offsets = [12, 0], sizes = [1, 128], strides = [1, 1]} : vector<13x128xf32> to vector<1x128xf32>
    %cst_151 = arith.constant dense<0.000000e+00> : vector<8xf32>
    %569 = vector.multi_reduction <add>, %566, %cst_151 [1] : vector<8x128xf32> to vector<8xf32>
    %570 = vector.shape_cast %569 : vector<8xf32> to vector<8x1xf32>
    %cst_152 = arith.constant 3.125000e-02 : f32
    %571 = vector.broadcast %cst_152 : f32 to vector<8x1xf32>
    %572 = arith.mulf %570, %571 : vector<8x1xf32>
    %573 = arith.mulf %566, %566 : vector<8x128xf32>
    %cst_153 = arith.constant dense<0.000000e+00> : vector<8xf32>
    %574 = vector.multi_reduction <add>, %573, %cst_153 [1] : vector<8x128xf32> to vector<8xf32>
    %575 = vector.shape_cast %574 : vector<8xf32> to vector<8x1xf32>
    %cst_154 = arith.constant 3.125000e-02 : f32
    %576 = vector.broadcast %cst_154 : f32 to vector<8x1xf32>
    %577 = arith.mulf %575, %576 : vector<8x1xf32>
    %578 = arith.mulf %572, %572 : vector<8x1xf32>
    %579 = arith.subf %577, %578 : vector<8x1xf32>
    %580 = vector.broadcast %572 : vector<8x1xf32> to vector<8x128xf32>
    %581 = arith.subf %566, %580 : vector<8x128xf32>
    %cst_155 = arith.constant 9.99999974E-6 : f32
    %582 = vector.broadcast %cst_155 : f32 to vector<8x1xf32>
    %583 = arith.addf %579, %582 : vector<8x1xf32>
    %584 = math.rsqrt %583 : vector<8x1xf32>
    %585 = vector.broadcast %584 : vector<8x1xf32> to vector<8x128xf32>
    %586 = arith.mulf %581, %585 : vector<8x128xf32>
    %587 = vector.broadcast %567 : vector<1x128xf32> to vector<8x128xf32>
    %588 = arith.mulf %586, %587 : vector<8x128xf32>
    %589 = vector.broadcast %568 : vector<1x128xf32> to vector<8x128xf32>
    %590 = arith.addf %588, %589 : vector<8x128xf32>
    %591 = vector.extract_strided_slice %307 {offsets = [2, 0], sizes = [1, 128], strides = [1, 1]} : vector<5x128xf32> to vector<1x128xf32>
    %592 = vector.extract_strided_slice %307 {offsets = [3, 0], sizes = [1, 128], strides = [1, 1]} : vector<5x128xf32> to vector<1x128xf32>
    %cst_156 = arith.constant dense<0.000000e+00> : vector<8xf32>
    %593 = vector.multi_reduction <add>, %590, %cst_156 [1] : vector<8x128xf32> to vector<8xf32>
    %594 = vector.shape_cast %593 : vector<8xf32> to vector<8x1xf32>
    %cst_157 = arith.constant 3.125000e-02 : f32
    %595 = vector.broadcast %cst_157 : f32 to vector<8x1xf32>
    %596 = arith.mulf %594, %595 : vector<8x1xf32>
    %597 = arith.mulf %590, %590 : vector<8x128xf32>
    %cst_158 = arith.constant dense<0.000000e+00> : vector<8xf32>
    %598 = vector.multi_reduction <add>, %597, %cst_158 [1] : vector<8x128xf32> to vector<8xf32>
    %599 = vector.shape_cast %598 : vector<8xf32> to vector<8x1xf32>
    %cst_159 = arith.constant 3.125000e-02 : f32
    %600 = vector.broadcast %cst_159 : f32 to vector<8x1xf32>
    %601 = arith.mulf %599, %600 : vector<8x1xf32>
    %602 = arith.mulf %596, %596 : vector<8x1xf32>
    %603 = arith.subf %601, %602 : vector<8x1xf32>
    %604 = vector.broadcast %596 : vector<8x1xf32> to vector<8x128xf32>
    %605 = arith.subf %590, %604 : vector<8x128xf32>
    %cst_160 = arith.constant 9.99999974E-6 : f32
    %606 = vector.broadcast %cst_160 : f32 to vector<8x1xf32>
    %607 = arith.addf %603, %606 : vector<8x1xf32>
    %608 = math.rsqrt %607 : vector<8x1xf32>
    %609 = vector.broadcast %608 : vector<8x1xf32> to vector<8x128xf32>
    %610 = arith.mulf %605, %609 : vector<8x128xf32>
    %611 = vector.broadcast %591 : vector<1x128xf32> to vector<8x128xf32>
    %612 = arith.mulf %610, %611 : vector<8x128xf32>
    %613 = vector.broadcast %592 : vector<1x128xf32> to vector<8x128xf32>
    %614 = arith.addf %612, %613 : vector<8x128xf32>
    %615 = arith.truncf %614 : vector<8x128xf32> to vector<8x128xbf16>
    %c0_161 = arith.constant 0 : index
    %c0_162 = arith.constant 0 : index
    %616 = vector.load %arg21[%c0_161, %c0_162] : memref<128x128xbf16, #tpu.memory_space<vmem>>, vector<128x128xbf16>
    %cst_163 = arith.constant dense<0.000000e+00> : vector<8x128xf32>
    %617 = tpu.matmul %615, %616, %cst_163 {dimension_numbers = #tpu.dot_dimension_numbers<[1], [0], [0], [1], [0, 0, 1, 1], [], []>} : vector<8x128xbf16>, vector<128x128xbf16>, vector<8x128xf32> -> vector<8x128xf32>
    %618 = vector.extract_strided_slice %307 {offsets = [4, 0], sizes = [1, 128], strides = [1, 1]} : vector<5x128xf32> to vector<1x128xf32>
    %619 = vector.broadcast %618 : vector<1x128xf32> to vector<8x128xf32>
    %620 = arith.addf %617, %619 : vector<8x128xf32>
    %c0_164 = arith.constant 0 : index
    %c0_165 = arith.constant 0 : index
    %c0_166 = arith.constant 0 : index
    %621 = vector.load %arg22[%c0_164, %c0_165, %c0_166] : memref<1x8x128xf32, #tpu.memory_space<vmem>>, vector<1x8x128xf32>
    %622 = vector.shape_cast %621 : vector<1x8x128xf32> to vector<8x128xf32>
    %623 = vector.shape_cast %620 : vector<8x128xf32> to vector<1x8x128xf32>
    tpu.vector_store %arg22[%c0_164, %c0_165, %c0_166], %623 {strides = array<i32>} : memref<1x8x128xf32, #tpu.memory_space<vmem>>, vector<1x8x128xf32>,
    return
  }
  func.func @transform_0(%arg0: i32) -> (i32, i32, i32) {
    %c0_i32 = arith.constant 0 : i32
    %c0_i32_0 = arith.constant 0 : i32
    %c0_i32_1 = arith.constant 0 : i32
    return %arg0, %c0_i32, %c0_i32_0 : i32, i32, i32
  }
  func.func @transform_1(%arg0: i32) -> (i32, i32, i32) {
    %c0_i32 = arith.constant 0 : i32
    %c0_i32_0 = arith.constant 0 : i32
    %c0_i32_1 = arith.constant 0 : i32
    return %arg0, %c0_i32, %c0_i32_0 : i32, i32, i32
  }
  func.func @transform_2(%arg0: i32) -> (i32, i32) {
    %c0_i32 = arith.constant 0 : i32
    %c0_i32_0 = arith.constant 0 : i32
    %c0_i32_1 = arith.constant 0 : i32
    return %c0_i32, %c0_i32_0 : i32, i32
  }
  func.func @transform_3(%arg0: i32) -> (i32, i32) {
    %c0_i32 = arith.constant 0 : i32
    %c0_i32_0 = arith.constant 0 : i32
    %c0_i32_1 = arith.constant 0 : i32
    return %c0_i32, %c0_i32_0 : i32, i32
  }
  func.func @transform_4(%arg0: i32) -> (i32, i32) {
    %c0_i32 = arith.constant 0 : i32
    %c0_i32_0 = arith.constant 0 : i32
    %c0_i32_1 = arith.constant 0 : i32
    return %c0_i32, %c0_i32_0 : i32, i32
  }
  func.func @transform_5(%arg0: i32) -> (i32, i32) {
    %c0_i32 = arith.constant 0 : i32
    %c0_i32_0 = arith.constant 0 : i32
    %c0_i32_1 = arith.constant 0 : i32
    return %c0_i32, %c0_i32_0 : i32, i32
  }
  func.func @transform_6(%arg0: i32) -> (i32, i32, i32) {
    %c0_i32 = arith.constant 0 : i32
    %c0_i32_0 = arith.constant 0 : i32
    %c0_i32_1 = arith.constant 0 : i32
    %c0_i32_2 = arith.constant 0 : i32
    return %c0_i32, %c0_i32_0, %c0_i32_1 : i32, i32, i32
  }
  func.func @transform_7(%arg0: i32) -> (i32, i32, i32) {
    %c0_i32 = arith.constant 0 : i32
    %c0_i32_0 = arith.constant 0 : i32
    %c0_i32_1 = arith.constant 0 : i32
    %c0_i32_2 = arith.constant 0 : i32
    return %c0_i32, %c0_i32_0, %c0_i32_1 : i32, i32, i32
  }
  func.func @transform_8(%arg0: i32) -> (i32, i32, i32) {
    %c0_i32 = arith.constant 0 : i32
    %c0_i32_0 = arith.constant 0 : i32
    %c0_i32_1 = arith.constant 0 : i32
    %c0_i32_2 = arith.constant 0 : i32
    return %c0_i32, %c0_i32_0, %c0_i32_1 : i32, i32, i32
  }
  func.func @transform_9(%arg0: i32) -> (i32, i32, i32) {
    %c0_i32 = arith.constant 0 : i32
    %c0_i32_0 = arith.constant 0 : i32
    %c0_i32_1 = arith.constant 0 : i32
    %c0_i32_2 = arith.constant 0 : i32
    return %c0_i32, %c0_i32_0, %c0_i32_1 : i32, i32, i32
  }
  func.func @transform_10(%arg0: i32) -> (i32, i32, i32) {
    %c0_i32 = arith.constant 0 : i32
    %c0_i32_0 = arith.constant 0 : i32
    %c0_i32_1 = arith.constant 0 : i32
    %c0_i32_2 = arith.constant 0 : i32
    return %c0_i32, %c0_i32_0, %c0_i32_1 : i32, i32, i32
  }
  func.func @transform_11(%arg0: i32) -> (i32, i32, i32) {
    %c0_i32 = arith.constant 0 : i32
    %c0_i32_0 = arith.constant 0 : i32
    %c0_i32_1 = arith.constant 0 : i32
    %c0_i32_2 = arith.constant 0 : i32
    return %c0_i32, %c0_i32_0, %c0_i32_1 : i32, i32, i32
  }
  func.func @transform_12(%arg0: i32) -> (i32, i32, i32) {
    %c0_i32 = arith.constant 0 : i32
    %c0_i32_0 = arith.constant 0 : i32
    %c0_i32_1 = arith.constant 0 : i32
    %c0_i32_2 = arith.constant 0 : i32
    return %c0_i32, %c0_i32_0, %c0_i32_1 : i32, i32, i32
  }
  func.func @transform_13(%arg0: i32) -> (i32, i32, i32) {
    %c0_i32 = arith.constant 0 : i32
    %c0_i32_0 = arith.constant 0 : i32
    %c0_i32_1 = arith.constant 0 : i32
    %c0_i32_2 = arith.constant 0 : i32
    return %c0_i32, %c0_i32_0, %c0_i32_1 : i32, i32, i32
  }
  func.func @transform_14(%arg0: i32) -> (i32, i32, i32) {
    %c0_i32 = arith.constant 0 : i32
    %c0_i32_0 = arith.constant 0 : i32
    %c0_i32_1 = arith.constant 0 : i32
    %c0_i32_2 = arith.constant 0 : i32
    return %c0_i32, %c0_i32_0, %c0_i32_1 : i32, i32, i32
  }
  func.func @transform_15(%arg0: i32) -> (i32, i32, i32) {
    %c0_i32 = arith.constant 0 : i32
    %c0_i32_0 = arith.constant 0 : i32
    %c0_i32_1 = arith.constant 0 : i32
    %c0_i32_2 = arith.constant 0 : i32
    return %c0_i32, %c0_i32_0, %c0_i32_1 : i32, i32, i32
  }
  func.func @transform_16(%arg0: i32) -> (i32, i32, i32) {
    %c0_i32 = arith.constant 0 : i32
    %c0_i32_0 = arith.constant 0 : i32
    %c0_i32_1 = arith.constant 0 : i32
    %c0_i32_2 = arith.constant 0 : i32
    return %c0_i32, %c0_i32_0, %c0_i32_1 : i32, i32, i32
  }
  func.func @transform_17(%arg0: i32) -> (i32, i32, i32) {
    %c0_i32 = arith.constant 0 : i32
    %c0_i32_0 = arith.constant 0 : i32
    %c0_i32_1 = arith.constant 0 : i32
    %c0_i32_2 = arith.constant 0 : i32
    return %c0_i32, %c0_i32_0, %c0_i32_1 : i32, i32, i32
  }
  func.func @transform_18(%arg0: i32) -> (i32, i32, i32) {
    %c0_i32 = arith.constant 0 : i32
    %c0_i32_0 = arith.constant 0 : i32
    %c0_i32_1 = arith.constant 0 : i32
    %c0_i32_2 = arith.constant 0 : i32
    return %c0_i32, %c0_i32_0, %c0_i32_1 : i32, i32, i32
  }
  func.func @transform_19(%arg0: i32) -> (i32, i32) {
    %c0_i32 = arith.constant 0 : i32
    %c0_i32_0 = arith.constant 0 : i32
    %c0_i32_1 = arith.constant 0 : i32
    return %c0_i32, %c0_i32_0 : i32, i32
  }
  func.func @transform_20(%arg0: i32) -> (i32, i32) {
    %c0_i32 = arith.constant 0 : i32
    %c0_i32_0 = arith.constant 0 : i32
    %c0_i32_1 = arith.constant 0 : i32
    return %c0_i32, %c0_i32_0 : i32, i32
  }
  func.func @transform_21(%arg0: i32) -> (i32, i32, i32) {
    %c0_i32 = arith.constant 0 : i32
    %c0_i32_0 = arith.constant 0 : i32
    %c0_i32_1 = arith.constant 0 : i32
    return %arg0, %c0_i32, %c0_i32_0 : i32, i32, i32
  }
}

</mosaic_0001>

<llo_original>
// kernel: _lambda_.1
$region0: #{_lambda_.1}
  #allocation0 [shape = 'u32[]', space=smem, size = 0x4, offset = 0x4, fixed_abs, tag = 'smem constant byte address 0x4 - core index']
  #allocation1 [shape = 'u32[72,128]{1,0:T(1,128)}', space=vmem, size = 0x9000, scoped, tag = 'internal scratch']
  %s0 = inlined_call_operand.vmem [shape: f32[2,8,32], index: 0, kind: input, shape index: {}]
  %s1 = inlined_call_operand.vmem [shape: f32[2,8,32], index: 1, kind: input, shape index: {}]
  %s2 = inlined_call_operand.vmem [shape: f32[8,128], index: 2, kind: input, shape index: {}, may-alias: {2,3}]
  %s3 = inlined_call_operand.vmem [shape: f32[8,128], index: 3, kind: input, shape index: {}, may-alias: {2,3}]
  %s4 = inlined_call_operand.vmem [shape: bf16[32,128], index: 4, kind: input, shape index: {}]
  %s5 = inlined_call_operand.vmem [shape: bf16[32,128], index: 5, kind: input, shape index: {}]
  %s6 = inlined_call_operand.vmem [shape: bf16[2,128,96], index: 6, kind: input, shape index: {}]
  %s7 = inlined_call_operand.vmem [shape: bf16[2,32,128], index: 7, kind: input, shape index: {}]
  %s8 = inlined_call_operand.vmem [shape: bf16[2,128,128], index: 8, kind: input, shape index: {}]
  %s9 = inlined_call_operand.vmem [shape: bf16[2,128,128], index: 9, kind: input, shape index: {}]
  %s10 = inlined_call_operand.vmem [shape: f32[2,8,128], index: 10, kind: input, shape index: {}]
  %s11 = inlined_call_operand.vmem [shape: bf16[1,128,96], index: 11, kind: input, shape index: {}]
  %s12 = inlined_call_operand.vmem [shape: bf16[1,32,128], index: 12, kind: input, shape index: {}]
  %s13 = inlined_call_operand.vmem [shape: bf16[1,128,32], index: 13, kind: input, shape index: {}]
  %s14 = inlined_call_operand.vmem [shape: bf16[1,128,64], index: 14, kind: input, shape index: {}]
  %s15 = inlined_call_operand.vmem [shape: bf16[1,32,128], index: 15, kind: input, shape index: {}]
  %s16 = inlined_call_operand.vmem [shape: bf16[1,128,128], index: 16, kind: input, shape index: {}]
  %s17 = inlined_call_operand.vmem [shape: bf16[1,128,128], index: 17, kind: input, shape index: {}]
  %s18 = inlined_call_operand.vmem [shape: f32[1,13,128], index: 18, kind: input, shape index: {}]
  %s19 = inlined_call_operand.vmem [shape: f32[5,128], index: 19, kind: input, shape index: {}]
  %s20 = inlined_call_operand.vmem [shape: bf16[128,128], index: 20, kind: input, shape index: {}]
  %s21 = inlined_call_operand.vmem [shape: f32[2,8,128], index: 21, kind: output, shape index: {}]
  %s22 = sld [smem:[#allocation0]]
  $region117: #{_lambda_.1} parent=0
    _
  %s24 = ssub.s32 1, %s22
  %s25 = scalar_select 0, %s24, %s22
  loop: start=0, step=1, limit=4
  $region2: #{_lambda_.1} parent=0 // loop_pre_header
    _
  $region3: #{_lambda_.1} parent=0 // loop_header
    %s27 = sphi 0, %s31
    %p28 = scmp.ge.s32.totalorder %s27, 4
    %s37 = sphi 0, %s39
    %s40 = sphi 0, %s37
    %s41 = sphi 0, %s40
    %s57 = sphi 0, %s41
    %s63 = sphi 0, %s65
    %s66 = sphi 0, %s63
    %s67 = sphi 0, %s66
    %s83 = sphi 0, %s67
    %s87 = sphi 0, %s87
    %s89 = sphi 0, %s87
    %s90 = sphi 0, %s89
    %s104 = sphi 0, %s90
    %s108 = sphi 0, %s108
    %s110 = sphi 0, %s108
    %s111 = sphi 0, %s110
    %s125 = sphi 0, %s111
    %s129 = sphi 0, %s129
    %s131 = sphi 0, %s129
    %s132 = sphi 0, %s131
    %s146 = sphi 0, %s132
    %s150 = sphi 0, %s150
    %s152 = sphi 0, %s150
    %s153 = sphi 0, %s152
    %s167 = sphi 0, %s153
    %s171 = sphi 0, %s171
    %s173 = sphi 0, %s171
    %s174 = sphi 0, %s173
    %s188 = sphi 0, %s174
    %s192 = sphi 0, %s192
    %s194 = sphi 0, %s192
    %s195 = sphi 0, %s194
    %s209 = sphi 0, %s195
    %s213 = sphi 0, %s213
    %s215 = sphi 0, %s213
    %s216 = sphi 0, %s215
    %s230 = sphi 0, %s216
    %s234 = sphi 0, %s234
    %s236 = sphi 0, %s234
    %s237 = sphi 0, %s236
    %s251 = sphi 0, %s237
    %s255 = sphi 0, %s255
    %s257 = sphi 0, %s255
    %s258 = sphi 0, %s257
    %s272 = sphi 0, %s258
    %s276 = sphi 0, %s276
    %s278 = sphi 0, %s276
    %s279 = sphi 0, %s278
    %s293 = sphi 0, %s279
    %s297 = sphi 0, %s297
    %s299 = sphi 0, %s297
    %s300 = sphi 0, %s299
    %s314 = sphi 0, %s300
    %s318 = sphi 0, %s318
    %s320 = sphi 0, %s318
    %s321 = sphi 0, %s320
    %s335 = sphi 0, %s321
    %s339 = sphi 0, %s339
    %s341 = sphi 0, %s339
    %s342 = sphi 0, %s341
    %s356 = sphi 0, %s342
    %s360 = sphi 0, %s360
    %s362 = sphi 0, %s360
    %s363 = sphi 0, %s362
    %s377 = sphi 0, %s363
    %s381 = sphi 0, %s381
    %s383 = sphi 0, %s381
    %s384 = sphi 0, %s383
    %s398 = sphi 0, %s384
    %s402 = sphi 0, %s402
    %s404 = sphi 0, %s402
    %s405 = sphi 0, %s404
    %s419 = sphi 0, %s405
    %s423 = sphi 0, %s423
    %s425 = sphi 0, %s423
    %s426 = sphi 0, %s425
    %s440 = sphi 0, %s426
    %s444 = sphi 0, %s444
    %s446 = sphi 0, %s444
    %s447 = sphi 0, %s446
    %s461 = sphi 0, %s447
    %s465 = sphi 0, %s465
    %s467 = sphi 0, %s465
    %s468 = sphi 0, %s467
    %s482 = sphi 0, %s468
    %s488 = sphi 0, %s490
    %s491 = sphi 0, %s488
    %s492 = sphi 0, %s491
    %s508 = sphi 0, %s492
  $region4: #{_lambda_.1} parent=0 // loop_header_branch
    %30 = sbr.rel (%p28) target = $region8
  $region5: #{_lambda_.1} parent=0 // loop_body
    %s32 = ssub.s32 %s27, 1
    %s33 = ssub.s32 %s27, 2
    %s34 = sadd.s32 %s27, 1
    %s35 = ssub.s32 %s27, %s34
    %p36 = scmp.eq.s32.totalorder %s35, 0
    %s38 = sadd.s32 %s37, 1
    %s39 = scalar_select %p36, %s37, %s38
    %p42 = pneg %p36
    %p43 = scmp.eq.s32.totalorder %s27, 1
    %p44 = por %p42, %p43
    %p45 = scmp.ne.s32.totalorder %s37, %s40
    %p46 = scmp.eq.s32.totalorder %s27, 0
    %p47 = por %p45, %p46
    %p48 = scmp.ne.s32.totalorder %s37, %s40
    %p49 = scmp.eq.s32.totalorder %s32, 1
    %p50 = por %p48, %p49
    %p51 = scmp.ne.s32.totalorder %s40, %s41
    %p52 = scmp.eq.s32.totalorder %s32, 0
    %p53 = por %p51, %p52
    %p54 = scmp.ne.s32.totalorder %s40, %s41
    %p55 = scmp.eq.s32.totalorder %s33, 1
    %p56 = por %p54, %p55
    %p58 = scmp.ne.s32.totalorder %s41, %s57
    %p59 = scmp.eq.s32.totalorder %s33, 0
    %p60 = por %p58, %p59
    %s61 = ssub.s32 %s27, %s34
    %p62 = scmp.eq.s32.totalorder %s61, 0
    %s64 = sadd.s32 %s63, 1
    %s65 = scalar_select %p62, %s63, %s64
    %p68 = pneg %p62
    %p69 = scmp.eq.s32.totalorder %s27, 1
    %p70 = por %p68, %p69
    %p71 = scmp.ne.s32.totalorder %s63, %s66
    %p72 = scmp.eq.s32.totalorder %s27, 0
    %p73 = por %p71, %p72
    %p74 = scmp.ne.s32.totalorder %s63, %s66
    %p75 = scmp.eq.s32.totalorder %s32, 1
    %p76 = por %p74, %p75
    %p77 = scmp.ne.s32.totalorder %s66, %s67
    %p78 = scmp.eq.s32.totalorder %s32, 0
    %p79 = por %p77, %p78
    %p80 = scmp.ne.s32.totalorder %s66, %s67
    %p81 = scmp.eq.s32.totalorder %s33, 1
    %p82 = por %p80, %p81
    %p84 = scmp.ne.s32.totalorder %s67, %s83
    %p85 = scmp.eq.s32.totalorder %s33, 0
    %p86 = por %p84, %p85
    %s88 = sadd.s32 %s87, 1
    %p91 = scmp.eq.s32.totalorder %s27, 1
    %p92 = scmp.ne.s32.totalorder %s87, %s89
    %p93 = scmp.eq.s32.totalorder %s27, 0
    %p94 = por %p92, %p93
    %p95 = scmp.ne.s32.totalorder %s87, %s89
    %p96 = scmp.eq.s32.totalorder %s32, 1
    %p97 = por %p95, %p96
    %p98 = scmp.ne.s32.totalorder %s89, %s90
    %p99 = scmp.eq.s32.totalorder %s32, 0
    %p100 = por %p98, %p99
    %p101 = scmp.ne.s32.totalorder %s89, %s90
    %p102 = scmp.eq.s32.totalorder %s33, 1
    %p103 = por %p101, %p102
    %p105 = scmp.ne.s32.totalorder %s90, %s104
    %p106 = scmp.eq.s32.totalorder %s33, 0
    %p107 = por %p105, %p106
    %s109 = sadd.s32 %s108, 1
    %p112 = scmp.eq.s32.totalorder %s27, 1
    %p113 = scmp.ne.s32.totalorder %s108, %s110
    %p114 = scmp.eq.s32.totalorder %s27, 0
    %p115 = por %p113, %p114
    %p116 = scmp.ne.s32.totalorder %s108, %s110
    %p117 = scmp.eq.s32.totalorder %s32, 1
    %p118 = por %p116, %p117
    %p119 = scmp.ne.s32.totalorder %s110, %s111
    %p120 = scmp.eq.s32.totalorder %s32, 0
    %p121 = por %p119, %p120
    %p122 = scmp.ne.s32.totalorder %s110, %s111
    %p123 = scmp.eq.s32.totalorder %s33, 1
    %p124 = por %p122, %p123
    %p126 = scmp.ne.s32.totalorder %s111, %s125
    %p127 = scmp.eq.s32.totalorder %s33, 0
    %p128 = por %p126, %p127
    %s130 = sadd.s32 %s129, 1
    %p133 = scmp.eq.s32.totalorder %s27, 1
    %p134 = scmp.ne.s32.totalorder %s129, %s131
    %p135 = scmp.eq.s32.totalorder %s27, 0
    %p136 = por %p134, %p135
    %p137 = scmp.ne.s32.totalorder %s129, %s131
    %p138 = scmp.eq.s32.totalorder %s32, 1
    %p139 = por %p137, %p138
    %p140 = scmp.ne.s32.totalorder %s131, %s132
    %p141 = scmp.eq.s32.totalorder %s32, 0
    %p142 = por %p140, %p141
    %p143 = scmp.ne.s32.totalorder %s131, %s132
    %p144 = scmp.eq.s32.totalorder %s33, 1
    %p145 = por %p143, %p144
    %p147 = scmp.ne.s32.totalorder %s132, %s146
    %p148 = scmp.eq.s32.totalorder %s33, 0
    %p149 = por %p147, %p148
    %s151 = sadd.s32 %s150, 1
    %p154 = scmp.eq.s32.totalorder %s27, 1
    %p155 = scmp.ne.s32.totalorder %s150, %s152
    %p156 = scmp.eq.s32.totalorder %s27, 0
    %p157 = por %p155, %p156
    %p158 = scmp.ne.s32.totalorder %s150, %s152
    %p159 = scmp.eq.s32.totalorder %s32, 1
    %p160 = por %p158, %p159
    %p161 = scmp.ne.s32.totalorder %s152, %s153
    %p162 = scmp.eq.s32.totalorder %s32, 0
    %p163 = por %p161, %p162
    %p164 = scmp.ne.s32.totalorder %s152, %s153
    %p165 = scmp.eq.s32.totalorder %s33, 1
    %p166 = por %p164, %p165
    %p168 = scmp.ne.s32.totalorder %s153, %s167
    %p169 = scmp.eq.s32.totalorder %s33, 0
    %p170 = por %p168, %p169
    %s172 = sadd.s32 %s171, 1
    %p175 = scmp.eq.s32.totalorder %s27, 1
    %p176 = scmp.ne.s32.totalorder %s171, %s173
    %p177 = scmp.eq.s32.totalorder %s27, 0
    %p178 = por %p176, %p177
    %p179 = scmp.ne.s32.totalorder %s171, %s173
    %p180 = scmp.eq.s32.totalorder %s32, 1
    %p181 = por %p179, %p180
    %p182 = scmp.ne.s32.totalorder %s173, %s174
    %p183 = scmp.eq.s32.totalorder %s32, 0
    %p184 = por %p182, %p183
    %p185 = scmp.ne.s32.totalorder %s173, %s174
    %p186 = scmp.eq.s32.totalorder %s33, 1
    %p187 = por %p185, %p186
    %p189 = scmp.ne.s32.totalorder %s174, %s188
    %p190 = scmp.eq.s32.totalorder %s33, 0
    %p191 = por %p189, %p190
    %s193 = sadd.s32 %s192, 1
    %p196 = scmp.eq.s32.totalorder %s27, 1
    %p197 = scmp.ne.s32.totalorder %s192, %s194
    %p198 = scmp.eq.s32.totalorder %s27, 0
    %p199 = por %p197, %p198
    %p200 = scmp.ne.s32.totalorder %s192, %s194
    %p201 = scmp.eq.s32.totalorder %s32, 1
    %p202 = por %p200, %p201
    %p203 = scmp.ne.s32.totalorder %s194, %s195
    %p204 = scmp.eq.s32.totalorder %s32, 0
    %p205 = por %p203, %p204
    %p206 = scmp.ne.s32.totalorder %s194, %s195
    %p207 = scmp.eq.s32.totalorder %s33, 1
    %p208 = por %p206, %p207
    %p210 = scmp.ne.s32.totalorder %s195, %s209
    %p211 = scmp.eq.s32.totalorder %s33, 0
    %p212 = por %p210, %p211
    %s214 = sadd.s32 %s213, 1
    %p217 = scmp.eq.s32.totalorder %s27, 1
    %p218 = scmp.ne.s32.totalorder %s213, %s215
    %p219 = scmp.eq.s32.totalorder %s27, 0
    %p220 = por %p218, %p219
    %p221 = scmp.ne.s32.totalorder %s213, %s215
    %p222 = scmp.eq.s32.totalorder %s32, 1
    %p223 = por %p221, %p222
    %p224 = scmp.ne.s32.totalorder %s215, %s216
    %p225 = scmp.eq.s32.totalorder %s32, 0
    %p226 = por %p224, %p225
    %p227 = scmp.ne.s32.totalorder %s215, %s216
    %p228 = scmp.eq.s32.totalorder %s33, 1
    %p229 = por %p227, %p228
    %p231 = scmp.ne.s32.totalorder %s216, %s230
    %p232 = scmp.eq.s32.totalorder %s33, 0
    %p233 = por %p231, %p232
    %s235 = sadd.s32 %s234, 1
    %p238 = scmp.eq.s32.totalorder %s27, 1
    %p239 = scmp.ne.s32.totalorder %s234, %s236
    %p240 = scmp.eq.s32.totalorder %s27, 0
    %p241 = por %p239, %p240
    %p242 = scmp.ne.s32.totalorder %s234, %s236
    %p243 = scmp.eq.s32.totalorder %s32, 1
    %p244 = por %p242, %p243
    %p245 = scmp.ne.s32.totalorder %s236, %s237
    %p246 = scmp.eq.s32.totalorder %s32, 0
    %p247 = por %p245, %p246
    %p248 = scmp.ne.s32.totalorder %s236, %s237
    %p249 = scmp.eq.s32.totalorder %s33, 1
    %p250 = por %p248, %p249
    %p252 = scmp.ne.s32.totalorder %s237, %s251
    %p253 = scmp.eq.s32.totalorder %s33, 0
    %p254 = por %p252, %p253
    %s256 = sadd.s32 %s255, 1
    %p259 = scmp.eq.s32.totalorder %s27, 1
    %p260 = scmp.ne.s32.totalorder %s255, %s257
    %p261 = scmp.eq.s32.totalorder %s27, 0
    %p262 = por %p260, %p261
    %p263 = scmp.ne.s32.totalorder %s255, %s257
    %p264 = scmp.eq.s32.totalorder %s32, 1
    %p265 = por %p263, %p264
    %p266 = scmp.ne.s32.totalorder %s257, %s258
    %p267 = scmp.eq.s32.totalorder %s32, 0
    %p268 = por %p266, %p267
    %p269 = scmp.ne.s32.totalorder %s257, %s258
    %p270 = scmp.eq.s32.totalorder %s33, 1
    %p271 = por %p269, %p270
    %p273 = scmp.ne.s32.totalorder %s258, %s272
    %p274 = scmp.eq.s32.totalorder %s33, 0
    %p275 = por %p273, %p274
    %s277 = sadd.s32 %s276, 1
    %p280 = scmp.eq.s32.totalorder %s27, 1
    %p281 = scmp.ne.s32.totalorder %s276, %s278
    %p282 = scmp.eq.s32.totalorder %s27, 0
    %p283 = por %p281, %p282
    %p284 = scmp.ne.s32.totalorder %s276, %s278
    %p285 = scmp.eq.s32.totalorder %s32, 1
    %p286 = por %p284, %p285
    %p287 = scmp.ne.s32.totalorder %s278, %s279
    %p288 = scmp.eq.s32.totalorder %s32, 0
    %p289 = por %p287, %p288
    %p290 = scmp.ne.s32.totalorder %s278, %s279
    %p291 = scmp.eq.s32.totalorder %s33, 1
    %p292 = por %p290, %p291
    %p294 = scmp.ne.s32.totalorder %s279, %s293
    %p295 = scmp.eq.s32.totalorder %s33, 0
    %p296 = por %p294, %p295
    %s298 = sadd.s32 %s297, 1
    %p301 = scmp.eq.s32.totalorder %s27, 1
    %p302 = scmp.ne.s32.totalorder %s297, %s299
    %p303 = scmp.eq.s32.totalorder %s27, 0
    %p304 = por %p302, %p303
    %p305 = scmp.ne.s32.totalorder %s297, %s299
    %p306 = scmp.eq.s32.totalorder %s32, 1
    %p307 = por %p305, %p306
    %p308 = scmp.ne.s32.totalorder %s299, %s300
    %p309 = scmp.eq.s32.totalorder %s32, 0
    %p310 = por %p308, %p309
    %p311 = scmp.ne.s32.totalorder %s299, %s300
    %p312 = scmp.eq.s32.totalorder %s33, 1
    %p313 = por %p311, %p312
    %p315 = scmp.ne.s32.totalorder %s300, %s314
    %p316 = scmp.eq.s32.totalorder %s33, 0
    %p317 = por %p315, %p316
    %s319 = sadd.s32 %s318, 1
    %p322 = scmp.eq.s32.totalorder %s27, 1
    %p323 = scmp.ne.s32.totalorder %s318, %s320
    %p324 = scmp.eq.s32.totalorder %s27, 0
    %p325 = por %p323, %p324
    %p326 = scmp.ne.s32.totalorder %s318, %s320
    %p327 = scmp.eq.s32.totalorder %s32, 1
    %p328 = por %p326, %p327
    %p329 = scmp.ne.s32.totalorder %s320, %s321
    %p330 = scmp.eq.s32.totalorder %s32, 0
    %p331 = por %p329, %p330
    %p332 = scmp.ne.s32.totalorder %s320, %s321
    %p333 = scmp.eq.s32.totalorder %s33, 1
    %p334 = por %p332, %p333
    %p336 = scmp.ne.s32.totalorder %s321, %s335
    %p337 = scmp.eq.s32.totalorder %s33, 0
    %p338 = por %p336, %p337
    %s340 = sadd.s32 %s339, 1
    %p343 = scmp.eq.s32.totalorder %s27, 1
    %p344 = scmp.ne.s32.totalorder %s339, %s341
    %p345 = scmp.eq.s32.totalorder %s27, 0
    %p346 = por %p344, %p345
    %p347 = scmp.ne.s32.totalorder %s339, %s341
    %p348 = scmp.eq.s32.totalorder %s32, 1
    %p349 = por %p347, %p348
    %p350 = scmp.ne.s32.totalorder %s341, %s342
    %p351 = scmp.eq.s32.totalorder %s32, 0
    %p352 = por %p350, %p351
    %p353 = scmp.ne.s32.totalorder %s341, %s342
    %p354 = scmp.eq.s32.totalorder %s33, 1
    %p355 = por %p353, %p354
    %p357 = scmp.ne.s32.totalorder %s342, %s356
    %p358 = scmp.eq.s32.totalorder %s33, 0
    %p359 = por %p357, %p358
    %s361 = sadd.s32 %s360, 1
    %p364 = scmp.eq.s32.totalorder %s27, 1
    %p365 = scmp.ne.s32.totalorder %s360, %s362
    %p366 = scmp.eq.s32.totalorder %s27, 0
    %p367 = por %p365, %p366
    %p368 = scmp.ne.s32.totalorder %s360, %s362
    %p369 = scmp.eq.s32.totalorder %s32, 1
    %p370 = por %p368, %p369
    %p371 = scmp.ne.s32.totalorder %s362, %s363
    %p372 = scmp.eq.s32.totalorder %s32, 0
    %p373 = por %p371, %p372
    %p374 = scmp.ne.s32.totalorder %s362, %s363
    %p375 = scmp.eq.s32.totalorder %s33, 1
    %p376 = por %p374, %p375
    %p378 = scmp.ne.s32.totalorder %s363, %s377
    %p379 = scmp.eq.s32.totalorder %s33, 0
    %p380 = por %p378, %p379
    %s382 = sadd.s32 %s381, 1
    %p385 = scmp.eq.s32.totalorder %s27, 1
    %p386 = scmp.ne.s32.totalorder %s381, %s383
    %p387 = scmp.eq.s32.totalorder %s27, 0
    %p388 = por %p386, %p387
    %p389 = scmp.ne.s32.totalorder %s381, %s383
    %p390 = scmp.eq.s32.totalorder %s32, 1
    %p391 = por %p389, %p390
    %p392 = scmp.ne.s32.totalorder %s383, %s384
    %p393 = scmp.eq.s32.totalorder %s32, 0
    %p394 = por %p392, %p393
    %p395 = scmp.ne.s32.totalorder %s383, %s384
    %p396 = scmp.eq.s32.totalorder %s33, 1
    %p397 = por %p395, %p396
    %p399 = scmp.ne.s32.totalorder %s384, %s398
    %p400 = scmp.eq.s32.totalorder %s33, 0
    %p401 = por %p399, %p400
    %s403 = sadd.s32 %s402, 1
    %p406 = scmp.eq.s32.totalorder %s27, 1
    %p407 = scmp.ne.s32.totalorder %s402, %s404
    %p408 = scmp.eq.s32.totalorder %s27, 0
    %p409 = por %p407, %p408
    %p410 = scmp.ne.s32.totalorder %s402, %s404
    %p411 = scmp.eq.s32.totalorder %s32, 1
    %p412 = por %p410, %p411
    %p413 = scmp.ne.s32.totalorder %s404, %s405
    %p414 = scmp.eq.s32.totalorder %s32, 0
    %p415 = por %p413, %p414
    %p416 = scmp.ne.s32.totalorder %s404, %s405
    %p417 = scmp.eq.s32.totalorder %s33, 1
    %p418 = por %p416, %p417
    %p420 = scmp.ne.s32.totalorder %s405, %s419
    %p421 = scmp.eq.s32.totalorder %s33, 0
    %p422 = por %p420, %p421
    %s424 = sadd.s32 %s423, 1
    %p427 = scmp.eq.s32.totalorder %s27, 1
    %p428 = scmp.ne.s32.totalorder %s423, %s425
    %p429 = scmp.eq.s32.totalorder %s27, 0
    %p430 = por %p428, %p429
    %p431 = scmp.ne.s32.totalorder %s423, %s425
    %p432 = scmp.eq.s32.totalorder %s32, 1
    %p433 = por %p431, %p432
    %p434 = scmp.ne.s32.totalorder %s425, %s426
    %p435 = scmp.eq.s32.totalorder %s32, 0
    %p436 = por %p434, %p435
    %p437 = scmp.ne.s32.totalorder %s425, %s426
    %p438 = scmp.eq.s32.totalorder %s33, 1
    %p439 = por %p437, %p438
    %p441 = scmp.ne.s32.totalorder %s426, %s440
    %p442 = scmp.eq.s32.totalorder %s33, 0
    %p443 = por %p441, %p442
    %s445 = sadd.s32 %s444, 1
    %p448 = scmp.eq.s32.totalorder %s27, 1
    %p449 = scmp.ne.s32.totalorder %s444, %s446
    %p450 = scmp.eq.s32.totalorder %s27, 0
    %p451 = por %p449, %p450
    %p452 = scmp.ne.s32.totalorder %s444, %s446
    %p453 = scmp.eq.s32.totalorder %s32, 1
    %p454 = por %p452, %p453
    %p455 = scmp.ne.s32.totalorder %s446, %s447
    %p456 = scmp.eq.s32.totalorder %s32, 0
    %p457 = por %p455, %p456
    %p458 = scmp.ne.s32.totalorder %s446, %s447
    %p459 = scmp.eq.s32.totalorder %s33, 1
    %p460 = por %p458, %p459
    %p462 = scmp.ne.s32.totalorder %s447, %s461
    %p463 = scmp.eq.s32.totalorder %s33, 0
    %p464 = por %p462, %p463
    %s466 = sadd.s32 %s465, 1
    %p469 = scmp.eq.s32.totalorder %s27, 1
    %p470 = scmp.ne.s32.totalorder %s465, %s467
    %p471 = scmp.eq.s32.totalorder %s27, 0
    %p472 = por %p470, %p471
    %p473 = scmp.ne.s32.totalorder %s465, %s467
    %p474 = scmp.eq.s32.totalorder %s32, 1
    %p475 = por %p473, %p474
    %p476 = scmp.ne.s32.totalorder %s467, %s468
    %p477 = scmp.eq.s32.totalorder %s32, 0
    %p478 = por %p476, %p477
    %p479 = scmp.ne.s32.totalorder %s467, %s468
    %p480 = scmp.eq.s32.totalorder %s33, 1
    %p481 = por %p479, %p480
    %p483 = scmp.ne.s32.totalorder %s468, %s482
    %p484 = scmp.eq.s32.totalorder %s33, 0
    %p485 = por %p483, %p484
    %s486 = ssub.s32 %s27, %s34
    %p487 = scmp.eq.s32.totalorder %s486, 0
    %s489 = sadd.s32 %s488, 1
    %s490 = scalar_select %p487, %s488, %s489
    %p493 = pneg %p487
    %p494 = scmp.eq.s32.totalorder %s27, 1
    %p495 = por %p493, %p494
    %p496 = scmp.ne.s32.totalorder %s488, %s491
    %p497 = scmp.eq.s32.totalorder %s27, 0
    %p498 = por %p496, %p497
    %p499 = scmp.ne.s32.totalorder %s488, %s491
    %p500 = scmp.eq.s32.totalorder %s32, 1
    %p501 = por %p499, %p500
    %p502 = scmp.ne.s32.totalorder %s491, %s492
    %p503 = scmp.eq.s32.totalorder %s32, 0
    %p504 = por %p502, %p503
    %p505 = scmp.ne.s32.totalorder %s491, %s492
    %p506 = scmp.eq.s32.totalorder %s33, 1
    %p507 = por %p505, %p506
    %p509 = scmp.ne.s32.totalorder %s492, %s508
    %p510 = scmp.eq.s32.totalorder %s33, 0
    %p511 = por %p509, %p510
    %p512 = scmp.le.s32.totalorder 1, %s27
    %p513 = scmp.lt.s32.totalorder %s27, 3
    %p514 = pnand %p512, %p513
    %p515 = pneg %p514
    // Predicated region
    $region9: #{_lambda_.1} parent=5 // pred_check
      _
    $region10: #{_lambda_.1} parent=5 // pred_check_branch
      %517 = sbr.rel (%p514) target = $region12
    $region11: #{_lambda_.1} parent=5 // pred_region
      %s518 = ssub.s32 %s27, 1
      // Predicated region
      $region13: #{_lambda_.1} parent=11 // pred_check
        %p519 = pneg %p100
      $region14: #{_lambda_.1} parent=11 // pred_check_branch
        %521 = sbr.rel (%p519) target = $region16
      $region15: #{_lambda_.1} parent=11 // pred_region
        _
      $region16: #{_lambda_.1} parent=11 // pred_fallthru
        _
      // Predicated region
      $region17: #{_lambda_.1} parent=11 // pred_check
        %p522 = pneg %p121
      $region18: #{_lambda_.1} parent=11 // pred_check_branch
        %524 = sbr.rel (%p522) target = $region20
      $region19: #{_lambda_.1} parent=11 // pred_region
        _
      $region20: #{_lambda_.1} parent=11 // pred_fallthru
        _
      // Predicated region
      $region21: #{_lambda_.1} parent=11 // pred_check
        %p525 = pneg %p142
      $region22: #{_lambda_.1} parent=11 // pred_check_branch
        %527 = sbr.rel (%p525) target = $region24
      $region23: #{_lambda_.1} parent=11 // pred_region
        _
      $region24: #{_lambda_.1} parent=11 // pred_fallthru
        _
      // Predicated region
      $region25: #{_lambda_.1} parent=11 // pred_check
        %p528 = pneg %p163
      $region26: #{_lambda_.1} parent=11 // pred_check_branch
        %530 = sbr.rel (%p528) target = $region28
      $region27: #{_lambda_.1} parent=11 // pred_region
        _
      $region28: #{_lambda_.1} parent=11 // pred_fallthru
        _
      // Predicated region
      $region29: #{_lambda_.1} parent=11 // pred_check
        %p531 = pneg %p184
      $region30: #{_lambda_.1} parent=11 // pred_check_branch
        %533 = sbr.rel (%p531) target = $region32
      $region31: #{_lambda_.1} parent=11 // pred_region
        _
      $region32: #{_lambda_.1} parent=11 // pred_fallthru
        _
      // Predicated region
      $region33: #{_lambda_.1} parent=11 // pred_check
        %p534 = pneg %p205
      $region34: #{_lambda_.1} parent=11 // pred_check_branch
        %536 = sbr.rel (%p534) target = $region36
      $region35: #{_lambda_.1} parent=11 // pred_region
        _
      $region36: #{_lambda_.1} parent=11 // pred_fallthru
        _
      // Predicated region
      $region37: #{_lambda_.1} parent=11 // pred_check
        %p537 = pneg %p226
      $region38: #{_lambda_.1} parent=11 // pred_check_branch
        %539 = sbr.rel (%p537) target = $region40
      $region39: #{_lambda_.1} parent=11 // pred_region
        _
      $region40: #{_lambda_.1} parent=11 // pred_fallthru
        _
      // Predicated region
      $region41: #{_lambda_.1} parent=11 // pred_check
        %p540 = pneg %p247
      $region42: #{_lambda_.1} parent=11 // pred_check_branch
        %542 = sbr.rel (%p540) target = $region44
      $region43: #{_lambda_.1} parent=11 // pred_region
        _
      $region44: #{_lambda_.1} parent=11 // pred_fallthru
        _
      // Predicated region
      $region45: #{_lambda_.1} parent=11 // pred_check
        %p543 = pneg %p268
      $region46: #{_lambda_.1} parent=11 // pred_check_branch
        %545 = sbr.rel (%p543) target = $region48
      $region47: #{_lambda_.1} parent=11 // pred_region
        _
      $region48: #{_lambda_.1} parent=11 // pred_fallthru
        _
      // Predicated region
      $region49: #{_lambda_.1} parent=11 // pred_check
        %p546 = pneg %p289
      $region50: #{_lambda_.1} parent=11 // pred_check_branch
        %548 = sbr.rel (%p546) target = $region52
      $region51: #{_lambda_.1} parent=11 // pred_region
        _
      $region52: #{_lambda_.1} parent=11 // pred_fallthru
        _
      // Predicated region
      $region53: #{_lambda_.1} parent=11 // pred_check
        %p549 = pneg %p310
      $region54: #{_lambda_.1} parent=11 // pred_check_branch
        %551 = sbr.rel (%p549) target = $region56
      $region55: #{_lambda_.1} parent=11 // pred_region
        _
      $region56: #{_lambda_.1} parent=11 // pred_fallthru
        _
      // Predicated region
      $region57: #{_lambda_.1} parent=11 // pred_check
        %p552 = pneg %p331
      $region58: #{_lambda_.1} parent=11 // pred_check_branch
        %554 = sbr.rel (%p552) target = $region60
      $region59: #{_lambda_.1} parent=11 // pred_region
        _
      $region60: #{_lambda_.1} parent=11 // pred_fallthru
        _
      // Predicated region
      $region61: #{_lambda_.1} parent=11 // pred_check
        %p555 = pneg %p352
      $region62: #{_lambda_.1} parent=11 // pred_check_branch
        %557 = sbr.rel (%p555) target = $region64
      $region63: #{_lambda_.1} parent=11 // pred_region
        _
      $region64: #{_lambda_.1} parent=11 // pred_fallthru
        _
      // Predicated region
      $region65: #{_lambda_.1} parent=11 // pred_check
        %p558 = pneg %p373
      $region66: #{_lambda_.1} parent=11 // pred_check_branch
        %560 = sbr.rel (%p558) target = $region68
      $region67: #{_lambda_.1} parent=11 // pred_region
        _
      $region68: #{_lambda_.1} parent=11 // pred_fallthru
        _
      // Predicated region
      $region69: #{_lambda_.1} parent=11 // pred_check
        %p561 = pneg %p394
      $region70: #{_lambda_.1} parent=11 // pred_check_branch
        %563 = sbr.rel (%p561) target = $region72
      $region71: #{_lambda_.1} parent=11 // pred_region
        _
      $region72: #{_lambda_.1} parent=11 // pred_fallthru
        _
      // Predicated region
      $region73: #{_lambda_.1} parent=11 // pred_check
        %p564 = pneg %p415
      $region74: #{_lambda_.1} parent=11 // pred_check_branch
        %566 = sbr.rel (%p564) target = $region76
      $region75: #{_lambda_.1} parent=11 // pred_region
        _
      $region76: #{_lambda_.1} parent=11 // pred_fallthru
        _
      // Predicated region
      $region77: #{_lambda_.1} parent=11 // pred_check
        %p567 = pneg %p436
      $region78: #{_lambda_.1} parent=11 // pred_check_branch
        %569 = sbr.rel (%p567) target = $region80
      $region79: #{_lambda_.1} parent=11 // pred_region
        _
      $region80: #{_lambda_.1} parent=11 // pred_fallthru
        _
      // Predicated region
      $region81: #{_lambda_.1} parent=11 // pred_check
        %p570 = pneg %p457
      $region82: #{_lambda_.1} parent=11 // pred_check_branch
        %572 = sbr.rel (%p570) target = $region84
      $region83: #{_lambda_.1} parent=11 // pred_region
        _
      $region84: #{_lambda_.1} parent=11 // pred_fallthru
        _
      // Predicated region
      $region85: #{_lambda_.1} parent=11 // pred_check
        %p573 = pneg %p478
      $region86: #{_lambda_.1} parent=11 // pred_check_branch
        %575 = sbr.rel (%p573) target = $region88
      $region87: #{_lambda_.1} parent=11 // pred_region
        _
      $region88: #{_lambda_.1} parent=11 // pred_fallthru
        _
    $region12: #{_lambda_.1} parent=5 // pred_fallthru
      _
    %p576 = scmp.lt.s32.totalorder %s27, 2
    // Predicated region
    $region89: #{_lambda_.1} parent=5 // pred_check
      %p577 = pneg %p576
    $region90: #{_lambda_.1} parent=5 // pred_check_branch
      %579 = sbr.rel (%p577) target = $region92
    $region91: #{_lambda_.1} parent=5 // pred_region
      // Predicated region
      $region93: #{_lambda_.1} parent=91 // pred_check
        %p580 = pneg %p47
      $region94: #{_lambda_.1} parent=91 // pred_check_branch
        %582 = sbr.rel (%p580) target = $region96
      $region95: #{_lambda_.1} parent=91 // pred_region
        %p583 = scmp.lt.s32.totalorder %s27, 1
        %s584 = scalar_select %p583, %s27, 1
        %s585 = smul.addr %s584, 8
        %s586 = scalar_lea.vmem %s0, %s585
      $region96: #{_lambda_.1} parent=91 // pred_fallthru
        _
      // Predicated region
      $region97: #{_lambda_.1} parent=91 // pred_check
        %p587 = pneg %p73
      $region98: #{_lambda_.1} parent=91 // pred_check_branch
        %589 = sbr.rel (%p587) target = $region100
      $region99: #{_lambda_.1} parent=91 // pred_region
        %p590 = scmp.lt.s32.totalorder %s27, 1
        %s591 = scalar_select %p590, %s27, 1
        %s592 = smul.addr %s591, 8
        %s593 = scalar_lea.vmem %s1, %s592
      $region100: #{_lambda_.1} parent=91 // pred_fallthru
        _
    $region92: #{_lambda_.1} parent=5 // pred_fallthru
      _
    %p594 = scmp.le.s32.totalorder 1, %s27
    %p595 = scmp.lt.s32.totalorder %s27, 3
    %p596 = pnand %p594, %p595
    %p597 = pneg %p596
    // Predicated region
    $region101: #{_lambda_.1} parent=5 // pred_check
      _
    $region102: #{_lambda_.1} parent=5 // pred_check_branch
      %599 = sbr.rel (%p596) target = $region104
    $region103: #{_lambda_.1} parent=5 // pred_region
      %s600 = ssub.s32 %s27, 1
      %p601 = scmp.lt.s32.totalorder %s32, 1
      %s602 = scalar_select %p601, %s32, 1
      %s603 = smul.addr %s602, 8
      %s604 = scalar_lea.vmem %s0, %s603
      %p605 = pneg %p53
      %p606 = pneg %p50
      %p607 = scmp.lt.s32.totalorder %s32, 1
      %s608 = scalar_select %p607, %s32, 1
      %s609 = smul.addr %s608, 8
      %s610 = scalar_lea.vmem %s1, %s609
      %p611 = pneg %p79
      %p612 = pneg %p76
      %p613 = pneg %p100
      %p614 = pneg %p97
      %p615 = pneg %p121
      %p616 = pneg %p118
      %p617 = pneg %p142
      %p618 = pneg %p139
      %p619 = pneg %p163
      %p620 = pneg %p160
      %p621 = pneg %p184
      %p622 = pneg %p181
      %p623 = pneg %p205
      %p624 = pneg %p202
      %p625 = pneg %p226
      %p626 = pneg %p223
      %p627 = pneg %p247
      %p628 = pneg %p244
      %p629 = pneg %p268
      %p630 = pneg %p265
      %p631 = pneg %p289
      %p632 = pneg %p286
      %p633 = pneg %p310
      %p634 = pneg %p307
      %p635 = pneg %p331
      %p636 = pneg %p328
      %p637 = pneg %p352
      %p638 = pneg %p349
      %p639 = pneg %p373
      %p640 = pneg %p370
      %p641 = pneg %p394
      %p642 = pneg %p391
      %p643 = pneg %p415
      %p644 = pneg %p412
      %p645 = pneg %p436
      %p646 = pneg %p433
      %p647 = pneg %p457
      %p648 = pneg %p454
      %p649 = pneg %p478
      %p650 = pneg %p475
      %p651 = pneg %p504
      %p652 = pneg %p501
      %p653 = scmp.lt.s32.totalorder %s32, 1
      %s654 = scalar_select %p653, %s32, 1
      %s655 = smul.addr %s654, 8
      %s656 = scalar_lea.vmem %s21, %s655
      %p657 = scmp.lt.s32.totalorder %s32, 1
      %s658 = scalar_select %p657, %s32, 1
      %s659 = smul.addr %s658, 8
      %s660 = scalar_lea.vmem %s0, %s659
      %p661 = scmp.lt.s32.totalorder %s32, 1
      %s662 = scalar_select %p661, %s32, 1
      %s663 = smul.addr %s662, 8
      %s664 = scalar_lea.vmem %s1, %s663
      %p665 = scmp.lt.s32.totalorder %s32, 1
      %s666 = scalar_select %p665, %s32, 1
      %s667 = smul.addr %s666, 8
      %s668 = scalar_lea.vmem %s21, %s667
      %v670 = vld [vmem:[%s660] sm:$0xff]
      %v671 = vpack.c.bf16 %v670, %v670
      %v672 = vld [vmem:[%s4] sm:$0xf]
      %v673 = vld [vmem:[%s4 + $0x4] sm:$0xf]
      %v674 = vld [vmem:[%s4 + $0x8] sm:$0xf]
      %v675 = vld [vmem:[%s4 + $0xc] sm:$0xf]
      %v676 = vld [vmem:[%s2] sm:$0xff]
      %v681 = vunpack.c.l.b16 %v672
      %v682 = vunpack.c.l.b16 %v673
      %v683 = vunpack.c.l.b16 %v674
      %v684 = vunpack.c.l.b16 %v675
      %v685 = vpack.c.b16 %v682, %v681
      %v686 = vpack.c.b16 %v684, %v683
      %vm689 = vcmask 261120
      %v691 = vsel %vm689, %v671, 0
      %693 = vmatpush.bf16.msra.mxu0 0
      %694 = vmatpush.bf16.msra.mxu0 0
      %695 = vmatpush.bf16.msra.mxu0 0
      %696 = vmatpush.bf16.msra.mxu0 0
      %697 = vmatpush.bf16.msra.mxu0 0
      %698 = vmatpush.bf16.msra.mxu0 0
      %699 = vmatpush.bf16.msra.mxu0 %v686
      %700 = vmatpush.bf16.msra.mxu0 %v685
      %701 = vmatmul.bf16.gmra.mxu0 %v691
      %v702 = vpop.f32.mrf.mxu0
      %v703 = vadd.f32 %v676, %v702
      %v704 = vpop.f32.mrf.mxu0
      %705 = vdwg.mxu0
      %v706 = vld [vmem:[%s6] sm:$0xf]
      %v707 = vld [vmem:[%s6 + $0x4] sm:$0xf]
      %v708 = vld [vmem:[%s6 + $0x8] sm:$0xf]
      %v709 = vld [vmem:[%s6 + $0xc] sm:$0xf]
      %v710 = vld [vmem:[%s6 + $0x10] sm:$0xf]
      %v711 = vld [vmem:[%s6 + $0x14] sm:$0xf]
      %v712 = vld [vmem:[%s6 + $0x18] sm:$0xf]
      %v713 = vld [vmem:[%s6 + $0x1c] sm:$0xf]
      %v714 = vld [vmem:[%s6 + $0x20] sm:$0xf]
      %v715 = vld [vmem:[%s6 + $0x24] sm:$0xf]
      %v716 = vld [vmem:[%s6 + $0x28] sm:$0xf]
      %v717 = vld [vmem:[%s6 + $0x2c] sm:$0xf]
      %v718 = vld [vmem:[%s6 + $0x30] sm:$0xf]
      %v719 = vld [vmem:[%s6 + $0x34] sm:$0xf]
      %v720 = vld [vmem:[%s6 + $0x38] sm:$0xf]
      %v721 = vld [vmem:[%s6 + $0x3c] sm:$0xf]
      %v722 = vld [vmem:[%s7] sm:$0xf]
      %v723 = vld [vmem:[%s7 + $0x4] sm:$0xf]
      %v724 = vld [vmem:[%s7 + $0x8] sm:$0xf]
      %v725 = vld [vmem:[%s7 + $0xc] sm:$0xf]
      %v726 = vld [vmem:[%s8] sm:$0xf]
      %v727 = vld [vmem:[%s8 + $0x4] sm:$0xf]
      %v728 = vld [vmem:[%s8 + $0x8] sm:$0xf]
      %v729 = vld [vmem:[%s8 + $0xc] sm:$0xf]
      %v730 = vld [vmem:[%s8 + $0x10] sm:$0xf]
      %v731 = vld [vmem:[%s8 + $0x14] sm:$0xf]
      %v732 = vld [vmem:[%s8 + $0x18] sm:$0xf]
      %v733 = vld [vmem:[%s8 + $0x1c] sm:$0xf]
      %v734 = vld [vmem:[%s8 + $0x20] sm:$0xf]
      %v735 = vld [vmem:[%s8 + $0x24] sm:$0xf]
      %v736 = vld [vmem:[%s8 + $0x28] sm:$0xf]
      %v737 = vld [vmem:[%s8 + $0x2c] sm:$0xf]
      %v738 = vld [vmem:[%s8 + $0x30] sm:$0xf]
      %v739 = vld [vmem:[%s8 + $0x34] sm:$0xf]
      %v740 = vld [vmem:[%s8 + $0x38] sm:$0xf]
      %v741 = vld [vmem:[%s8 + $0x3c] sm:$0xf]
      %v742 = vld [vmem:[%s9] sm:$0xf]
      %v743 = vld [vmem:[%s9 + $0x4] sm:$0xf]
      %v744 = vld [vmem:[%s9 + $0x8] sm:$0xf]
      %v745 = vld [vmem:[%s9 + $0xc] sm:$0xf]
      %v746 = vld [vmem:[%s9 + $0x10] sm:$0xf]
      %v747 = vld [vmem:[%s9 + $0x14] sm:$0xf]
      %v748 = vld [vmem:[%s9 + $0x18] sm:$0xf]
      %v749 = vld [vmem:[%s9 + $0x1c] sm:$0xf]
      %v750 = vld [vmem:[%s9 + $0x20] sm:$0xf]
      %v751 = vld [vmem:[%s9 + $0x24] sm:$0xf]
      %v752 = vld [vmem:[%s9 + $0x28] sm:$0xf]
      %v753 = vld [vmem:[%s9 + $0x2c] sm:$0xf]
      %v754 = vld [vmem:[%s9 + $0x30] sm:$0xf]
      %v755 = vld [vmem:[%s9 + $0x34] sm:$0xf]
      %v756 = vld [vmem:[%s9 + $0x38] sm:$0xf]
      %v757 = vld [vmem:[%s9 + $0x3c] sm:$0xf]
      %v758 = vld [vmem:[%s10] sm:$0xff]
      %v759 = vpack.c.bf16 %v703, %v703
      %v760 = vperm.slane %v758, 0
      %v777 = vunpack.c.l.b16 %v706
      %v778 = vunpack.c.l.b16 %v707
      %v779 = vunpack.c.l.b16 %v708
      %v780 = vunpack.c.l.b16 %v709
      %v781 = vunpack.c.l.b16 %v710
      %v782 = vunpack.c.l.b16 %v711
      %v783 = vunpack.c.l.b16 %v712
      %v784 = vunpack.c.l.b16 %v713
      %v785 = vunpack.c.l.b16 %v714
      %v786 = vunpack.c.l.b16 %v715
      %v787 = vunpack.c.l.b16 %v716
      %v788 = vunpack.c.l.b16 %v717
      %v789 = vunpack.c.l.b16 %v718
      %v790 = vunpack.c.l.b16 %v719
      %v791 = vunpack.c.l.b16 %v720
      %v792 = vunpack.c.l.b16 %v721
      %v793 = vpack.c.b16 %v778, %v777
      %v794 = vpack.c.b16 %v780, %v779
      %v795 = vpack.c.b16 %v782, %v781
      %v796 = vpack.c.b16 %v784, %v783
      %v797 = vpack.c.b16 %v786, %v785
      %v798 = vpack.c.b16 %v788, %v787
      %v799 = vpack.c.b16 %v790, %v789
      %v800 = vpack.c.b16 %v792, %v791
      %809 = vmatpush.bf16.msra.mxu0 %v800
      %810 = vmatpush.bf16.msra.mxu0 %v799
      %811 = vmatpush.bf16.msra.mxu0 %v798
      %812 = vmatpush.bf16.msra.mxu0 %v797
      %813 = vmatpush.bf16.msra.mxu0 %v796
      %814 = vmatpush.bf16.msra.mxu0 %v795
      %815 = vmatpush.bf16.msra.mxu0 %v794
      %816 = vmatpush.bf16.msra.mxu0 %v793
      %817 = vmatmul.bf16.gmra.mxu0 %v759
      %v818 = vpop.f32.mrf.mxu0
      %v819 = vadd.f32 %v760, %v818
      %v820 = vpop.f32.mrf.mxu0
      %821 = vdwg.mxu0
      %v822 = vpack.c.bf16 %v819, %v819
      %824 = vrot.lane.b32.xlu0 %v822, 120
      %v825 = vpop.permute.xlu0 %824
      %826 = vrot.lane.b32.xlu0 %v822, 112
      %v827 = vpop.permute.xlu0 %826
      %828 = vrot.lane.b32.xlu0 %v822, 104
      %v829 = vpop.permute.xlu0 %828
      %v830 = vunpack.c.l.b16 %v822
      %v831 = vpack.c.b16 %v830, %v830
      %832 = vrot.lane.b32.xlu0 %v831, 96
      %v833 = vpop.permute.xlu0 %832
      %vm834 = vcmask 64512
      %v836 = vsel %vm834, %v822, 0
      %v839 = vsel %vm834, %v833, 0
      %841 = vmatpush.bf16.xpose.msra.mxu0 0
      %842 = vmatpush.bf16.xpose.msra.mxu0 0
      %843 = vmatpush.bf16.xpose.msra.mxu0 0
      %844 = vmatpush.bf16.xpose.msra.mxu0 0
      %845 = vmatpush.bf16.xpose.msra.mxu0 0
      %846 = vmatpush.bf16.xpose.msra.mxu0 0
      %847 = vmatpush.bf16.xpose.msra.mxu0 0
      %848 = vmatpush.bf16.xpose.msra.mxu0 %v839
      %849 = vmatmul.bf16.gmra.mxu0 %v836
      %v850 = vpop.f32.mrf.mxu0
      %v851 = vadd.f32 0.0, %v850
      %v852 = vpop.f32.mrf.mxu0
      %853 = vdwg.mxu0
      %v854 = vunpack.c.l.b16 %v825
      %v855 = vpack.c.b16 %v854, %v854
      %856 = vrot.lane.b32.xlu0 %v855, 96
      %v857 = vpop.permute.xlu0 %856
      %v859 = vsel %vm834, %v825, 0
      %v862 = vsel %vm834, %v857, 0
      %864 = vmatpush.bf16.xpose.msra.mxu0 0
      %865 = vmatpush.bf16.xpose.msra.mxu0 0
      %866 = vmatpush.bf16.xpose.msra.mxu0 0
      %867 = vmatpush.bf16.xpose.msra.mxu0 0
      %868 = vmatpush.bf16.xpose.msra.mxu0 0
      %869 = vmatpush.bf16.xpose.msra.mxu0 0
      %870 = vmatpush.bf16.xpose.msra.mxu0 0
      %871 = vmatpush.bf16.xpose.msra.mxu0 %v862
      %872 = vmatmul.bf16.gmra.mxu0 %v859
      %v873 = vpop.f32.mrf.mxu0
      %v874 = vadd.f32 0.0, %v873
      %v875 = vpop.f32.mrf.mxu0
      %876 = vdwg.mxu0
      %v877 = vunpack.c.l.b16 %v827
      %v878 = vpack.c.b16 %v877, %v877
      %879 = vrot.lane.b32.xlu0 %v878, 96
      %v880 = vpop.permute.xlu0 %879
      %v882 = vsel %vm834, %v827, 0
      %v885 = vsel %vm834, %v880, 0
      %887 = vmatpush.bf16.xpose.msra.mxu0 0
      %888 = vmatpush.bf16.xpose.msra.mxu0 0
      %889 = vmatpush.bf16.xpose.msra.mxu0 0
      %890 = vmatpush.bf16.xpose.msra.mxu0 0
      %891 = vmatpush.bf16.xpose.msra.mxu0 0
      %892 = vmatpush.bf16.xpose.msra.mxu0 0
      %893 = vmatpush.bf16.xpose.msra.mxu0 0
      %894 = vmatpush.bf16.xpose.msra.mxu0 %v885
      %895 = vmatmul.bf16.gmra.mxu0 %v882
      %v896 = vpop.f32.mrf.mxu0
      %v897 = vadd.f32 0.0, %v896
      %v898 = vpop.f32.mrf.mxu0
      %899 = vdwg.mxu0
      %v900 = vunpack.c.l.b16 %v829
      %v901 = vpack.c.b16 %v900, %v900
      %902 = vrot.lane.b32.xlu0 %v901, 96
      %v903 = vpop.permute.xlu0 %902
      %v905 = vsel %vm834, %v829, 0
      %v908 = vsel %vm834, %v903, 0
      %910 = vmatpush.bf16.xpose.msra.mxu0 0
      %911 = vmatpush.bf16.xpose.msra.mxu0 0
      %912 = vmatpush.bf16.xpose.msra.mxu0 0
      %913 = vmatpush.bf16.xpose.msra.mxu0 0
      %914 = vmatpush.bf16.xpose.msra.mxu0 0
      %915 = vmatpush.bf16.xpose.msra.mxu0 0
      %916 = vmatpush.bf16.xpose.msra.mxu0 0
      %917 = vmatpush.bf16.xpose.msra.mxu0 %v908
      %918 = vmatmul.bf16.gmra.mxu0 %v905
      %v919 = vpop.f32.mrf.mxu0
      %v920 = vadd.f32 0.0, %v919
      %v921 = vpop.f32.mrf.mxu0
      %922 = vdwg.mxu0
      %v923 = vmul.f32 %v851, 0.35355338
      %v924 = vmul.f32 %v874, 0.35355338
      %v925 = vmul.f32 %v897, 0.35355338
      %v926 = vmul.f32 %v920, 0.35355338
      %v927 = vsel %vm834, %v923, -inf
      %928 = vmax.xlane.f32.xlu0 %v927
      %v929 = vpop.xlane.xlu0 %928
      %v930 = vsel %vm834, %v924, -inf
      %931 = vmax.xlane.f32.xlu0 %v930
      %v932 = vpop.xlane.xlu0 %931
      %v933 = vsel %vm834, %v925, -inf
      %934 = vmax.xlane.f32.xlu0 %v933
      %v935 = vpop.xlane.xlu0 %934
      %v936 = vsel %vm834, %v926, -inf
      %937 = vmax.xlane.f32.xlu0 %v936
      %v938 = vpop.xlane.xlu0 %937
      %v939 = vsub.f32 %v923, %v929
      %v940 = vsub.f32 %v924, %v932
      %v941 = vsub.f32 %v925, %v935
      %v942 = vsub.f32 %v926, %v938
      %v943 = vmul.f32 %v939, 1.442695
      %v944 = vpow.pop %v943
      %v945 = vmul.f32 %v940, 1.442695
      %v946 = vpow.pop %v945
      %v947 = vmul.f32 %v941, 1.442695
      %v948 = vpow.pop %v947
      %v949 = vmul.f32 %v942, 1.442695
      %v950 = vpow.pop %v949
      %v951 = vsel %vm834, %v944, 0.0
      %952 = vadd.xlane.f32.xlu0 %v951
      %v953 = vpop.xlane.xlu0 %952
      %v954 = vsel %vm834, %v946, 0.0
      %955 = vadd.xlane.f32.xlu0 %v954
      %v956 = vpop.xlane.xlu0 %955
      %v957 = vsel %vm834, %v948, 0.0
      %958 = vadd.xlane.f32.xlu0 %v957
      %v959 = vpop.xlane.xlu0 %958
      %v960 = vsel %vm834, %v950, 0.0
      %961 = vadd.xlane.f32.xlu0 %v960
      %v962 = vpop.xlane.xlu0 %961
      %v963 = vrcp.pop %v953
      %v964 = vrcp.pop %v956
      %v965 = vrcp.pop %v959
      %v966 = vrcp.pop %v962
      %v967 = vmul.f32 %v944, %v963
      %v968 = vmul.f32 %v946, %v964
      %v969 = vmul.f32 %v948, %v965
      %v970 = vmul.f32 %v950, %v966
      %v971 = vpack.c.bf16 %v967, %v967
      %v972 = vpack.c.bf16 %v968, %v968
      %v973 = vpack.c.bf16 %v969, %v969
      %v974 = vpack.c.bf16 %v970, %v970
      %975 = vrot.lane.b32.xlu0 %v831, 64
      %v976 = vpop.permute.xlu0 %975
      %v978 = vsel %vm834, %v971, 0
      %vm980 = vcmask 1043456
      %v982 = vsel %vm980, %v976, 0
      %984 = vmatpush.bf16.msra.mxu0 0
      %985 = vmatpush.bf16.msra.mxu0 0
      %986 = vmatpush.bf16.msra.mxu0 0
      %987 = vmatpush.bf16.msra.mxu0 0
      %988 = vmatpush.bf16.msra.mxu0 0
      %989 = vmatpush.bf16.msra.mxu0 0
      %990 = vmatpush.bf16.msra.mxu0 0
      %991 = vmatpush.bf16.msra.mxu0 %v982
      %992 = vmatmul.bf16.gmra.mxu0 %v978
      %v993 = vpop.f32.mrf.mxu0
      %v994 = vadd.f32 0.0, %v993
      %v995 = vpop.f32.mrf.mxu0
      %996 = vdwg.mxu0
      %997 = vrot.lane.b32.xlu0 %v855, 64
      %v998 = vpop.permute.xlu0 %997
      %v1000 = vsel %vm834, %v972, 0
      %v1003 = vsel %vm980, %v998, 0
      %1005 = vmatpush.bf16.msra.mxu0 0
      %1006 = vmatpush.bf16.msra.mxu0 0
      %1007 = vmatpush.bf16.msra.mxu0 0
      %1008 = vmatpush.bf16.msra.mxu0 0
      %1009 = vmatpush.bf16.msra.mxu0 0
      %1010 = vmatpush.bf16.msra.mxu0 0
      %1011 = vmatpush.bf16.msra.mxu0 0
      %1012 = vmatpush.bf16.msra.mxu0 %v1003
      %1013 = vmatmul.bf16.gmra.mxu0 %v1000
      %v1014 = vpop.f32.mrf.mxu0
      %v1015 = vadd.f32 0.0, %v1014
      %v1016 = vpop.f32.mrf.mxu0
      %1017 = vdwg.mxu0
      %1018 = vrot.lane.b32.xlu0 %v878, 64
      %v1019 = vpop.permute.xlu0 %1018
      %v1021 = vsel %vm834, %v973, 0
      %v1024 = vsel %vm980, %v1019, 0
      %1026 = vmatpush.bf16.msra.mxu0 0
      %1027 = vmatpush.bf16.msra.mxu0 0
      %1028 = vmatpush.bf16.msra.mxu0 0
      %1029 = vmatpush.bf16.msra.mxu0 0
      %1030 = vmatpush.bf16.msra.mxu0 0
      %1031 = vmatpush.bf16.msra.mxu0 0
      %1032 = vmatpush.bf16.msra.mxu0 0
      %1033 = vmatpush.bf16.msra.mxu0 %v1024
      %1034 = vmatmul.bf16.gmra.mxu0 %v1021
      %v1035 = vpop.f32.mrf.mxu0
      %v1036 = vadd.f32 0.0, %v1035
      %v1037 = vpop.f32.mrf.mxu0
      %1038 = vdwg.mxu0
      %1039 = vrot.lane.b32.xlu0 %v901, 64
      %v1040 = vpop.permute.xlu0 %1039
      %v1042 = vsel %vm834, %v974, 0
      %v1045 = vsel %vm980, %v1040, 0
      %1047 = vmatpush.bf16.msra.mxu0 0
      %1048 = vmatpush.bf16.msra.mxu0 0
      %1049 = vmatpush.bf16.msra.mxu0 0
      %1050 = vmatpush.bf16.msra.mxu0 0
      %1051 = vmatpush.bf16.msra.mxu0 0
      %1052 = vmatpush.bf16.msra.mxu0 0
      %1053 = vmatpush.bf16.msra.mxu0 0
      %1054 = vmatpush.bf16.msra.mxu0 %v1045
      %1055 = vmatmul.bf16.gmra.mxu0 %v1042
      %v1056 = vpop.f32.mrf.mxu0
      %v1057 = vadd.f32 0.0, %v1056
      %v1058 = vpop.f32.mrf.mxu0
      %1059 = vdwg.mxu0
      %1061 = vrot.lane.b32.xlu0 %v1015, 8
      %v1062 = vpop.permute.xlu0 %1061
      %1065 = vrot.lane.b32.xlu0 %v1036, 16
      %v1066 = vpop.permute.xlu0 %1065
      %1069 = vrot.lane.b32.xlu0 %v1057, 24
      %v1070 = vpop.permute.xlu0 %1069
      %v1072 = vsel %vm834, %v994, %v1062
      %vm1073 = vcmask 130048
      %v1074 = vsel %vm1073, %v1072, %v1066
      %vm1075 = vcmask 195584
      %v1076 = vsel %vm1075, %v1074, %v1070
      %v1077 = vpack.c.bf16 %v1076, %v1076
      %v1078 = vperm.slane %v758, 1
      %v1083 = vunpack.c.l.b16 %v722
      %v1084 = vunpack.c.l.b16 %v723
      %v1085 = vunpack.c.l.b16 %v724
      %v1086 = vunpack.c.l.b16 %v725
      %v1087 = vpack.c.b16 %v1084, %v1083
      %v1088 = vpack.c.b16 %v1086, %v1085
      %v1092 = vsel %vm689, %v1077, 0
      %1094 = vmatpush.bf16.msra.mxu0 0
      %1095 = vmatpush.bf16.msra.mxu0 0
      %1096 = vmatpush.bf16.msra.mxu0 0
      %1097 = vmatpush.bf16.msra.mxu0 0
      %1098 = vmatpush.bf16.msra.mxu0 0
      %1099 = vmatpush.bf16.msra.mxu0 0
      %1100 = vmatpush.bf16.msra.mxu0 %v1088
      %1101 = vmatpush.bf16.msra.mxu0 %v1087
      %1102 = vmatmul.bf16.gmra.mxu0 %v1092
      %v1103 = vpop.f32.mrf.mxu0
      %v1104 = vadd.f32 %v1078, %v1103
      %v1105 = vpop.f32.mrf.mxu0
      %1106 = vdwg.mxu0
      %v1107 = vadd.f32 %v703, %v1104
      %1108 = vadd.xlane.f32.xlu0 %v1107
      %v1109 = vpop.xlane.xlu0 %1108
      %v1110 = vmul.f32 %v1109, 0.03125
      %v1111 = vmul.f32 %v1107, %v1107
      %1112 = vadd.xlane.f32.xlu0 %v1111
      %v1113 = vpop.xlane.xlu0 %1112
      %v1114 = vmul.f32 %v1113, 0.03125
      %v1115 = vmul.f32 %v1110, %v1110
      %v1116 = vsub.f32 %v1114, %v1115
      %v1117 = vsub.f32 %v1107, %v1110
      %v1118 = vadd.f32 %v1116, 1e-05
      %v1119 = vrsqrt.pop %v1118
      %v1120 = vmul.f32 %v1119, %v1118
      %v1121 = vmul.f32 %v1120, %v1119
      %v1122 = vmul.f32 0.5, %v1121
      %v1123 = vsub.f32 1.5, %v1122
      %v1124 = vmul.f32 %v1119, %v1123
      %vm1125 = vweird.f32 %v1118
      %vm1126 = vweird.f32 %v1119
      %vm1127 = vmor %vm1125, %vm1126
      %v1128 = vsel %vm1127, %v1119, %v1124
      %v1129 = vmul.f32 %v1117, %v1128
      %v1130 = vperm.slane %v758, 2
      %v1131 = vmul.f32 %v1129, %v1130
      %v1132 = vperm.slane %v758, 3
      %v1133 = vadd.f32 %v1131, %v1132
      %v1134 = vpack.c.bf16 %v1133, %v1133
      %v1135 = vperm.slane %v758, 4
      %v1152 = vunpack.c.l.b16 %v726
      %v1153 = vunpack.c.l.b16 %v727
      %v1154 = vunpack.c.l.b16 %v728
      %v1155 = vunpack.c.l.b16 %v729
      %v1156 = vunpack.c.l.b16 %v730
      %v1157 = vunpack.c.l.b16 %v731
      %v1158 = vunpack.c.l.b16 %v732
      %v1159 = vunpack.c.l.b16 %v733
      %v1160 = vunpack.c.l.b16 %v734
      %v1161 = vunpack.c.l.b16 %v735
      %v1162 = vunpack.c.l.b16 %v736
      %v1163 = vunpack.c.l.b16 %v737
      %v1164 = vunpack.c.l.b16 %v738
      %v1165 = vunpack.c.l.b16 %v739
      %v1166 = vunpack.c.l.b16 %v740
      %v1167 = vunpack.c.l.b16 %v741
      %v1168 = vpack.c.b16 %v1153, %v1152
      %v1169 = vpack.c.b16 %v1155, %v1154
      %v1170 = vpack.c.b16 %v1157, %v1156
      %v1171 = vpack.c.b16 %v1159, %v1158
      %v1172 = vpack.c.b16 %v1161, %v1160
      %v1173 = vpack.c.b16 %v1163, %v1162
      %v1174 = vpack.c.b16 %v1165, %v1164
      %v1175 = vpack.c.b16 %v1167, %v1166
      %1184 = vmatpush.bf16.msra.mxu0 %v1175
      %1185 = vmatpush.bf16.msra.mxu0 %v1174
      %1186 = vmatpush.bf16.msra.mxu0 %v1173
      %1187 = vmatpush.bf16.msra.mxu0 %v1172
      %1188 = vmatpush.bf16.msra.mxu0 %v1171
      %1189 = vmatpush.bf16.msra.mxu0 %v1170
      %1190 = vmatpush.bf16.msra.mxu0 %v1169
      %1191 = vmatpush.bf16.msra.mxu0 %v1168
      %1192 = vmatmul.bf16.gmra.mxu0 %v1134
      %v1193 = vpop.f32.mrf.mxu0
      %v1194 = vadd.f32 %v1135, %v1193
      %v1195 = vpop.f32.mrf.mxu0
      %1196 = vdwg.mxu0
      %v1197 = vmul.f32 %v1194, %v1194
      %v1198 = vmul.f32 %v1194, %v1197
      %v1199 = vmul.f32 %v1198, 0.044715
      %v1200 = vadd.f32 %v1194, %v1199
      %v1201 = vmul.f32 %v1200, 0.7978846
      %v1202 = vtanh.pop %v1201
      %v1203 = vadd.f32 %v1202, 1.0
      %v1204 = vmul.f32 %v1203, 0.5
      %v1205 = vmul.f32 %v1194, %v1204
      %v1206 = vpack.c.bf16 %v1205, %v1205
      %v1207 = vperm.slane %v758, 5
      %v1224 = vunpack.c.l.b16 %v742
      %v1225 = vunpack.c.l.b16 %v743
      %v1226 = vunpack.c.l.b16 %v744
      %v1227 = vunpack.c.l.b16 %v745
      %v1228 = vunpack.c.l.b16 %v746
      %v1229 = vunpack.c.l.b16 %v747
      %v1230 = vunpack.c.l.b16 %v748
      %v1231 = vunpack.c.l.b16 %v749
      %v1232 = vunpack.c.l.b16 %v750
      %v1233 = vunpack.c.l.b16 %v751
      %v1234 = vunpack.c.l.b16 %v752
      %v1235 = vunpack.c.l.b16 %v753
      %v1236 = vunpack.c.l.b16 %v754
      %v1237 = vunpack.c.l.b16 %v755
      %v1238 = vunpack.c.l.b16 %v756
      %v1239 = vunpack.c.l.b16 %v757
      %v1240 = vpack.c.b16 %v1225, %v1224
      %v1241 = vpack.c.b16 %v1227, %v1226
      %v1242 = vpack.c.b16 %v1229, %v1228
      %v1243 = vpack.c.b16 %v1231, %v1230
      %v1244 = vpack.c.b16 %v1233, %v1232
      %v1245 = vpack.c.b16 %v1235, %v1234
      %v1246 = vpack.c.b16 %v1237, %v1236
      %v1247 = vpack.c.b16 %v1239, %v1238
      %1256 = vmatpush.bf16.msra.mxu0 %v1247
      %1257 = vmatpush.bf16.msra.mxu0 %v1246
      %1258 = vmatpush.bf16.msra.mxu0 %v1245
      %1259 = vmatpush.bf16.msra.mxu0 %v1244
      %1260 = vmatpush.bf16.msra.mxu0 %v1243
      %1261 = vmatpush.bf16.msra.mxu0 %v1242
      %1262 = vmatpush.bf16.msra.mxu0 %v1241
      %1263 = vmatpush.bf16.msra.mxu0 %v1240
      %1264 = vmatmul.bf16.gmra.mxu0 %v1206
      %v1265 = vpop.f32.mrf.mxu0
      %v1266 = vadd.f32 %v1207, %v1265
      %v1267 = vpop.f32.mrf.mxu0
      %1268 = vdwg.mxu0
      %v1269 = vadd.f32 %v1133, %v1266
      %1270 = vadd.xlane.f32.xlu0 %v1269
      %v1271 = vpop.xlane.xlu0 %1270
      %v1272 = vmul.f32 %v1271, 0.03125
      %v1273 = vmul.f32 %v1269, %v1269
      %1274 = vadd.xlane.f32.xlu0 %v1273
      %v1275 = vpop.xlane.xlu0 %1274
      %v1276 = vmul.f32 %v1275, 0.03125
      %v1277 = vmul.f32 %v1272, %v1272
      %v1278 = vsub.f32 %v1276, %v1277
      %v1279 = vsub.f32 %v1269, %v1272
      %v1280 = vadd.f32 %v1278, 1e-05
      %v1281 = vrsqrt.pop %v1280
      %v1282 = vmul.f32 %v1281, %v1280
      %v1283 = vmul.f32 %v1282, %v1281
      %v1284 = vmul.f32 0.5, %v1283
      %v1285 = vsub.f32 1.5, %v1284
      %v1286 = vmul.f32 %v1281, %v1285
      %vm1287 = vweird.f32 %v1280
      %vm1288 = vweird.f32 %v1281
      %vm1289 = vmor %vm1287, %vm1288
      %v1290 = vsel %vm1289, %v1281, %v1286
      %v1291 = vmul.f32 %v1279, %v1290
      %v1292 = vperm.slane %v758, 6
      %v1293 = vmul.f32 %v1291, %v1292
      %v1294 = vperm.slane %v758, 7
      %v1295 = vadd.f32 %v1293, %v1294
      %s1296 = scalar_lea.vmem %s6, 64
      %v1297 = vld [vmem:[%s1296] sm:$0xf]
      %v1298 = vld [vmem:[%s1296 + $0x4] sm:$0xf]
      %v1299 = vld [vmem:[%s1296 + $0x8] sm:$0xf]
      %v1300 = vld [vmem:[%s1296 + $0xc] sm:$0xf]
      %v1301 = vld [vmem:[%s1296 + $0x10] sm:$0xf]
      %v1302 = vld [vmem:[%s1296 + $0x14] sm:$0xf]
      %v1303 = vld [vmem:[%s1296 + $0x18] sm:$0xf]
      %v1304 = vld [vmem:[%s1296 + $0x1c] sm:$0xf]
      %v1305 = vld [vmem:[%s1296 + $0x20] sm:$0xf]
      %v1306 = vld [vmem:[%s1296 + $0x24] sm:$0xf]
      %v1307 = vld [vmem:[%s1296 + $0x28] sm:$0xf]
      %v1308 = vld [vmem:[%s1296 + $0x2c] sm:$0xf]
      %v1309 = vld [vmem:[%s1296 + $0x30] sm:$0xf]
      %v1310 = vld [vmem:[%s1296 + $0x34] sm:$0xf]
      %v1311 = vld [vmem:[%s1296 + $0x38] sm:$0xf]
      %v1312 = vld [vmem:[%s1296 + $0x3c] sm:$0xf]
      %s1313 = scalar_lea.vmem %s7, 16
      %v1314 = vld [vmem:[%s1313] sm:$0xf]
      %v1315 = vld [vmem:[%s1313 + $0x4] sm:$0xf]
      %v1316 = vld [vmem:[%s1313 + $0x8] sm:$0xf]
      %v1317 = vld [vmem:[%s1313 + $0xc] sm:$0xf]
      %s1318 = scalar_lea.vmem %s8, 64
      %v1319 = vld [vmem:[%s1318] sm:$0xf]
      %v1320 = vld [vmem:[%s1318 + $0x4] sm:$0xf]
      %v1321 = vld [vmem:[%s1318 + $0x8] sm:$0xf]
      %v1322 = vld [vmem:[%s1318 + $0xc] sm:$0xf]
      %v1323 = vld [vmem:[%s1318 + $0x10] sm:$0xf]
      %v1324 = vld [vmem:[%s1318 + $0x14] sm:$0xf]
      %v1325 = vld [vmem:[%s1318 + $0x18] sm:$0xf]
      %v1326 = vld [vmem:[%s1318 + $0x1c] sm:$0xf]
      %v1327 = vld [vmem:[%s1318 + $0x20] sm:$0xf]
      %v1328 = vld [vmem:[%s1318 + $0x24] sm:$0xf]
      %v1329 = vld [vmem:[%s1318 + $0x28] sm:$0xf]
      %v1330 = vld [vmem:[%s1318 + $0x2c] sm:$0xf]
      %v1331 = vld [vmem:[%s1318 + $0x30] sm:$0xf]
      %v1332 = vld [vmem:[%s1318 + $0x34] sm:$0xf]
      %v1333 = vld [vmem:[%s1318 + $0x38] sm:$0xf]
      %v1334 = vld [vmem:[%s1318 + $0x3c] sm:$0xf]
      %s1335 = scalar_lea.vmem %s9, 64
      %v1336 = vld [vmem:[%s1335] sm:$0xf]
      %v1337 = vld [vmem:[%s1335 + $0x4] sm:$0xf]
      %v1338 = vld [vmem:[%s1335 + $0x8] sm:$0xf]
      %v1339 = vld [vmem:[%s1335 + $0xc] sm:$0xf]
      %v1340 = vld [vmem:[%s1335 + $0x10] sm:$0xf]
      %v1341 = vld [vmem:[%s1335 + $0x14] sm:$0xf]
      %v1342 = vld [vmem:[%s1335 + $0x18] sm:$0xf]
      %v1343 = vld [vmem:[%s1335 + $0x1c] sm:$0xf]
      %v1344 = vld [vmem:[%s1335 + $0x20] sm:$0xf]
      %v1345 = vld [vmem:[%s1335 + $0x24] sm:$0xf]
      %v1346 = vld [vmem:[%s1335 + $0x28] sm:$0xf]
      %v1347 = vld [vmem:[%s1335 + $0x2c] sm:$0xf]
      %v1348 = vld [vmem:[%s1335 + $0x30] sm:$0xf]
      %v1349 = vld [vmem:[%s1335 + $0x34] sm:$0xf]
      %v1350 = vld [vmem:[%s1335 + $0x38] sm:$0xf]
      %v1351 = vld [vmem:[%s1335 + $0x3c] sm:$0xf]
      %s1352 = scalar_lea.vmem %s10, 8
      %v1353 = vld [vmem:[%s1352] sm:$0xff]
      %v1354 = vpack.c.bf16 %v1295, %v1295
      %v1355 = vperm.slane %v1353, 0
      %v1372 = vunpack.c.l.b16 %v1297
      %v1373 = vunpack.c.l.b16 %v1298
      %v1374 = vunpack.c.l.b16 %v1299
      %v1375 = vunpack.c.l.b16 %v1300
      %v1376 = vunpack.c.l.b16 %v1301
      %v1377 = vunpack.c.l.b16 %v1302
      %v1378 = vunpack.c.l.b16 %v1303
      %v1379 = vunpack.c.l.b16 %v1304
      %v1380 = vunpack.c.l.b16 %v1305
      %v1381 = vunpack.c.l.b16 %v1306
      %v1382 = vunpack.c.l.b16 %v1307
      %v1383 = vunpack.c.l.b16 %v1308
      %v1384 = vunpack.c.l.b16 %v1309
      %v1385 = vunpack.c.l.b16 %v1310
      %v1386 = vunpack.c.l.b16 %v1311
      %v1387 = vunpack.c.l.b16 %v1312
      %v1388 = vpack.c.b16 %v1373, %v1372
      %v1389 = vpack.c.b16 %v1375, %v1374
      %v1390 = vpack.c.b16 %v1377, %v1376
      %v1391 = vpack.c.b16 %v1379, %v1378
      %v1392 = vpack.c.b16 %v1381, %v1380
      %v1393 = vpack.c.b16 %v1383, %v1382
      %v1394 = vpack.c.b16 %v1385, %v1384
      %v1395 = vpack.c.b16 %v1387, %v1386
      %1404 = vmatpush.bf16.msra.mxu0 %v1395
      %1405 = vmatpush.bf16.msra.mxu0 %v1394
      %1406 = vmatpush.bf16.msra.mxu0 %v1393
      %1407 = vmatpush.bf16.msra.mxu0 %v1392
      %1408 = vmatpush.bf16.msra.mxu0 %v1391
      %1409 = vmatpush.bf16.msra.mxu0 %v1390
      %1410 = vmatpush.bf16.msra.mxu0 %v1389
      %1411 = vmatpush.bf16.msra.mxu0 %v1388
      %1412 = vmatmul.bf16.gmra.mxu0 %v1354
      %v1413 = vpop.f32.mrf.mxu0
      %v1414 = vadd.f32 %v1355, %v1413
      %v1415 = vpop.f32.mrf.mxu0
      %1416 = vdwg.mxu0
      %v1417 = vpack.c.bf16 %v1414, %v1414
      %1419 = vrot.lane.b32.xlu0 %v1417, 120
      %v1420 = vpop.permute.xlu0 %1419
      %1421 = vrot.lane.b32.xlu0 %v1417, 112
      %v1422 = vpop.permute.xlu0 %1421
      %1423 = vrot.lane.b32.xlu0 %v1417, 104
      %v1424 = vpop.permute.xlu0 %1423
      %v1425 = vunpack.c.l.b16 %v1417
      %v1426 = vpack.c.b16 %v1425, %v1425
      %1427 = vrot.lane.b32.xlu0 %v1426, 96
      %v1428 = vpop.permute.xlu0 %1427
      %v1430 = vsel %vm834, %v1417, 0
      %v1433 = vsel %vm834, %v1428, 0
      %1435 = vmatpush.bf16.xpose.msra.mxu0 0
      %1436 = vmatpush.bf16.xpose.msra.mxu0 0
      %1437 = vmatpush.bf16.xpose.msra.mxu0 0
      %1438 = vmatpush.bf16.xpose.msra.mxu0 0
      %1439 = vmatpush.bf16.xpose.msra.mxu0 0
      %1440 = vmatpush.bf16.xpose.msra.mxu0 0
      %1441 = vmatpush.bf16.xpose.msra.mxu0 0
      %1442 = vmatpush.bf16.xpose.msra.mxu0 %v1433
      %1443 = vmatmul.bf16.gmra.mxu0 %v1430
      %v1444 = vpop.f32.mrf.mxu0
      %v1445 = vadd.f32 0.0, %v1444
      %v1446 = vpop.f32.mrf.mxu0
      %1447 = vdwg.mxu0
      %v1448 = vunpack.c.l.b16 %v1420
      %v1449 = vpack.c.b16 %v1448, %v1448
      %1450 = vrot.lane.b32.xlu0 %v1449, 96
      %v1451 = vpop.permute.xlu0 %1450
      %v1453 = vsel %vm834, %v1420, 0
      %v1456 = vsel %vm834, %v1451, 0
      %1458 = vmatpush.bf16.xpose.msra.mxu0 0
      %1459 = vmatpush.bf16.xpose.msra.mxu0 0
      %1460 = vmatpush.bf16.xpose.msra.mxu0 0
      %1461 = vmatpush.bf16.xpose.msra.mxu0 0
      %1462 = vmatpush.bf16.xpose.msra.mxu0 0
      %1463 = vmatpush.bf16.xpose.msra.mxu0 0
      %1464 = vmatpush.bf16.xpose.msra.mxu0 0
      %1465 = vmatpush.bf16.xpose.msra.mxu0 %v1456
      %1466 = vmatmul.bf16.gmra.mxu0 %v1453
      %v1467 = vpop.f32.mrf.mxu0
      %v1468 = vadd.f32 0.0, %v1467
      %v1469 = vpop.f32.mrf.mxu0
      %1470 = vdwg.mxu0
      %v1471 = vunpack.c.l.b16 %v1422
      %v1472 = vpack.c.b16 %v1471, %v1471
      %1473 = vrot.lane.b32.xlu0 %v1472, 96
      %v1474 = vpop.permute.xlu0 %1473
      %v1476 = vsel %vm834, %v1422, 0
      %v1479 = vsel %vm834, %v1474, 0
      %1481 = vmatpush.bf16.xpose.msra.mxu0 0
      %1482 = vmatpush.bf16.xpose.msra.mxu0 0
      %1483 = vmatpush.bf16.xpose.msra.mxu0 0
      %1484 = vmatpush.bf16.xpose.msra.mxu0 0
      %1485 = vmatpush.bf16.xpose.msra.mxu0 0
      %1486 = vmatpush.bf16.xpose.msra.mxu0 0
      %1487 = vmatpush.bf16.xpose.msra.mxu0 0
      %1488 = vmatpush.bf16.xpose.msra.mxu0 %v1479
      %1489 = vmatmul.bf16.gmra.mxu0 %v1476
      %v1490 = vpop.f32.mrf.mxu0
      %v1491 = vadd.f32 0.0, %v1490
      %v1492 = vpop.f32.mrf.mxu0
      %1493 = vdwg.mxu0
      %v1494 = vunpack.c.l.b16 %v1424
      %v1495 = vpack.c.b16 %v1494, %v1494
      %1496 = vrot.lane.b32.xlu0 %v1495, 96
      %v1497 = vpop.permute.xlu0 %1496
      %v1499 = vsel %vm834, %v1424, 0
      %v1502 = vsel %vm834, %v1497, 0
      %1504 = vmatpush.bf16.xpose.msra.mxu0 0
      %1505 = vmatpush.bf16.xpose.msra.mxu0 0
      %1506 = vmatpush.bf16.xpose.msra.mxu0 0
      %1507 = vmatpush.bf16.xpose.msra.mxu0 0
      %1508 = vmatpush.bf16.xpose.msra.mxu0 0
      %1509 = vmatpush.bf16.xpose.msra.mxu0 0
      %1510 = vmatpush.bf16.xpose.msra.mxu0 0
      %1511 = vmatpush.bf16.xpose.msra.mxu0 %v1502
      %1512 = vmatmul.bf16.gmra.mxu0 %v1499
      %v1513 = vpop.f32.mrf.mxu0
      %v1514 = vadd.f32 0.0, %v1513
      %v1515 = vpop.f32.mrf.mxu0
      %1516 = vdwg.mxu0
      %v1517 = vmul.f32 %v1445, 0.35355338
      %v1518 = vmul.f32 %v1468, 0.35355338
      %v1519 = vmul.f32 %v1491, 0.35355338
      %v1520 = vmul.f32 %v1514, 0.35355338
      %v1521 = vsel %vm834, %v1517, -inf
      %1522 = vmax.xlane.f32.xlu0 %v1521
      %v1523 = vpop.xlane.xlu0 %1522
      %v1524 = vsel %vm834, %v1518, -inf
      %1525 = vmax.xlane.f32.xlu0 %v1524
      %v1526 = vpop.xlane.xlu0 %1525
      %v1527 = vsel %vm834, %v1519, -inf
      %1528 = vmax.xlane.f32.xlu0 %v1527
      %v1529 = vpop.xlane.xlu0 %1528
      %v1530 = vsel %vm834, %v1520, -inf
      %1531 = vmax.xlane.f32.xlu0 %v1530
      %v1532 = vpop.xlane.xlu0 %1531
      %v1533 = vsub.f32 %v1517, %v1523
      %v1534 = vsub.f32 %v1518, %v1526
      %v1535 = vsub.f32 %v1519, %v1529
      %v1536 = vsub.f32 %v1520, %v1532
      %v1537 = vmul.f32 %v1533, 1.442695
      %v1538 = vpow.pop %v1537
      %v1539 = vmul.f32 %v1534, 1.442695
      %v1540 = vpow.pop %v1539
      %v1541 = vmul.f32 %v1535, 1.442695
      %v1542 = vpow.pop %v1541
      %v1543 = vmul.f32 %v1536, 1.442695
      %v1544 = vpow.pop %v1543
      %v1545 = vsel %vm834, %v1538, 0.0
      %1546 = vadd.xlane.f32.xlu0 %v1545
      %v1547 = vpop.xlane.xlu0 %1546
      %v1548 = vsel %vm834, %v1540, 0.0
      %1549 = vadd.xlane.f32.xlu0 %v1548
      %v1550 = vpop.xlane.xlu0 %1549
      %v1551 = vsel %vm834, %v1542, 0.0
      %1552 = vadd.xlane.f32.xlu0 %v1551
      %v1553 = vpop.xlane.xlu0 %1552
      %v1554 = vsel %vm834, %v1544, 0.0
      %1555 = vadd.xlane.f32.xlu0 %v1554
      %v1556 = vpop.xlane.xlu0 %1555
      %v1557 = vrcp.pop %v1547
      %v1558 = vrcp.pop %v1550
      %v1559 = vrcp.pop %v1553
      %v1560 = vrcp.pop %v1556
      %v1561 = vmul.f32 %v1538, %v1557
      %v1562 = vmul.f32 %v1540, %v1558
      %v1563 = vmul.f32 %v1542, %v1559
      %v1564 = vmul.f32 %v1544, %v1560
      %v1565 = vpack.c.bf16 %v1561, %v1561
      %v1566 = vpack.c.bf16 %v1562, %v1562
      %v1567 = vpack.c.bf16 %v1563, %v1563
      %v1568 = vpack.c.bf16 %v1564, %v1564
      %1569 = vrot.lane.b32.xlu0 %v1426, 64
      %v1570 = vpop.permute.xlu0 %1569
      %v1572 = vsel %vm834, %v1565, 0
      %v1575 = vsel %vm980, %v1570, 0
      %1577 = vmatpush.bf16.msra.mxu0 0
      %1578 = vmatpush.bf16.msra.mxu0 0
      %1579 = vmatpush.bf16.msra.mxu0 0
      %1580 = vmatpush.bf16.msra.mxu0 0
      %1581 = vmatpush.bf16.msra.mxu0 0
      %1582 = vmatpush.bf16.msra.mxu0 0
      %1583 = vmatpush.bf16.msra.mxu0 0
      %1584 = vmatpush.bf16.msra.mxu0 %v1575
      %1585 = vmatmul.bf16.gmra.mxu0 %v1572
      %v1586 = vpop.f32.mrf.mxu0
      %v1587 = vadd.f32 0.0, %v1586
      %v1588 = vpop.f32.mrf.mxu0
      %1589 = vdwg.mxu0
      %1590 = vrot.lane.b32.xlu0 %v1449, 64
      %v1591 = vpop.permute.xlu0 %1590
      %v1593 = vsel %vm834, %v1566, 0
      %v1596 = vsel %vm980, %v1591, 0
      %1598 = vmatpush.bf16.msra.mxu0 0
      %1599 = vmatpush.bf16.msra.mxu0 0
      %1600 = vmatpush.bf16.msra.mxu0 0
      %1601 = vmatpush.bf16.msra.mxu0 0
      %1602 = vmatpush.bf16.msra.mxu0 0
      %1603 = vmatpush.bf16.msra.mxu0 0
      %1604 = vmatpush.bf16.msra.mxu0 0
      %1605 = vmatpush.bf16.msra.mxu0 %v1596
      %1606 = vmatmul.bf16.gmra.mxu0 %v1593
      %v1607 = vpop.f32.mrf.mxu0
      %v1608 = vadd.f32 0.0, %v1607
      %v1609 = vpop.f32.mrf.mxu0
      %1610 = vdwg.mxu0
      %1611 = vrot.lane.b32.xlu0 %v1472, 64
      %v1612 = vpop.permute.xlu0 %1611
      %v1614 = vsel %vm834, %v1567, 0
      %v1617 = vsel %vm980, %v1612, 0
      %1619 = vmatpush.bf16.msra.mxu0 0
      %1620 = vmatpush.bf16.msra.mxu0 0
      %1621 = vmatpush.bf16.msra.mxu0 0
      %1622 = vmatpush.bf16.msra.mxu0 0
      %1623 = vmatpush.bf16.msra.mxu0 0
      %1624 = vmatpush.bf16.msra.mxu0 0
      %1625 = vmatpush.bf16.msra.mxu0 0
      %1626 = vmatpush.bf16.msra.mxu0 %v1617
      %1627 = vmatmul.bf16.gmra.mxu0 %v1614
      %v1628 = vpop.f32.mrf.mxu0
      %v1629 = vadd.f32 0.0, %v1628
      %v1630 = vpop.f32.mrf.mxu0
      %1631 = vdwg.mxu0
      %1632 = vrot.lane.b32.xlu0 %v1495, 64
      %v1633 = vpop.permute.xlu0 %1632
      %v1635 = vsel %vm834, %v1568, 0
      %v1638 = vsel %vm980, %v1633, 0
      %1640 = vmatpush.bf16.msra.mxu0 0
      %1641 = vmatpush.bf16.msra.mxu0 0
      %1642 = vmatpush.bf16.msra.mxu0 0
      %1643 = vmatpush.bf16.msra.mxu0 0
      %1644 = vmatpush.bf16.msra.mxu0 0
      %1645 = vmatpush.bf16.msra.mxu0 0
      %1646 = vmatpush.bf16.msra.mxu0 0
      %1647 = vmatpush.bf16.msra.mxu0 %v1638
      %1648 = vmatmul.bf16.gmra.mxu0 %v1635
      %v1649 = vpop.f32.mrf.mxu0
      %v1650 = vadd.f32 0.0, %v1649
      %v1651 = vpop.f32.mrf.mxu0
      %1652 = vdwg.mxu0
      %1654 = vrot.lane.b32.xlu0 %v1608, 8
      %v1655 = vpop.permute.xlu0 %1654
      %1658 = vrot.lane.b32.xlu0 %v1629, 16
      %v1659 = vpop.permute.xlu0 %1658
      %1662 = vrot.lane.b32.xlu0 %v1650, 24
      %v1663 = vpop.permute.xlu0 %1662
      %v1665 = vsel %vm834, %v1587, %v1655
      %v1666 = vsel %vm1073, %v1665, %v1659
      %v1667 = vsel %vm1075, %v1666, %v1663
      %v1668 = vpack.c.bf16 %v1667, %v1667
      %v1669 = vperm.slane %v1353, 1
      %v1674 = vunpack.c.l.b16 %v1314
      %v1675 = vunpack.c.l.b16 %v1315
      %v1676 = vunpack.c.l.b16 %v1316
      %v1677 = vunpack.c.l.b16 %v1317
      %v1678 = vpack.c.b16 %v1675, %v1674
      %v1679 = vpack.c.b16 %v1677, %v1676
      %v1683 = vsel %vm689, %v1668, 0
      %1685 = vmatpush.bf16.msra.mxu0 0
      %1686 = vmatpush.bf16.msra.mxu0 0
      %1687 = vmatpush.bf16.msra.mxu0 0
      %1688 = vmatpush.bf16.msra.mxu0 0
      %1689 = vmatpush.bf16.msra.mxu0 0
      %1690 = vmatpush.bf16.msra.mxu0 0
      %1691 = vmatpush.bf16.msra.mxu0 %v1679
      %1692 = vmatpush.bf16.msra.mxu0 %v1678
      %1693 = vmatmul.bf16.gmra.mxu0 %v1683
      %v1694 = vpop.f32.mrf.mxu0
      %v1695 = vadd.f32 %v1669, %v1694
      %v1696 = vpop.f32.mrf.mxu0
      %1697 = vdwg.mxu0
      %v1698 = vadd.f32 %v1295, %v1695
      %1699 = vadd.xlane.f32.xlu0 %v1698
      %v1700 = vpop.xlane.xlu0 %1699
      %v1701 = vmul.f32 %v1700, 0.03125
      %v1702 = vmul.f32 %v1698, %v1698
      %1703 = vadd.xlane.f32.xlu0 %v1702
      %v1704 = vpop.xlane.xlu0 %1703
      %v1705 = vmul.f32 %v1704, 0.03125
      %v1706 = vmul.f32 %v1701, %v1701
      %v1707 = vsub.f32 %v1705, %v1706
      %v1708 = vsub.f32 %v1698, %v1701
      %v1709 = vadd.f32 %v1707, 1e-05
      %v1710 = vrsqrt.pop %v1709
      %v1711 = vmul.f32 %v1710, %v1709
      %v1712 = vmul.f32 %v1711, %v1710
      %v1713 = vmul.f32 0.5, %v1712
      %v1714 = vsub.f32 1.5, %v1713
      %v1715 = vmul.f32 %v1710, %v1714
      %vm1716 = vweird.f32 %v1709
      %vm1717 = vweird.f32 %v1710
      %vm1718 = vmor %vm1716, %vm1717
      %v1719 = vsel %vm1718, %v1710, %v1715
      %v1720 = vmul.f32 %v1708, %v1719
      %v1721 = vperm.slane %v1353, 2
      %v1722 = vmul.f32 %v1720, %v1721
      %v1723 = vperm.slane %v1353, 3
      %v1724 = vadd.f32 %v1722, %v1723
      %v1725 = vpack.c.bf16 %v1724, %v1724
      %v1726 = vperm.slane %v1353, 4
      %v1743 = vunpack.c.l.b16 %v1319
      %v1744 = vunpack.c.l.b16 %v1320
      %v1745 = vunpack.c.l.b16 %v1321
      %v1746 = vunpack.c.l.b16 %v1322
      %v1747 = vunpack.c.l.b16 %v1323
      %v1748 = vunpack.c.l.b16 %v1324
      %v1749 = vunpack.c.l.b16 %v1325
      %v1750 = vunpack.c.l.b16 %v1326
      %v1751 = vunpack.c.l.b16 %v1327
      %v1752 = vunpack.c.l.b16 %v1328
      %v1753 = vunpack.c.l.b16 %v1329
      %v1754 = vunpack.c.l.b16 %v1330
      %v1755 = vunpack.c.l.b16 %v1331
      %v1756 = vunpack.c.l.b16 %v1332
      %v1757 = vunpack.c.l.b16 %v1333
      %v1758 = vunpack.c.l.b16 %v1334
      %v1759 = vpack.c.b16 %v1744, %v1743
      %v1760 = vpack.c.b16 %v1746, %v1745
      %v1761 = vpack.c.b16 %v1748, %v1747
      %v1762 = vpack.c.b16 %v1750, %v1749
      %v1763 = vpack.c.b16 %v1752, %v1751
      %v1764 = vpack.c.b16 %v1754, %v1753
      %v1765 = vpack.c.b16 %v1756, %v1755
      %v1766 = vpack.c.b16 %v1758, %v1757
      %1775 = vmatpush.bf16.msra.mxu0 %v1766
      %1776 = vmatpush.bf16.msra.mxu0 %v1765
      %1777 = vmatpush.bf16.msra.mxu0 %v1764
      %1778 = vmatpush.bf16.msra.mxu0 %v1763
      %1779 = vmatpush.bf16.msra.mxu0 %v1762
      %1780 = vmatpush.bf16.msra.mxu0 %v1761
      %1781 = vmatpush.bf16.msra.mxu0 %v1760
      %1782 = vmatpush.bf16.msra.mxu0 %v1759
      %1783 = vmatmul.bf16.gmra.mxu0 %v1725
      %v1784 = vpop.f32.mrf.mxu0
      %v1785 = vadd.f32 %v1726, %v1784
      %v1786 = vpop.f32.mrf.mxu0
      %1787 = vdwg.mxu0
      %v1788 = vmul.f32 %v1785, %v1785
      %v1789 = vmul.f32 %v1785, %v1788
      %v1790 = vmul.f32 %v1789, 0.044715
      %v1791 = vadd.f32 %v1785, %v1790
      %v1792 = vmul.f32 %v1791, 0.7978846
      %v1793 = vtanh.pop %v1792
      %v1794 = vadd.f32 %v1793, 1.0
      %v1795 = vmul.f32 %v1794, 0.5
      %v1796 = vmul.f32 %v1785, %v1795
      %v1797 = vpack.c.bf16 %v1796, %v1796
      %v1798 = vperm.slane %v1353, 5
      %v1815 = vunpack.c.l.b16 %v1336
      %v1816 = vunpack.c.l.b16 %v1337
      %v1817 = vunpack.c.l.b16 %v1338
      %v1818 = vunpack.c.l.b16 %v1339
      %v1819 = vunpack.c.l.b16 %v1340
      %v1820 = vunpack.c.l.b16 %v1341
      %v1821 = vunpack.c.l.b16 %v1342
      %v1822 = vunpack.c.l.b16 %v1343
      %v1823 = vunpack.c.l.b16 %v1344
      %v1824 = vunpack.c.l.b16 %v1345
      %v1825 = vunpack.c.l.b16 %v1346
      %v1826 = vunpack.c.l.b16 %v1347
      %v1827 = vunpack.c.l.b16 %v1348
      %v1828 = vunpack.c.l.b16 %v1349
      %v1829 = vunpack.c.l.b16 %v1350
      %v1830 = vunpack.c.l.b16 %v1351
      %v1831 = vpack.c.b16 %v1816, %v1815
      %v1832 = vpack.c.b16 %v1818, %v1817
      %v1833 = vpack.c.b16 %v1820, %v1819
      %v1834 = vpack.c.b16 %v1822, %v1821
      %v1835 = vpack.c.b16 %v1824, %v1823
      %v1836 = vpack.c.b16 %v1826, %v1825
      %v1837 = vpack.c.b16 %v1828, %v1827
      %v1838 = vpack.c.b16 %v1830, %v1829
      %1847 = vmatpush.bf16.msra.mxu0 %v1838
      %1848 = vmatpush.bf16.msra.mxu0 %v1837
      %1849 = vmatpush.bf16.msra.mxu0 %v1836
      %1850 = vmatpush.bf16.msra.mxu0 %v1835
      %1851 = vmatpush.bf16.msra.mxu0 %v1834
      %1852 = vmatpush.bf16.msra.mxu0 %v1833
      %1853 = vmatpush.bf16.msra.mxu0 %v1832
      %1854 = vmatpush.bf16.msra.mxu0 %v1831
      %1855 = vmatmul.bf16.gmra.mxu0 %v1797
      %v1856 = vpop.f32.mrf.mxu0
      %v1857 = vadd.f32 %v1798, %v1856
      %v1858 = vpop.f32.mrf.mxu0
      %1859 = vdwg.mxu0
      %v1860 = vadd.f32 %v1724, %v1857
      %1861 = vadd.xlane.f32.xlu0 %v1860
      %v1862 = vpop.xlane.xlu0 %1861
      %v1863 = vmul.f32 %v1862, 0.03125
      %v1864 = vmul.f32 %v1860, %v1860
      %1865 = vadd.xlane.f32.xlu0 %v1864
      %v1866 = vpop.xlane.xlu0 %1865
      %v1867 = vmul.f32 %v1866, 0.03125
      %v1868 = vmul.f32 %v1863, %v1863
      %v1869 = vsub.f32 %v1867, %v1868
      %v1870 = vsub.f32 %v1860, %v1863
      %v1871 = vadd.f32 %v1869, 1e-05
      %v1872 = vrsqrt.pop %v1871
      %v1873 = vmul.f32 %v1872, %v1871
      %v1874 = vmul.f32 %v1873, %v1872
      %v1875 = vmul.f32 0.5, %v1874
      %v1876 = vsub.f32 1.5, %v1875
      %v1877 = vmul.f32 %v1872, %v1876
      %vm1878 = vweird.f32 %v1871
      %vm1879 = vweird.f32 %v1872
      %vm1880 = vmor %vm1878, %vm1879
      %v1881 = vsel %vm1880, %v1872, %v1877
      %v1882 = vmul.f32 %v1870, %v1881
      %v1883 = vperm.slane %v1353, 6
      %v1884 = vmul.f32 %v1882, %v1883
      %v1885 = vperm.slane %v1353, 7
      %v1886 = vadd.f32 %v1884, %v1885
      %v1887 = vld [vmem:[%s19] sm:$0x1f]
      %1888 = vadd.xlane.f32.xlu0 %v1886
      %v1889 = vpop.xlane.xlu0 %1888
      %v1890 = vmul.f32 %v1889, 0.03125
      %v1891 = vmul.f32 %v1886, %v1886
      %1892 = vadd.xlane.f32.xlu0 %v1891
      %v1893 = vpop.xlane.xlu0 %1892
      %v1894 = vmul.f32 %v1893, 0.03125
      %v1895 = vmul.f32 %v1890, %v1890
      %v1896 = vsub.f32 %v1894, %v1895
      %v1897 = vsub.f32 %v1886, %v1890
      %v1898 = vadd.f32 %v1896, 1e-05
      %v1899 = vrsqrt.pop %v1898
      %v1900 = vmul.f32 %v1899, %v1898
      %v1901 = vmul.f32 %v1900, %v1899
      %v1902 = vmul.f32 0.5, %v1901
      %v1903 = vsub.f32 1.5, %v1902
      %v1904 = vmul.f32 %v1899, %v1903
      %vm1905 = vweird.f32 %v1898
      %vm1906 = vweird.f32 %v1899
      %vm1907 = vmor %vm1905, %vm1906
      %v1908 = vsel %vm1907, %v1899, %v1904
      %v1909 = vmul.f32 %v1897, %v1908
      %v1910 = vperm.slane %v1887, 0
      %v1911 = vmul.f32 %v1909, %v1910
      %v1912 = vperm.slane %v1887, 1
      %v1913 = vadd.f32 %v1911, %v1912
      %v1914 = vld [vmem:[%s664] sm:$0xff]
      %v1915 = vpack.c.bf16 %v1914, %v1914
      %v1916 = vld [vmem:[%s5] sm:$0xf]
      %v1917 = vld [vmem:[%s5 + $0x4] sm:$0xf]
      %v1918 = vld [vmem:[%s5 + $0x8] sm:$0xf]
      %v1919 = vld [vmem:[%s5 + $0xc] sm:$0xf]
      %v1920 = vld [vmem:[%s3] sm:$0xff]
      %v1925 = vunpack.c.l.b16 %v1916
      %v1926 = vunpack.c.l.b16 %v1917
      %v1927 = vunpack.c.l.b16 %v1918
      %v1928 = vunpack.c.l.b16 %v1919
      %v1929 = vpack.c.b16 %v1926, %v1925
      %v1930 = vpack.c.b16 %v1928, %v1927
      %v1934 = vsel %vm689, %v1915, 0
      %1936 = vmatpush.bf16.msra.mxu0 0
      %1937 = vmatpush.bf16.msra.mxu0 0
      %1938 = vmatpush.bf16.msra.mxu0 0
      %1939 = vmatpush.bf16.msra.mxu0 0
      %1940 = vmatpush.bf16.msra.mxu0 0
      %1941 = vmatpush.bf16.msra.mxu0 0
      %1942 = vmatpush.bf16.msra.mxu0 %v1930
      %1943 = vmatpush.bf16.msra.mxu0 %v1929
      %1944 = vmatmul.bf16.gmra.mxu0 %v1934
      %v1945 = vpop.f32.mrf.mxu0
      %v1946 = vadd.f32 %v1920, %v1945
      %v1947 = vpop.f32.mrf.mxu0
      %1948 = vdwg.mxu0
      %v1949 = vld [vmem:[%s11] sm:$0xf]
      %v1950 = vld [vmem:[%s11 + $0x4] sm:$0xf]
      %v1951 = vld [vmem:[%s11 + $0x8] sm:$0xf]
      %v1952 = vld [vmem:[%s11 + $0xc] sm:$0xf]
      %v1953 = vld [vmem:[%s11 + $0x10] sm:$0xf]
      %v1954 = vld [vmem:[%s11 + $0x14] sm:$0xf]
      %v1955 = vld [vmem:[%s11 + $0x18] sm:$0xf]
      %v1956 = vld [vmem:[%s11 + $0x1c] sm:$0xf]
      %v1957 = vld [vmem:[%s11 + $0x20] sm:$0xf]
      %v1958 = vld [vmem:[%s11 + $0x24] sm:$0xf]
      %v1959 = vld [vmem:[%s11 + $0x28] sm:$0xf]
      %v1960 = vld [vmem:[%s11 + $0x2c] sm:$0xf]
      %v1961 = vld [vmem:[%s11 + $0x30] sm:$0xf]
      %v1962 = vld [vmem:[%s11 + $0x34] sm:$0xf]
      %v1963 = vld [vmem:[%s11 + $0x38] sm:$0xf]
      %v1964 = vld [vmem:[%s11 + $0x3c] sm:$0xf]
      %v1965 = vld [vmem:[%s12] sm:$0xf]
      %v1966 = vld [vmem:[%s12 + $0x4] sm:$0xf]
      %v1967 = vld [vmem:[%s12 + $0x8] sm:$0xf]
      %v1968 = vld [vmem:[%s12 + $0xc] sm:$0xf]
      %v1969 = vld [vmem:[%s13] sm:$0xf]
      %v1970 = vld [vmem:[%s13 + $0x4] sm:$0xf]
      %v1971 = vld [vmem:[%s13 + $0x8] sm:$0xf]
      %v1972 = vld [vmem:[%s13 + $0xc] sm:$0xf]
      %v1973 = vld [vmem:[%s13 + $0x10] sm:$0xf]
      %v1974 = vld [vmem:[%s13 + $0x14] sm:$0xf]
      %v1975 = vld [vmem:[%s13 + $0x18] sm:$0xf]
      %v1976 = vld [vmem:[%s13 + $0x1c] sm:$0xf]
      %v1977 = vld [vmem:[%s13 + $0x20] sm:$0xf]
      %v1978 = vld [vmem:[%s13 + $0x24] sm:$0xf]
      %v1979 = vld [vmem:[%s13 + $0x28] sm:$0xf]
      %v1980 = vld [vmem:[%s13 + $0x2c] sm:$0xf]
      %v1981 = vld [vmem:[%s13 + $0x30] sm:$0xf]
      %v1982 = vld [vmem:[%s13 + $0x34] sm:$0xf]
      %v1983 = vld [vmem:[%s13 + $0x38] sm:$0xf]
      %v1984 = vld [vmem:[%s13 + $0x3c] sm:$0xf]
      %v1985 = vld [vmem:[%s14] sm:$0xf]
      %v1986 = vld [vmem:[%s14 + $0x4] sm:$0xf]
      %v1987 = vld [vmem:[%s14 + $0x8] sm:$0xf]
      %v1988 = vld [vmem:[%s14 + $0xc] sm:$0xf]
      %v1989 = vld [vmem:[%s14 + $0x10] sm:$0xf]
      %v1990 = vld [vmem:[%s14 + $0x14] sm:$0xf]
      %v1991 = vld [vmem:[%s14 + $0x18] sm:$0xf]
      %v1992 = vld [vmem:[%s14 + $0x1c] sm:$0xf]
      %v1993 = vld [vmem:[%s14 + $0x20] sm:$0xf]
      %v1994 = vld [vmem:[%s14 + $0x24] sm:$0xf]
      %v1995 = vld [vmem:[%s14 + $0x28] sm:$0xf]
      %v1996 = vld [vmem:[%s14 + $0x2c] sm:$0xf]
      %v1997 = vld [vmem:[%s14 + $0x30] sm:$0xf]
      %v1998 = vld [vmem:[%s14 + $0x34] sm:$0xf]
      %v1999 = vld [vmem:[%s14 + $0x38] sm:$0xf]
      %v2000 = vld [vmem:[%s14 + $0x3c] sm:$0xf]
      %v2001 = vld [vmem:[%s15] sm:$0xf]
      %v2002 = vld [vmem:[%s15 + $0x4] sm:$0xf]
      %v2003 = vld [vmem:[%s15 + $0x8] sm:$0xf]
      %v2004 = vld [vmem:[%s15 + $0xc] sm:$0xf]
      %v2005 = vld [vmem:[%s16] sm:$0xf]
      %v2006 = vld [vmem:[%s16 + $0x4] sm:$0xf]
      %v2007 = vld [vmem:[%s16 + $0x8] sm:$0xf]
      %v2008 = vld [vmem:[%s16 + $0xc] sm:$0xf]
      %v2009 = vld [vmem:[%s16 + $0x10] sm:$0xf]
      %v2010 = vld [vmem:[%s16 + $0x14] sm:$0xf]
      %v2011 = vld [vmem:[%s16 + $0x18] sm:$0xf]
      %v2012 = vld [vmem:[%s16 + $0x1c] sm:$0xf]
      %v2013 = vld [vmem:[%s16 + $0x20] sm:$0xf]
      %v2014 = vld [vmem:[%s16 + $0x24] sm:$0xf]
      %v2015 = vld [vmem:[%s16 + $0x28] sm:$0xf]
      %v2016 = vld [vmem:[%s16 + $0x2c] sm:$0xf]
      %v2017 = vld [vmem:[%s16 + $0x30] sm:$0xf]
      %v2018 = vld [vmem:[%s16 + $0x34] sm:$0xf]
      %v2019 = vld [vmem:[%s16 + $0x38] sm:$0xf]
      %v2020 = vld [vmem:[%s16 + $0x3c] sm:$0xf]
      %v2021 = vld [vmem:[%s17] sm:$0xf]
      %v2022 = vld [vmem:[%s17 + $0x4] sm:$0xf]
      %v2023 = vld [vmem:[%s17 + $0x8] sm:$0xf]
      %v2024 = vld [vmem:[%s17 + $0xc] sm:$0xf]
      %v2025 = vld [vmem:[%s17 + $0x10] sm:$0xf]
      %v2026 = vld [vmem:[%s17 + $0x14] sm:$0xf]
      %v2027 = vld [vmem:[%s17 + $0x18] sm:$0xf]
      %v2028 = vld [vmem:[%s17 + $0x1c] sm:$0xf]
      %v2029 = vld [vmem:[%s17 + $0x20] sm:$0xf]
      %v2030 = vld [vmem:[%s17 + $0x24] sm:$0xf]
      %v2031 = vld [vmem:[%s17 + $0x28] sm:$0xf]
      %v2032 = vld [vmem:[%s17 + $0x2c] sm:$0xf]
      %v2033 = vld [vmem:[%s17 + $0x30] sm:$0xf]
      %v2034 = vld [vmem:[%s17 + $0x34] sm:$0xf]
      %v2035 = vld [vmem:[%s17 + $0x38] sm:$0xf]
      %v2036 = vld [vmem:[%s17 + $0x3c] sm:$0xf]
      %v2037 = vld [vmem:[%s18] sm:$0xff]
      %v2038 = vld [vmem:[%s18 + $0x8] sm:$0x1f]
      %v2039 = vpack.c.bf16 %v1946, %v1946
      %v2040 = vperm.slane %v2037, 0
      %v2057 = vunpack.c.l.b16 %v1949
      %v2058 = vunpack.c.l.b16 %v1950
      %v2059 = vunpack.c.l.b16 %v1951
      %v2060 = vunpack.c.l.b16 %v1952
      %v2061 = vunpack.c.l.b16 %v1953
      %v2062 = vunpack.c.l.b16 %v1954
      %v2063 = vunpack.c.l.b16 %v1955
      %v2064 = vunpack.c.l.b16 %v1956
      %v2065 = vunpack.c.l.b16 %v1957
      %v2066 = vunpack.c.l.b16 %v1958
      %v2067 = vunpack.c.l.b16 %v1959
      %v2068 = vunpack.c.l.b16 %v1960
      %v2069 = vunpack.c.l.b16 %v1961
      %v2070 = vunpack.c.l.b16 %v1962
      %v2071 = vunpack.c.l.b16 %v1963
      %v2072 = vunpack.c.l.b16 %v1964
      %v2073 = vpack.c.b16 %v2058, %v2057
      %v2074 = vpack.c.b16 %v2060, %v2059
      %v2075 = vpack.c.b16 %v2062, %v2061
      %v2076 = vpack.c.b16 %v2064, %v2063
      %v2077 = vpack.c.b16 %v2066, %v2065
      %v2078 = vpack.c.b16 %v2068, %v2067
      %v2079 = vpack.c.b16 %v2070, %v2069
      %v2080 = vpack.c.b16 %v2072, %v2071
      %2089 = vmatpush.bf16.msra.mxu0 %v2080
      %2090 = vmatpush.bf16.msra.mxu0 %v2079
      %2091 = vmatpush.bf16.msra.mxu0 %v2078
      %2092 = vmatpush.bf16.msra.mxu0 %v2077
      %2093 = vmatpush.bf16.msra.mxu0 %v2076
      %2094 = vmatpush.bf16.msra.mxu0 %v2075
      %2095 = vmatpush.bf16.msra.mxu0 %v2074
      %2096 = vmatpush.bf16.msra.mxu0 %v2073
      %2097 = vmatmul.bf16.gmra.mxu0 %v2039
      %v2098 = vpop.f32.mrf.mxu0
      %v2099 = vadd.f32 %v2040, %v2098
      %v2100 = vpop.f32.mrf.mxu0
      %2101 = vdwg.mxu0
      %v2102 = vpack.c.bf16 %v2099, %v2099
      %2104 = vrot.lane.b32.xlu0 %v2102, 120
      %v2105 = vpop.permute.xlu0 %2104
      %2106 = vrot.lane.b32.xlu0 %v2102, 112
      %v2107 = vpop.permute.xlu0 %2106
      %2108 = vrot.lane.b32.xlu0 %v2102, 104
      %v2109 = vpop.permute.xlu0 %2108
      %v2110 = vunpack.c.l.b16 %v2102
      %v2111 = vpack.c.b16 %v2110, %v2110
      %2112 = vrot.lane.b32.xlu0 %v2111, 96
      %v2113 = vpop.permute.xlu0 %2112
      %v2115 = vsel %vm834, %v2102, 0
      %v2118 = vsel %vm834, %v2113, 0
      %2120 = vmatpush.bf16.xpose.msra.mxu0 0
      %2121 = vmatpush.bf16.xpose.msra.mxu0 0
      %2122 = vmatpush.bf16.xpose.msra.mxu0 0
      %2123 = vmatpush.bf16.xpose.msra.mxu0 0
      %2124 = vmatpush.bf16.xpose.msra.mxu0 0
      %2125 = vmatpush.bf16.xpose.msra.mxu0 0
      %2126 = vmatpush.bf16.xpose.msra.mxu0 0
      %2127 = vmatpush.bf16.xpose.msra.mxu0 %v2118
      %2128 = vmatmul.bf16.gmra.mxu0 %v2115
      %v2129 = vpop.f32.mrf.mxu0
      %v2130 = vadd.f32 0.0, %v2129
      %v2131 = vpop.f32.mrf.mxu0
      %2132 = vdwg.mxu0
      %v2133 = vunpack.c.l.b16 %v2105
      %v2134 = vpack.c.b16 %v2133, %v2133
      %2135 = vrot.lane.b32.xlu0 %v2134, 96
      %v2136 = vpop.permute.xlu0 %2135
      %v2138 = vsel %vm834, %v2105, 0
      %v2141 = vsel %vm834, %v2136, 0
      %2143 = vmatpush.bf16.xpose.msra.mxu0 0
      %2144 = vmatpush.bf16.xpose.msra.mxu0 0
      %2145 = vmatpush.bf16.xpose.msra.mxu0 0
      %2146 = vmatpush.bf16.xpose.msra.mxu0 0
      %2147 = vmatpush.bf16.xpose.msra.mxu0 0
      %2148 = vmatpush.bf16.xpose.msra.mxu0 0
      %2149 = vmatpush.bf16.xpose.msra.mxu0 0
      %2150 = vmatpush.bf16.xpose.msra.mxu0 %v2141
      %2151 = vmatmul.bf16.gmra.mxu0 %v2138
      %v2152 = vpop.f32.mrf.mxu0
      %v2153 = vadd.f32 0.0, %v2152
      %v2154 = vpop.f32.mrf.mxu0
      %2155 = vdwg.mxu0
      %v2156 = vunpack.c.l.b16 %v2107
      %v2157 = vpack.c.b16 %v2156, %v2156
      %2158 = vrot.lane.b32.xlu0 %v2157, 96
      %v2159 = vpop.permute.xlu0 %2158
      %v2161 = vsel %vm834, %v2107, 0
      %v2164 = vsel %vm834, %v2159, 0
      %2166 = vmatpush.bf16.xpose.msra.mxu0 0
      %2167 = vmatpush.bf16.xpose.msra.mxu0 0
      %2168 = vmatpush.bf16.xpose.msra.mxu0 0
      %2169 = vmatpush.bf16.xpose.msra.mxu0 0
      %2170 = vmatpush.bf16.xpose.msra.mxu0 0
      %2171 = vmatpush.bf16.xpose.msra.mxu0 0
      %2172 = vmatpush.bf16.xpose.msra.mxu0 0
      %2173 = vmatpush.bf16.xpose.msra.mxu0 %v2164
      %2174 = vmatmul.bf16.gmra.mxu0 %v2161
      %v2175 = vpop.f32.mrf.mxu0
      %v2176 = vadd.f32 0.0, %v2175
      %v2177 = vpop.f32.mrf.mxu0
      %2178 = vdwg.mxu0
      %v2179 = vunpack.c.l.b16 %v2109
      %v2180 = vpack.c.b16 %v2179, %v2179
      %2181 = vrot.lane.b32.xlu0 %v2180, 96
      %v2182 = vpop.permute.xlu0 %2181
      %v2184 = vsel %vm834, %v2109, 0
      %v2187 = vsel %vm834, %v2182, 0
      %2189 = vmatpush.bf16.xpose.msra.mxu0 0
      %2190 = vmatpush.bf16.xpose.msra.mxu0 0
      %2191 = vmatpush.bf16.xpose.msra.mxu0 0
      %2192 = vmatpush.bf16.xpose.msra.mxu0 0
      %2193 = vmatpush.bf16.xpose.msra.mxu0 0
      %2194 = vmatpush.bf16.xpose.msra.mxu0 0
      %2195 = vmatpush.bf16.xpose.msra.mxu0 0
      %2196 = vmatpush.bf16.xpose.msra.mxu0 %v2187
      %2197 = vmatmul.bf16.gmra.mxu0 %v2184
      %v2198 = vpop.f32.mrf.mxu0
      %v2199 = vadd.f32 0.0, %v2198
      %v2200 = vpop.f32.mrf.mxu0
      %2201 = vdwg.mxu0
      %v2202 = vmul.f32 %v2130, 0.35355338
      %v2203 = vmul.f32 %v2153, 0.35355338
      %v2204 = vmul.f32 %v2176, 0.35355338
      %v2205 = vmul.f32 %v2199, 0.35355338
      %v2206 = vsel %vm834, %v2202, -inf
      %2207 = vmax.xlane.f32.xlu0 %v2206
      %v2208 = vpop.xlane.xlu0 %2207
      %v2209 = vsel %vm834, %v2203, -inf
      %2210 = vmax.xlane.f32.xlu0 %v2209
      %v2211 = vpop.xlane.xlu0 %2210
      %v2212 = vsel %vm834, %v2204, -inf
      %2213 = vmax.xlane.f32.xlu0 %v2212
      %v2214 = vpop.xlane.xlu0 %2213
      %v2215 = vsel %vm834, %v2205, -inf
      %2216 = vmax.xlane.f32.xlu0 %v2215
      %v2217 = vpop.xlane.xlu0 %2216
      %v2218 = vsub.f32 %v2202, %v2208
      %v2219 = vsub.f32 %v2203, %v2211
      %v2220 = vsub.f32 %v2204, %v2214
      %v2221 = vsub.f32 %v2205, %v2217
      %v2222 = vmul.f32 %v2218, 1.442695
      %v2223 = vpow.pop %v2222
      %v2224 = vmul.f32 %v2219, 1.442695
      %v2225 = vpow.pop %v2224
      %v2226 = vmul.f32 %v2220, 1.442695
      %v2227 = vpow.pop %v2226
      %v2228 = vmul.f32 %v2221, 1.442695
      %v2229 = vpow.pop %v2228
      %v2230 = vsel %vm834, %v2223, 0.0
      %2231 = vadd.xlane.f32.xlu0 %v2230
      %v2232 = vpop.xlane.xlu0 %2231
      %v2233 = vsel %vm834, %v2225, 0.0
      %2234 = vadd.xlane.f32.xlu0 %v2233
      %v2235 = vpop.xlane.xlu0 %2234
      %v2236 = vsel %vm834, %v2227, 0.0
      %2237 = vadd.xlane.f32.xlu0 %v2236
      %v2238 = vpop.xlane.xlu0 %2237
      %v2239 = vsel %vm834, %v2229, 0.0
      %2240 = vadd.xlane.f32.xlu0 %v2239
      %v2241 = vpop.xlane.xlu0 %2240
      %v2242 = vrcp.pop %v2232
      %v2243 = vrcp.pop %v2235
      %v2244 = vrcp.pop %v2238
      %v2245 = vrcp.pop %v2241
      %v2246 = vmul.f32 %v2223, %v2242
      %v2247 = vmul.f32 %v2225, %v2243
      %v2248 = vmul.f32 %v2227, %v2244
      %v2249 = vmul.f32 %v2229, %v2245
      %v2250 = vpack.c.bf16 %v2246, %v2246
      %v2251 = vpack.c.bf16 %v2247, %v2247
      %v2252 = vpack.c.bf16 %v2248, %v2248
      %v2253 = vpack.c.bf16 %v2249, %v2249
      %2254 = vrot.lane.b32.xlu0 %v2111, 64
      %v2255 = vpop.permute.xlu0 %2254
      %v2257 = vsel %vm834, %v2250, 0
      %v2260 = vsel %vm980, %v2255, 0
      %2262 = vmatpush.bf16.msra.mxu0 0
      %2263 = vmatpush.bf16.msra.mxu0 0
      %2264 = vmatpush.bf16.msra.mxu0 0
      %2265 = vmatpush.bf16.msra.mxu0 0
      %2266 = vmatpush.bf16.msra.mxu0 0
      %2267 = vmatpush.bf16.msra.mxu0 0
      %2268 = vmatpush.bf16.msra.mxu0 0
      %2269 = vmatpush.bf16.msra.mxu0 %v2260
      %2270 = vmatmul.bf16.gmra.mxu0 %v2257
      %v2271 = vpop.f32.mrf.mxu0
      %v2272 = vadd.f32 0.0, %v2271
      %v2273 = vpop.f32.mrf.mxu0
      %2274 = vdwg.mxu0
      %2275 = vrot.lane.b32.xlu0 %v2134, 64
      %v2276 = vpop.permute.xlu0 %2275
      %v2278 = vsel %vm834, %v2251, 0
      %v2281 = vsel %vm980, %v2276, 0
      %2283 = vmatpush.bf16.msra.mxu0 0
      %2284 = vmatpush.bf16.msra.mxu0 0
      %2285 = vmatpush.bf16.msra.mxu0 0
      %2286 = vmatpush.bf16.msra.mxu0 0
      %2287 = vmatpush.bf16.msra.mxu0 0
      %2288 = vmatpush.bf16.msra.mxu0 0
      %2289 = vmatpush.bf16.msra.mxu0 0
      %2290 = vmatpush.bf16.msra.mxu0 %v2281
      %2291 = vmatmul.bf16.gmra.mxu0 %v2278
      %v2292 = vpop.f32.mrf.mxu0
      %v2293 = vadd.f32 0.0, %v2292
      %v2294 = vpop.f32.mrf.mxu0
      %2295 = vdwg.mxu0
      %2296 = vrot.lane.b32.xlu0 %v2157, 64
      %v2297 = vpop.permute.xlu0 %2296
      %v2299 = vsel %vm834, %v2252, 0
      %v2302 = vsel %vm980, %v2297, 0
      %2304 = vmatpush.bf16.msra.mxu0 0
      %2305 = vmatpush.bf16.msra.mxu0 0
      %2306 = vmatpush.bf16.msra.mxu0 0
      %2307 = vmatpush.bf16.msra.mxu0 0
      %2308 = vmatpush.bf16.msra.mxu0 0
      %2309 = vmatpush.bf16.msra.mxu0 0
      %2310 = vmatpush.bf16.msra.mxu0 0
      %2311 = vmatpush.bf16.msra.mxu0 %v2302
      %2312 = vmatmul.bf16.gmra.mxu0 %v2299
      %v2313 = vpop.f32.mrf.mxu0
      %v2314 = vadd.f32 0.0, %v2313
      %v2315 = vpop.f32.mrf.mxu0
      %2316 = vdwg.mxu0
      %2317 = vrot.lane.b32.xlu0 %v2180, 64
      %v2318 = vpop.permute.xlu0 %2317
      %v2320 = vsel %vm834, %v2253, 0
      %v2323 = vsel %vm980, %v2318, 0
      %2325 = vmatpush.bf16.msra.mxu0 0
      %2326 = vmatpush.bf16.msra.mxu0 0
      %2327 = vmatpush.bf16.msra.mxu0 0
      %2328 = vmatpush.bf16.msra.mxu0 0
      %2329 = vmatpush.bf16.msra.mxu0 0
      %2330 = vmatpush.bf16.msra.mxu0 0
      %2331 = vmatpush.bf16.msra.mxu0 0
      %2332 = vmatpush.bf16.msra.mxu0 %v2323
      %2333 = vmatmul.bf16.gmra.mxu0 %v2320
      %v2334 = vpop.f32.mrf.mxu0
      %v2335 = vadd.f32 0.0, %v2334
      %v2336 = vpop.f32.mrf.mxu0
      %2337 = vdwg.mxu0
      %2339 = vrot.lane.b32.xlu0 %v2293, 8
      %v2340 = vpop.permute.xlu0 %2339
      %2343 = vrot.lane.b32.xlu0 %v2314, 16
      %v2344 = vpop.permute.xlu0 %2343
      %2347 = vrot.lane.b32.xlu0 %v2335, 24
      %v2348 = vpop.permute.xlu0 %2347
      %v2350 = vsel %vm834, %v2272, %v2340
      %v2351 = vsel %vm1073, %v2350, %v2344
      %v2352 = vsel %vm1075, %v2351, %v2348
      %v2353 = vpack.c.bf16 %v2352, %v2352
      %v2354 = vperm.slane %v2037, 1
      %v2359 = vunpack.c.l.b16 %v1965
      %v2360 = vunpack.c.l.b16 %v1966
      %v2361 = vunpack.c.l.b16 %v1967
      %v2362 = vunpack.c.l.b16 %v1968
      %v2363 = vpack.c.b16 %v2360, %v2359
      %v2364 = vpack.c.b16 %v2362, %v2361
      %v2368 = vsel %vm689, %v2353, 0
      %2370 = vmatpush.bf16.msra.mxu0 0
      %2371 = vmatpush.bf16.msra.mxu0 0
      %2372 = vmatpush.bf16.msra.mxu0 0
      %2373 = vmatpush.bf16.msra.mxu0 0
      %2374 = vmatpush.bf16.msra.mxu0 0
      %2375 = vmatpush.bf16.msra.mxu0 0
      %2376 = vmatpush.bf16.msra.mxu0 %v2364
      %2377 = vmatpush.bf16.msra.mxu0 %v2363
      %2378 = vmatmul.bf16.gmra.mxu0 %v2368
      %v2379 = vpop.f32.mrf.mxu0
      %v2380 = vadd.f32 %v2354, %v2379
      %v2381 = vpop.f32.mrf.mxu0
      %2382 = vdwg.mxu0
      %v2383 = vadd.f32 %v1946, %v2380
      %2384 = vadd.xlane.f32.xlu0 %v2383
      %v2385 = vpop.xlane.xlu0 %2384
      %v2386 = vmul.f32 %v2385, 0.03125
      %v2387 = vmul.f32 %v2383, %v2383
      %2388 = vadd.xlane.f32.xlu0 %v2387
      %v2389 = vpop.xlane.xlu0 %2388
      %v2390 = vmul.f32 %v2389, 0.03125
      %v2391 = vmul.f32 %v2386, %v2386
      %v2392 = vsub.f32 %v2390, %v2391
      %v2393 = vsub.f32 %v2383, %v2386
      %v2394 = vadd.f32 %v2392, 1e-05
      %v2395 = vrsqrt.pop %v2394
      %v2396 = vmul.f32 %v2395, %v2394
      %v2397 = vmul.f32 %v2396, %v2395
      %v2398 = vmul.f32 0.5, %v2397
      %v2399 = vsub.f32 1.5, %v2398
      %v2400 = vmul.f32 %v2395, %v2399
      %vm2401 = vweird.f32 %v2394
      %vm2402 = vweird.f32 %v2395
      %vm2403 = vmor %vm2401, %vm2402
      %v2404 = vsel %vm2403, %v2395, %v2400
      %v2405 = vmul.f32 %v2393, %v2404
      %v2406 = vperm.slane %v2037, 2
      %v2407 = vmul.f32 %v2405, %v2406
      %v2408 = vperm.slane %v2037, 3
      %v2409 = vadd.f32 %v2407, %v2408
      %v2410 = vpack.c.bf16 %v2409, %v2409
      %v2411 = vperm.slane %v2037, 4
      %v2428 = vunpack.c.l.b16 %v1969
      %v2429 = vunpack.c.l.b16 %v1970
      %v2430 = vunpack.c.l.b16 %v1971
      %v2431 = vunpack.c.l.b16 %v1972
      %v2432 = vunpack.c.l.b16 %v1973
      %v2433 = vunpack.c.l.b16 %v1974
      %v2434 = vunpack.c.l.b16 %v1975
      %v2435 = vunpack.c.l.b16 %v1976
      %v2436 = vunpack.c.l.b16 %v1977
      %v2437 = vunpack.c.l.b16 %v1978
      %v2438 = vunpack.c.l.b16 %v1979
      %v2439 = vunpack.c.l.b16 %v1980
      %v2440 = vunpack.c.l.b16 %v1981
      %v2441 = vunpack.c.l.b16 %v1982
      %v2442 = vunpack.c.l.b16 %v1983
      %v2443 = vunpack.c.l.b16 %v1984
      %v2444 = vpack.c.b16 %v2429, %v2428
      %v2445 = vpack.c.b16 %v2431, %v2430
      %v2446 = vpack.c.b16 %v2433, %v2432
      %v2447 = vpack.c.b16 %v2435, %v2434
      %v2448 = vpack.c.b16 %v2437, %v2436
      %v2449 = vpack.c.b16 %v2439, %v2438
      %v2450 = vpack.c.b16 %v2441, %v2440
      %v2451 = vpack.c.b16 %v2443, %v2442
      %2460 = vmatpush.bf16.msra.mxu0 %v2451
      %2461 = vmatpush.bf16.msra.mxu0 %v2450
      %2462 = vmatpush.bf16.msra.mxu0 %v2449
      %2463 = vmatpush.bf16.msra.mxu0 %v2448
      %2464 = vmatpush.bf16.msra.mxu0 %v2447
      %2465 = vmatpush.bf16.msra.mxu0 %v2446
      %2466 = vmatpush.bf16.msra.mxu0 %v2445
      %2467 = vmatpush.bf16.msra.mxu0 %v2444
      %2468 = vmatmul.bf16.gmra.mxu0 %v2410
      %v2469 = vpop.f32.mrf.mxu0
      %v2470 = vadd.f32 %v2411, %v2469
      %v2471 = vpop.f32.mrf.mxu0
      %2472 = vdwg.mxu0
      %v2473 = vpack.c.bf16 %v1913, %v1913
      %v2474 = vperm.slane %v2037, 5
      %v2491 = vunpack.c.l.b16 %v1985
      %v2492 = vunpack.c.l.b16 %v1986
      %v2493 = vunpack.c.l.b16 %v1987
      %v2494 = vunpack.c.l.b16 %v1988
      %v2495 = vunpack.c.l.b16 %v1989
      %v2496 = vunpack.c.l.b16 %v1990
      %v2497 = vunpack.c.l.b16 %v1991
      %v2498 = vunpack.c.l.b16 %v1992
      %v2499 = vunpack.c.l.b16 %v1993
      %v2500 = vunpack.c.l.b16 %v1994
      %v2501 = vunpack.c.l.b16 %v1995
      %v2502 = vunpack.c.l.b16 %v1996
      %v2503 = vunpack.c.l.b16 %v1997
      %v2504 = vunpack.c.l.b16 %v1998
      %v2505 = vunpack.c.l.b16 %v1999
      %v2506 = vunpack.c.l.b16 %v2000
      %v2507 = vpack.c.b16 %v2492, %v2491
      %v2508 = vpack.c.b16 %v2494, %v2493
      %v2509 = vpack.c.b16 %v2496, %v2495
      %v2510 = vpack.c.b16 %v2498, %v2497
      %v2511 = vpack.c.b16 %v2500, %v2499
      %v2512 = vpack.c.b16 %v2502, %v2501
      %v2513 = vpack.c.b16 %v2504, %v2503
      %v2514 = vpack.c.b16 %v2506, %v2505
      %2523 = vmatpush.bf16.msra.mxu0 %v2514
      %2524 = vmatpush.bf16.msra.mxu0 %v2513
      %2525 = vmatpush.bf16.msra.mxu0 %v2512
      %2526 = vmatpush.bf16.msra.mxu0 %v2511
      %2527 = vmatpush.bf16.msra.mxu0 %v2510
      %2528 = vmatpush.bf16.msra.mxu0 %v2509
      %2529 = vmatpush.bf16.msra.mxu0 %v2508
      %2530 = vmatpush.bf16.msra.mxu0 %v2507
      %2531 = vmatmul.bf16.gmra.mxu0 %v2473
      %v2532 = vpop.f32.mrf.mxu0
      %v2533 = vadd.f32 %v2474, %v2532
      %v2534 = vpop.f32.mrf.mxu0
      %2535 = vdwg.mxu0
      %v2536 = vpack.c.bf16 %v2470, %v2470
      %2538 = vrot.lane.b32.xlu0 %v2536, 120
      %v2539 = vpop.permute.xlu0 %2538
      %2540 = vrot.lane.b32.xlu0 %v2536, 112
      %v2541 = vpop.permute.xlu0 %2540
      %2542 = vrot.lane.b32.xlu0 %v2536, 104
      %v2543 = vpop.permute.xlu0 %2542
      %v2544 = vpack.c.bf16 %v2533, %v2533
      %2546 = vrot.lane.b32.xlu0 %v2544, 120
      %v2547 = vpop.permute.xlu0 %2546
      %2548 = vrot.lane.b32.xlu0 %v2544, 112
      %v2549 = vpop.permute.xlu0 %2548
      %2550 = vrot.lane.b32.xlu0 %v2544, 104
      %v2551 = vpop.permute.xlu0 %2550
      %v2553 = vsel %vm834, %v2536, 0
      %v2556 = vsel %vm834, %v2544, 0
      %2558 = vmatpush.bf16.xpose.msra.mxu0 0
      %2559 = vmatpush.bf16.xpose.msra.mxu0 0
      %2560 = vmatpush.bf16.xpose.msra.mxu0 0
      %2561 = vmatpush.bf16.xpose.msra.mxu0 0
      %2562 = vmatpush.bf16.xpose.msra.mxu0 0
      %2563 = vmatpush.bf16.xpose.msra.mxu0 0
      %2564 = vmatpush.bf16.xpose.msra.mxu0 0
      %2565 = vmatpush.bf16.xpose.msra.mxu0 %v2556
      %2566 = vmatmul.bf16.gmra.mxu0 %v2553
      %v2567 = vpop.f32.mrf.mxu0
      %v2568 = vadd.f32 0.0, %v2567
      %v2569 = vpop.f32.mrf.mxu0
      %2570 = vdwg.mxu0
      %v2572 = vsel %vm834, %v2539, 0
      %v2575 = vsel %vm834, %v2547, 0
      %2577 = vmatpush.bf16.xpose.msra.mxu0 0
      %2578 = vmatpush.bf16.xpose.msra.mxu0 0
      %2579 = vmatpush.bf16.xpose.msra.mxu0 0
      %2580 = vmatpush.bf16.xpose.msra.mxu0 0
      %2581 = vmatpush.bf16.xpose.msra.mxu0 0
      %2582 = vmatpush.bf16.xpose.msra.mxu0 0
      %2583 = vmatpush.bf16.xpose.msra.mxu0 0
      %2584 = vmatpush.bf16.xpose.msra.mxu0 %v2575
      %2585 = vmatmul.bf16.gmra.mxu0 %v2572
      %v2586 = vpop.f32.mrf.mxu0
      %v2587 = vadd.f32 0.0, %v2586
      %v2588 = vpop.f32.mrf.mxu0
      %2589 = vdwg.mxu0
      %v2591 = vsel %vm834, %v2541, 0
      %v2594 = vsel %vm834, %v2549, 0
      %2596 = vmatpush.bf16.xpose.msra.mxu0 0
      %2597 = vmatpush.bf16.xpose.msra.mxu0 0
      %2598 = vmatpush.bf16.xpose.msra.mxu0 0
      %2599 = vmatpush.bf16.xpose.msra.mxu0 0
      %2600 = vmatpush.bf16.xpose.msra.mxu0 0
      %2601 = vmatpush.bf16.xpose.msra.mxu0 0
      %2602 = vmatpush.bf16.xpose.msra.mxu0 0
      %2603 = vmatpush.bf16.xpose.msra.mxu0 %v2594
      %2604 = vmatmul.bf16.gmra.mxu0 %v2591
      %v2605 = vpop.f32.mrf.mxu0
      %v2606 = vadd.f32 0.0, %v2605
      %v2607 = vpop.f32.mrf.mxu0
      %2608 = vdwg.mxu0
      %v2610 = vsel %vm834, %v2543, 0
      %v2613 = vsel %vm834, %v2551, 0
      %2615 = vmatpush.bf16.xpose.msra.mxu0 0
      %2616 = vmatpush.bf16.xpose.msra.mxu0 0
      %2617 = vmatpush.bf16.xpose.msra.mxu0 0
      %2618 = vmatpush.bf16.xpose.msra.mxu0 0
      %2619 = vmatpush.bf16.xpose.msra.mxu0 0
      %2620 = vmatpush.bf16.xpose.msra.mxu0 0
      %2621 = vmatpush.bf16.xpose.msra.mxu0 0
      %2622 = vmatpush.bf16.xpose.msra.mxu0 %v2613
      %2623 = vmatmul.bf16.gmra.mxu0 %v2610
      %v2624 = vpop.f32.mrf.mxu0
      %v2625 = vadd.f32 0.0, %v2624
      %v2626 = vpop.f32.mrf.mxu0
      %2627 = vdwg.mxu0
      %v2628 = vmul.f32 %v2568, 0.35355338
      %v2629 = vmul.f32 %v2587, 0.35355338
      %v2630 = vmul.f32 %v2606, 0.35355338
      %v2631 = vmul.f32 %v2625, 0.35355338
      %v2632 = vsel %vm834, %v2628, -inf
      %2633 = vmax.xlane.f32.xlu0 %v2632
      %v2634 = vpop.xlane.xlu0 %2633
      %v2635 = vsel %vm834, %v2629, -inf
      %2636 = vmax.xlane.f32.xlu0 %v2635
      %v2637 = vpop.xlane.xlu0 %2636
      %v2638 = vsel %vm834, %v2630, -inf
      %2639 = vmax.xlane.f32.xlu0 %v2638
      %v2640 = vpop.xlane.xlu0 %2639
      %v2641 = vsel %vm834, %v2631, -inf
      %2642 = vmax.xlane.f32.xlu0 %v2641
      %v2643 = vpop.xlane.xlu0 %2642
      %v2644 = vsub.f32 %v2628, %v2634
      %v2645 = vsub.f32 %v2629, %v2637
      %v2646 = vsub.f32 %v2630, %v2640
      %v2647 = vsub.f32 %v2631, %v2643
      %v2648 = vmul.f32 %v2644, 1.442695
      %v2649 = vpow.pop %v2648
      %v2650 = vmul.f32 %v2645, 1.442695
      %v2651 = vpow.pop %v2650
      %v2652 = vmul.f32 %v2646, 1.442695
      %v2653 = vpow.pop %v2652
      %v2654 = vmul.f32 %v2647, 1.442695
      %v2655 = vpow.pop %v2654
      %v2656 = vsel %vm834, %v2649, 0.0
      %2657 = vadd.xlane.f32.xlu0 %v2656
      %v2658 = vpop.xlane.xlu0 %2657
      %v2659 = vsel %vm834, %v2651, 0.0
      %2660 = vadd.xlane.f32.xlu0 %v2659
      %v2661 = vpop.xlane.xlu0 %2660
      %v2662 = vsel %vm834, %v2653, 0.0
      %2663 = vadd.xlane.f32.xlu0 %v2662
      %v2664 = vpop.xlane.xlu0 %2663
      %v2665 = vsel %vm834, %v2655, 0.0
      %2666 = vadd.xlane.f32.xlu0 %v2665
      %v2667 = vpop.xlane.xlu0 %2666
      %v2668 = vrcp.pop %v2658
      %v2669 = vrcp.pop %v2661
      %v2670 = vrcp.pop %v2664
      %v2671 = vrcp.pop %v2667
      %v2672 = vmul.f32 %v2649, %v2668
      %v2673 = vmul.f32 %v2651, %v2669
      %v2674 = vmul.f32 %v2653, %v2670
      %v2675 = vmul.f32 %v2655, %v2671
      %v2676 = vpack.c.bf16 %v2672, %v2672
      %v2677 = vpack.c.bf16 %v2673, %v2673
      %v2678 = vpack.c.bf16 %v2674, %v2674
      %v2679 = vpack.c.bf16 %v2675, %v2675
      %v2680 = vunpack.c.l.b16 %v2544
      %v2681 = vpack.c.b16 %v2680, %v2680
      %2682 = vrot.lane.b32.xlu0 %v2681, 96
      %v2683 = vpop.permute.xlu0 %2682
      %v2685 = vsel %vm834, %v2676, 0
      %v2688 = vsel %vm980, %v2683, 0
      %2690 = vmatpush.bf16.msra.mxu0 0
      %2691 = vmatpush.bf16.msra.mxu0 0
      %2692 = vmatpush.bf16.msra.mxu0 0
      %2693 = vmatpush.bf16.msra.mxu0 0
      %2694 = vmatpush.bf16.msra.mxu0 0
      %2695 = vmatpush.bf16.msra.mxu0 0
      %2696 = vmatpush.bf16.msra.mxu0 0
      %2697 = vmatpush.bf16.msra.mxu0 %v2688
      %2698 = vmatmul.bf16.gmra.mxu0 %v2685
      %v2699 = vpop.f32.mrf.mxu0
      %v2700 = vadd.f32 0.0, %v2699
      %v2701 = vpop.f32.mrf.mxu0
      %2702 = vdwg.mxu0
      %v2703 = vunpack.c.l.b16 %v2547
      %v2704 = vpack.c.b16 %v2703, %v2703
      %2705 = vrot.lane.b32.xlu0 %v2704, 96
      %v2706 = vpop.permute.xlu0 %2705
      %v2708 = vsel %vm834, %v2677, 0
      %v2711 = vsel %vm980, %v2706, 0
      %2713 = vmatpush.bf16.msra.mxu0 0
      %2714 = vmatpush.bf16.msra.mxu0 0
      %2715 = vmatpush.bf16.msra.mxu0 0
      %2716 = vmatpush.bf16.msra.mxu0 0
      %2717 = vmatpush.bf16.msra.mxu0 0
      %2718 = vmatpush.bf16.msra.mxu0 0
      %2719 = vmatpush.bf16.msra.mxu0 0
      %2720 = vmatpush.bf16.msra.mxu0 %v2711
      %2721 = vmatmul.bf16.gmra.mxu0 %v2708
      %v2722 = vpop.f32.mrf.mxu0
      %v2723 = vadd.f32 0.0, %v2722
      %v2724 = vpop.f32.mrf.mxu0
      %2725 = vdwg.mxu0
      %v2726 = vunpack.c.l.b16 %v2549
      %v2727 = vpack.c.b16 %v2726, %v2726
      %2728 = vrot.lane.b32.xlu0 %v2727, 96
      %v2729 = vpop.permute.xlu0 %2728
      %v2731 = vsel %vm834, %v2678, 0
      %v2734 = vsel %vm980, %v2729, 0
      %2736 = vmatpush.bf16.msra.mxu0 0
      %2737 = vmatpush.bf16.msra.mxu0 0
      %2738 = vmatpush.bf16.msra.mxu0 0
      %2739 = vmatpush.bf16.msra.mxu0 0
      %2740 = vmatpush.bf16.msra.mxu0 0
      %2741 = vmatpush.bf16.msra.mxu0 0
      %2742 = vmatpush.bf16.msra.mxu0 0
      %2743 = vmatpush.bf16.msra.mxu0 %v2734
      %2744 = vmatmul.bf16.gmra.mxu0 %v2731
      %v2745 = vpop.f32.mrf.mxu0
      %v2746 = vadd.f32 0.0, %v2745
      %v2747 = vpop.f32.mrf.mxu0
      %2748 = vdwg.mxu0
      %v2749 = vunpack.c.l.b16 %v2551
      %v2750 = vpack.c.b16 %v2749, %v2749
      %2751 = vrot.lane.b32.xlu0 %v2750, 96
      %v2752 = vpop.permute.xlu0 %2751
      %v2754 = vsel %vm834, %v2679, 0
      %v2757 = vsel %vm980, %v2752, 0
      %2759 = vmatpush.bf16.msra.mxu0 0
      %2760 = vmatpush.bf16.msra.mxu0 0
      %2761 = vmatpush.bf16.msra.mxu0 0
      %2762 = vmatpush.bf16.msra.mxu0 0
      %2763 = vmatpush.bf16.msra.mxu0 0
      %2764 = vmatpush.bf16.msra.mxu0 0
      %2765 = vmatpush.bf16.msra.mxu0 0
      %2766 = vmatpush.bf16.msra.mxu0 %v2757
      %2767 = vmatmul.bf16.gmra.mxu0 %v2754
      %v2768 = vpop.f32.mrf.mxu0
      %v2769 = vadd.f32 0.0, %v2768
      %v2770 = vpop.f32.mrf.mxu0
      %2771 = vdwg.mxu0
      %2773 = vrot.lane.b32.xlu0 %v2723, 8
      %v2774 = vpop.permute.xlu0 %2773
      %2777 = vrot.lane.b32.xlu0 %v2746, 16
      %v2778 = vpop.permute.xlu0 %2777
      %2781 = vrot.lane.b32.xlu0 %v2769, 24
      %v2782 = vpop.permute.xlu0 %2781
      %v2784 = vsel %vm834, %v2700, %v2774
      %v2785 = vsel %vm1073, %v2784, %v2778
      %v2786 = vsel %vm1075, %v2785, %v2782
      %v2787 = vpack.c.bf16 %v2786, %v2786
      %v2788 = vperm.slane %v2037, 6
      %v2793 = vunpack.c.l.b16 %v2001
      %v2794 = vunpack.c.l.b16 %v2002
      %v2795 = vunpack.c.l.b16 %v2003
      %v2796 = vunpack.c.l.b16 %v2004
      %v2797 = vpack.c.b16 %v2794, %v2793
      %v2798 = vpack.c.b16 %v2796, %v2795
      %v2802 = vsel %vm689, %v2787, 0
      %2804 = vmatpush.bf16.msra.mxu0 0
      %2805 = vmatpush.bf16.msra.mxu0 0
      %2806 = vmatpush.bf16.msra.mxu0 0
      %2807 = vmatpush.bf16.msra.mxu0 0
      %2808 = vmatpush.bf16.msra.mxu0 0
      %2809 = vmatpush.bf16.msra.mxu0 0
      %2810 = vmatpush.bf16.msra.mxu0 %v2798
      %2811 = vmatpush.bf16.msra.mxu0 %v2797
      %2812 = vmatmul.bf16.gmra.mxu0 %v2802
      %v2813 = vpop.f32.mrf.mxu0
      %v2814 = vadd.f32 %v2788, %v2813
      %v2815 = vpop.f32.mrf.mxu0
      %2816 = vdwg.mxu0
      %v2817 = vadd.f32 %v2409, %v2814
      %2818 = vadd.xlane.f32.xlu0 %v2817
      %v2819 = vpop.xlane.xlu0 %2818
      %v2820 = vmul.f32 %v2819, 0.03125
      %v2821 = vmul.f32 %v2817, %v2817
      %2822 = vadd.xlane.f32.xlu0 %v2821
      %v2823 = vpop.xlane.xlu0 %2822
      %v2824 = vmul.f32 %v2823, 0.03125
      %v2825 = vmul.f32 %v2820, %v2820
      %v2826 = vsub.f32 %v2824, %v2825
      %v2827 = vsub.f32 %v2817, %v2820
      %v2828 = vadd.f32 %v2826, 1e-05
      %v2829 = vrsqrt.pop %v2828
      %v2830 = vmul.f32 %v2829, %v2828
      %v2831 = vmul.f32 %v2830, %v2829
      %v2832 = vmul.f32 0.5, %v2831
      %v2833 = vsub.f32 1.5, %v2832
      %v2834 = vmul.f32 %v2829, %v2833
      %vm2835 = vweird.f32 %v2828
      %vm2836 = vweird.f32 %v2829
      %vm2837 = vmor %vm2835, %vm2836
      %v2838 = vsel %vm2837, %v2829, %v2834
      %v2839 = vmul.f32 %v2827, %v2838
      %v2840 = vperm.slane %v2037, 7
      %v2841 = vmul.f32 %v2839, %v2840
      %v2842 = vperm.slane %v2038, 0
      %v2843 = vadd.f32 %v2841, %v2842
      %v2844 = vpack.c.bf16 %v2843, %v2843
      %v2845 = vperm.slane %v2038, 1
      %v2862 = vunpack.c.l.b16 %v2005
      %v2863 = vunpack.c.l.b16 %v2006
      %v2864 = vunpack.c.l.b16 %v2007
      %v2865 = vunpack.c.l.b16 %v2008
      %v2866 = vunpack.c.l.b16 %v2009
      %v2867 = vunpack.c.l.b16 %v2010
      %v2868 = vunpack.c.l.b16 %v2011
      %v2869 = vunpack.c.l.b16 %v2012
      %v2870 = vunpack.c.l.b16 %v2013
      %v2871 = vunpack.c.l.b16 %v2014
      %v2872 = vunpack.c.l.b16 %v2015
      %v2873 = vunpack.c.l.b16 %v2016
      %v2874 = vunpack.c.l.b16 %v2017
      %v2875 = vunpack.c.l.b16 %v2018
      %v2876 = vunpack.c.l.b16 %v2019
      %v2877 = vunpack.c.l.b16 %v2020
      %v2878 = vpack.c.b16 %v2863, %v2862
      %v2879 = vpack.c.b16 %v2865, %v2864
      %v2880 = vpack.c.b16 %v2867, %v2866
      %v2881 = vpack.c.b16 %v2869, %v2868
      %v2882 = vpack.c.b16 %v2871, %v2870
      %v2883 = vpack.c.b16 %v2873, %v2872
      %v2884 = vpack.c.b16 %v2875, %v2874
      %v2885 = vpack.c.b16 %v2877, %v2876
      %2894 = vmatpush.bf16.msra.mxu0 %v2885
      %2895 = vmatpush.bf16.msra.mxu0 %v2884
      %2896 = vmatpush.bf16.msra.mxu0 %v2883
      %2897 = vmatpush.bf16.msra.mxu0 %v2882
      %2898 = vmatpush.bf16.msra.mxu0 %v2881
      %2899 = vmatpush.bf16.msra.mxu0 %v2880
      %2900 = vmatpush.bf16.msra.mxu0 %v2879
      %2901 = vmatpush.bf16.msra.mxu0 %v2878
      %2902 = vmatmul.bf16.gmra.mxu0 %v2844
      %v2903 = vpop.f32.mrf.mxu0
      %v2904 = vadd.f32 %v2845, %v2903
      %v2905 = vpop.f32.mrf.mxu0
      %2906 = vdwg.mxu0
      %v2907 = vmul.f32 %v2904, %v2904
      %v2908 = vmul.f32 %v2904, %v2907
      %v2909 = vmul.f32 %v2908, 0.044715
      %v2910 = vadd.f32 %v2904, %v2909
      %v2911 = vmul.f32 %v2910, 0.7978846
      %v2912 = vtanh.pop %v2911
      %v2913 = vadd.f32 %v2912, 1.0
      %v2914 = vmul.f32 %v2913, 0.5
      %v2915 = vmul.f32 %v2904, %v2914
      %v2916 = vpack.c.bf16 %v2915, %v2915
      %v2917 = vperm.slane %v2038, 2
      %v2934 = vunpack.c.l.b16 %v2021
      %v2935 = vunpack.c.l.b16 %v2022
      %v2936 = vunpack.c.l.b16 %v2023
      %v2937 = vunpack.c.l.b16 %v2024
      %v2938 = vunpack.c.l.b16 %v2025
      %v2939 = vunpack.c.l.b16 %v2026
      %v2940 = vunpack.c.l.b16 %v2027
      %v2941 = vunpack.c.l.b16 %v2028
      %v2942 = vunpack.c.l.b16 %v2029
      %v2943 = vunpack.c.l.b16 %v2030
      %v2944 = vunpack.c.l.b16 %v2031
      %v2945 = vunpack.c.l.b16 %v2032
      %v2946 = vunpack.c.l.b16 %v2033
      %v2947 = vunpack.c.l.b16 %v2034
      %v2948 = vunpack.c.l.b16 %v2035
      %v2949 = vunpack.c.l.b16 %v2036
      %v2950 = vpack.c.b16 %v2935, %v2934
      %v2951 = vpack.c.b16 %v2937, %v2936
      %v2952 = vpack.c.b16 %v2939, %v2938
      %v2953 = vpack.c.b16 %v2941, %v2940
      %v2954 = vpack.c.b16 %v2943, %v2942
      %v2955 = vpack.c.b16 %v2945, %v2944
      %v2956 = vpack.c.b16 %v2947, %v2946
      %v2957 = vpack.c.b16 %v2949, %v2948
      %2966 = vmatpush.bf16.msra.mxu0 %v2957
      %2967 = vmatpush.bf16.msra.mxu0 %v2956
      %2968 = vmatpush.bf16.msra.mxu0 %v2955
      %2969 = vmatpush.bf16.msra.mxu0 %v2954
      %2970 = vmatpush.bf16.msra.mxu0 %v2953
      %2971 = vmatpush.bf16.msra.mxu0 %v2952
      %2972 = vmatpush.bf16.msra.mxu0 %v2951
      %2973 = vmatpush.bf16.msra.mxu0 %v2950
      %2974 = vmatmul.bf16.gmra.mxu0 %v2916
      %v2975 = vpop.f32.mrf.mxu0
      %v2976 = vadd.f32 %v2917, %v2975
      %v2977 = vpop.f32.mrf.mxu0
      %2978 = vdwg.mxu0
      %v2979 = vadd.f32 %v2843, %v2976
      %2980 = vadd.xlane.f32.xlu0 %v2979
      %v2981 = vpop.xlane.xlu0 %2980
      %v2982 = vmul.f32 %v2981, 0.03125
      %v2983 = vmul.f32 %v2979, %v2979
      %2984 = vadd.xlane.f32.xlu0 %v2983
      %v2985 = vpop.xlane.xlu0 %2984
      %v2986 = vmul.f32 %v2985, 0.03125
      %v2987 = vmul.f32 %v2982, %v2982
      %v2988 = vsub.f32 %v2986, %v2987
      %v2989 = vsub.f32 %v2979, %v2982
      %v2990 = vadd.f32 %v2988, 1e-05
      %v2991 = vrsqrt.pop %v2990
      %v2992 = vmul.f32 %v2991, %v2990
      %v2993 = vmul.f32 %v2992, %v2991
      %v2994 = vmul.f32 0.5, %v2993
      %v2995 = vsub.f32 1.5, %v2994
      %v2996 = vmul.f32 %v2991, %v2995
      %vm2997 = vweird.f32 %v2990
      %vm2998 = vweird.f32 %v2991
      %vm2999 = vmor %vm2997, %vm2998
      %v3000 = vsel %vm2999, %v2991, %v2996
      %v3001 = vmul.f32 %v2989, %v3000
      %v3002 = vperm.slane %v2038, 3
      %v3003 = vmul.f32 %v3001, %v3002
      %v3004 = vperm.slane %v2038, 4
      %v3005 = vadd.f32 %v3003, %v3004
      %3006 = vadd.xlane.f32.xlu0 %v3005
      %v3007 = vpop.xlane.xlu0 %3006
      %v3008 = vmul.f32 %v3007, 0.03125
      %v3009 = vmul.f32 %v3005, %v3005
      %3010 = vadd.xlane.f32.xlu0 %v3009
      %v3011 = vpop.xlane.xlu0 %3010
      %v3012 = vmul.f32 %v3011, 0.03125
      %v3013 = vmul.f32 %v3008, %v3008
      %v3014 = vsub.f32 %v3012, %v3013
      %v3015 = vsub.f32 %v3005, %v3008
      %v3016 = vadd.f32 %v3014, 1e-05
      %v3017 = vrsqrt.pop %v3016
      %v3018 = vmul.f32 %v3017, %v3016
      %v3019 = vmul.f32 %v3018, %v3017
      %v3020 = vmul.f32 0.5, %v3019
      %v3021 = vsub.f32 1.5, %v3020
      %v3022 = vmul.f32 %v3017, %v3021
      %vm3023 = vweird.f32 %v3016
      %vm3024 = vweird.f32 %v3017
      %vm3025 = vmor %vm3023, %vm3024
      %v3026 = vsel %vm3025, %v3017, %v3022
      %v3027 = vmul.f32 %v3015, %v3026
      %v3028 = vperm.slane %v1887, 2
      %v3029 = vmul.f32 %v3027, %v3028
      %v3030 = vperm.slane %v1887, 3
      %v3031 = vadd.f32 %v3029, %v3030
      %v3032 = vpack.c.bf16 %v3031, %v3031
      %v3033 = vld [vmem:[%s20] sm:$0xf]
      %v3034 = vld [vmem:[%s20 + $0x4] sm:$0xf]
      %v3035 = vld [vmem:[%s20 + $0x8] sm:$0xf]
      %v3036 = vld [vmem:[%s20 + $0xc] sm:$0xf]
      %v3037 = vld [vmem:[%s20 + $0x10] sm:$0xf]
      %v3038 = vld [vmem:[%s20 + $0x14] sm:$0xf]
      %v3039 = vld [vmem:[%s20 + $0x18] sm:$0xf]
      %v3040 = vld [vmem:[%s20 + $0x1c] sm:$0xf]
      %v3041 = vld [vmem:[%s20 + $0x20] sm:$0xf]
      %v3042 = vld [vmem:[%s20 + $0x24] sm:$0xf]
      %v3043 = vld [vmem:[%s20 + $0x28] sm:$0xf]
      %v3044 = vld [vmem:[%s20 + $0x2c] sm:$0xf]
      %v3045 = vld [vmem:[%s20 + $0x30] sm:$0xf]
      %v3046 = vld [vmem:[%s20 + $0x34] sm:$0xf]
      %v3047 = vld [vmem:[%s20 + $0x38] sm:$0xf]
      %v3048 = vld [vmem:[%s20 + $0x3c] sm:$0xf]
      %v3049 = vperm.slane %v1887, 4
      %v3066 = vunpack.c.l.b16 %v3033
      %v3067 = vunpack.c.l.b16 %v3034
      %v3068 = vunpack.c.l.b16 %v3035
      %v3069 = vunpack.c.l.b16 %v3036
      %v3070 = vunpack.c.l.b16 %v3037
      %v3071 = vunpack.c.l.b16 %v3038
      %v3072 = vunpack.c.l.b16 %v3039
      %v3073 = vunpack.c.l.b16 %v3040
      %v3074 = vunpack.c.l.b16 %v3041
      %v3075 = vunpack.c.l.b16 %v3042
      %v3076 = vunpack.c.l.b16 %v3043
      %v3077 = vunpack.c.l.b16 %v3044
      %v3078 = vunpack.c.l.b16 %v3045
      %v3079 = vunpack.c.l.b16 %v3046
      %v3080 = vunpack.c.l.b16 %v3047
      %v3081 = vunpack.c.l.b16 %v3048
      %v3082 = vpack.c.b16 %v3067, %v3066
      %v3083 = vpack.c.b16 %v3069, %v3068
      %v3084 = vpack.c.b16 %v3071, %v3070
      %v3085 = vpack.c.b16 %v3073, %v3072
      %v3086 = vpack.c.b16 %v3075, %v3074
      %v3087 = vpack.c.b16 %v3077, %v3076
      %v3088 = vpack.c.b16 %v3079, %v3078
      %v3089 = vpack.c.b16 %v3081, %v3080
      %3098 = vmatpush.bf16.msra.mxu0 %v3089
      %3099 = vmatpush.bf16.msra.mxu0 %v3088
      %3100 = vmatpush.bf16.msra.mxu0 %v3087
      %3101 = vmatpush.bf16.msra.mxu0 %v3086
      %3102 = vmatpush.bf16.msra.mxu0 %v3085
      %3103 = vmatpush.bf16.msra.mxu0 %v3084
      %3104 = vmatpush.bf16.msra.mxu0 %v3083
      %3105 = vmatpush.bf16.msra.mxu0 %v3082
      %3106 = vmatmul.bf16.gmra.mxu0 %v3032
      %v3107 = vpop.f32.mrf.mxu0
      %v3108 = vadd.f32 %v3049, %v3107
      %v3109 = vpop.f32.mrf.mxu0
      %3110 = vdwg.mxu0
      %3111 = vst [vmem:[%s668] sm:$0xff] %v3108
      %p3112 = scmp.lt.s32.totalorder %s32, 1
      %s3113 = scalar_select %p3112, %s32, 1
      %s3114 = smul.addr %s3113, 8
      %s3115 = scalar_lea.vmem %s21, %s3114
      // Predicated region
      $region105: #{_lambda_.1} parent=103 // pred_check
        %p3116 = pneg %p501
      $region106: #{_lambda_.1} parent=103 // pred_check_branch
        %3118 = sbr.rel (%p3116) target = $region108
      $region107: #{_lambda_.1} parent=103 // pred_region
        _
      $region108: #{_lambda_.1} parent=103 // pred_fallthru
        _
    $region104: #{_lambda_.1} parent=5 // pred_fallthru
      _
    %p3119 = scmp.le.s32.totalorder 2, %s27
    // Predicated region
    $region109: #{_lambda_.1} parent=5 // pred_check
      %p3120 = pneg %p3119
    $region110: #{_lambda_.1} parent=5 // pred_check_branch
      %3122 = sbr.rel (%p3120) target = $region112
    $region111: #{_lambda_.1} parent=5 // pred_region
      %s3123 = ssub.s32 %s27, 2
      // Predicated region
      $region113: #{_lambda_.1} parent=111 // pred_check
        %p3124 = pneg %p507
      $region114: #{_lambda_.1} parent=111 // pred_check_branch
        %3126 = sbr.rel (%p3124) target = $region116
      $region115: #{_lambda_.1} parent=111 // pred_region
        %p3127 = scmp.lt.s32.totalorder %s33, 1
        %s3128 = scalar_select %p3127, %s33, 1
        %s3129 = smul.addr %s3128, 8
        %s3130 = scalar_lea.vmem %s21, %s3129
      $region116: #{_lambda_.1} parent=111 // pred_fallthru
        _
    $region112: #{_lambda_.1} parent=5 // pred_fallthru
      _
  $region6: #{_lambda_.1} parent=0 // loop_footer
    %s31 = sadd.s32 1, %s27
  $region7: #{_lambda_.1} parent=0 // loop_footer_branch
    %26 = sbr.rel target = $region3
  $region8: #{_lambda_.1} parent=0 // loop_exit
    _

</llo_original>
